<compile_context>
chip_gen: v7x
topology: tpu7x:2x2x1
jax: 0.10.0
libtpu: 0.0.40
codegen_flags: <defaults>
</compile_context>

<pallas_src>
import functools

import jax
import jax.numpy as jnp
from jax import lax
from jax.experimental import pallas as pl
from jax.experimental.pallas import tpu as pltpu

EPS = 1e-5


# ----------------------------------------------------------------------------
# Fused kernel: BN1 + ReLU + 1x1 conv + BN2 + ReLU + 3x3 conv (pad=1) + concat.
#   x_ref : (B*H*W, Cin)        f32   (B images, NHWC flattened over space)
#   s1/b1 : (1, Cin)            f32   folded BatchNorm1 scale / bias
#   w1    : (Cin, Cmid)         bf16  1x1 conv weights
#   s2/b2 : (1, Cmid)           f32   folded BatchNorm2 scale / bias
#   w2    : (9*Cmid, Cout)      bf16  3x3 conv weights, (ky, kx, cin) flattened
#   o_ref : (B*H*W, Cin+Cout)   f32   fused torch.cat([x, out], channel)
#   upad  : (B, H+2, W+2, Cmid) bf16  VMEM scratch: zero-padded intermediate
# ----------------------------------------------------------------------------
def _bottleneck_kernel(x_ref, s1_ref, b1_ref, w1_ref, s2_ref, b2_ref, w2_ref,
                       o_ref, upad_ref, *, B, H, W):
    Cin = x_ref.shape[-1]
    Cmid = w1_ref.shape[-1]
    Cout = w2_ref.shape[-1]

    # ---- Stage 1: BN1 + ReLU (f32), 1x1 conv on the MXU (bf16, f32 acc),
    #      BN2 + ReLU (f32). ------------------------------------------------
    x = x_ref[...]                                                   # (BHW, Cin) f32
    h = jnp.maximum(x * s1_ref[...] + b1_ref[...], 0.0)
    t = jnp.dot(h.astype(jnp.bfloat16), w1_ref[...],
                preferred_element_type=jnp.float32)                  # (BHW, Cmid)
    u = jnp.maximum(t * s2_ref[...] + b2_ref[...], 0.0)

    # ---- Stage 2: 3x3 conv, padding=1, as a single im2col matmul. ---------
    # Zero-padded intermediate lives entirely in VMEM scratch (no HBM trip).
    upad_ref[...] = jnp.zeros_like(upad_ref)
    upad_ref[:, 1:H + 1, 1:W + 1, :] = (
        u.astype(jnp.bfloat16).reshape(B, H, W, Cmid))

    # Nine shifted windows -> one (BHW, 9*Cmid) slab -> one MXU contraction.
    cols = [upad_ref[:, ky:ky + H, kx:kx + W, :]
            for ky in range(3) for kx in range(3)]                   # bf16 windows
    slab = jnp.concatenate(cols, axis=-1).reshape(B * H * W, 9 * Cmid)
    y = jnp.dot(slab, w2_ref[...],
                preferred_element_type=jnp.float32)                  # (BHW, Cout)

    # ---- Fused channel concat: out = [x, conv2(...)]. ----------------------
    o_ref[:, 0:Cin] = x.astype(o_ref.dtype)
    o_ref[:, Cin:Cin + Cout] = y.astype(o_ref.dtype)


def _pick_images_per_block(N, H, W, Cin, Cmid, Cout,
                           budget_bytes=20 * 1024 * 1024):
    """Largest image-block (<= 8, divides N) whose working set fits the budget."""
    best = 1 if ((H * W) % 8 == 0 or N == 1) else N
    for b in range(1, min(N, 8) + 1):
        if N % b:
            continue
        if b < N and (b * H * W) % 8 != 0:     # block rows must be sublane-aligned
            continue
        rows = b * H * W
        need = (
            2 * rows * Cin * 4                       # input block (double-buffered)
            + 2 * rows * (Cin + Cout) * 4            # output block (double-buffered)
            + b * (H + 2) * (W + 2) * Cmid * 2       # padded-u VMEM scratch (bf16)
            + rows * 9 * Cmid * 2                    # im2col slab value (bf16)
            + rows * (Cin + 2 * Cmid) * 4            # f32 temporaries (h, t, u)
        )
        if need <= budget_bytes:
            best = b
    return best


# ----------------------------------------------------------------------------
# Wrapper (NCHW interface, matching the PyTorch module)
# ----------------------------------------------------------------------------
def bottleneck_block(x_nchw, params):
    N, Cin, H, W = x_nchw.shape
    gamma1, beta1, mean1, var1 = params["bn1"]
    gamma2, beta2, mean2, var2 = params["bn2"]
    w1_pt = params["conv1"]                      # (Cmid, Cin, 1, 1) PyTorch OIHW
    w2_pt = params["conv2"]                      # (Cout, Cmid, 3, 3) PyTorch OIHW
    Cmid = w1_pt.shape[0]
    Cout = w2_pt.shape[0]
    Ctot = Cin + Cout

    # Fold BatchNorm (eval mode / running stats) into per-channel scale + bias.
    inv1 = gamma1 / jnp.sqrt(var1 + EPS)
    inv2 = gamma2 / jnp.sqrt(var2 + EPS)
    s1 = inv1.reshape(1, Cin).astype(jnp.float32)
    b1 = (beta1 - mean1 * inv1).reshape(1, Cin).astype(jnp.float32)
    s2 = inv2.reshape(1, Cmid).astype(jnp.float32)
    b2 = (beta2 - mean2 * inv2).reshape(1, Cmid).astype(jnp.float32)

    # Weights for the kernel (bf16 MXU path, f32 accumulation inside).
    w1 = jnp.transpose(w1_pt[:, :, 0, 0], (1, 0)).astype(jnp.bfloat16)       # (Cin, Cmid)
    w2 = (jnp.transpose(w2_pt, (2, 3, 1, 0))                                 # (ky,kx,ci,co)
          .reshape(9 * Cmid, Cout).astype(jnp.bfloat16))

    # NCHW -> NHWC, flatten space: channels map to the 128-lane axis.
    x2 = jnp.transpose(x_nchw, (0, 2, 3, 1)).reshape(N * H * W, Cin).astype(jnp.float32)

    B = _pick_images_per_block(N, H, W, Cin, Cmid, Cout)
    rows = B * H * W
    grid = (N // B,)

    out2 = pl.pallas_call(
        functools.partial(_bottleneck_kernel, B=B, H=H, W=W),
        out_shape=jax.ShapeDtypeStruct((N * H * W, Ctot), jnp.float32),
        grid=grid,
        in_specs=[
            pl.BlockSpec((rows, Cin), lambda i: (i, 0)),        # x (per image block)
            pl.BlockSpec((1, Cin), lambda i: (0, 0)),           # s1
            pl.BlockSpec((1, Cin), lambda i: (0, 0)),           # b1
            pl.BlockSpec((Cin, Cmid), lambda i: (0, 0)),        # w1
            pl.BlockSpec((1, Cmid), lambda i: (0, 0)),          # s2
            pl.BlockSpec((1, Cmid), lambda i: (0, 0)),          # b2
            pl.BlockSpec((9 * Cmid, Cout), lambda i: (0, 0)),   # w2 (im2col layout)
        ],
        out_specs=pl.BlockSpec((rows, Ctot), lambda i: (i, 0)),
        scratch_shapes=[pltpu.VMEM((B, H + 2, W + 2, Cmid), jnp.bfloat16)],
        compiler_params=pltpu.CompilerParams(
            dimension_semantics=("parallel",),
            vmem_limit_bytes=32 * 1024 * 1024,
        ),
    )(x2, s1, b1, w1, s2, b2, w2)

    # Free reshape + single transpose back to the NCHW interface.
    out_nhwc = out2.reshape(N, H, W, Ctot)
    return jnp.transpose(out_nhwc, (0, 3, 1, 2))


# ----------------------------------------------------------------------------
# Pure-JAX reference (NCHW, mirrors the PyTorch eval-mode forward)
# ----------------------------------------------------------------------------
def reference(x, params):
    g1, b1, m1, v1 = params["bn1"]
    g2, b2, m2, v2 = params["bn2"]
    w1_pt, w2_pt = params["conv1"], params["conv2"]

    def bn(z, g, b, m, v):
        g, b, m, v = (a[None, :, None, None] for a in (g, b, m, v))
        return (z - m) / jnp.sqrt(v + EPS) * g + b

    h = jnp.maximum(bn(x, g1, b1, m1, v1), 0.0)
    t = lax.conv_general_dilated(h, w1_pt, (1, 1), "VALID",
                                 dimension_numbers=("NCHW", "OIHW", "NCHW"))
    u = jnp.maximum(bn(t, g2, b2, m2, v2), 0.0)
    o = lax.conv_general_dilated(u, w2_pt, (1, 1), ((1, 1), (1, 1)),
                                 dimension_numbers=("NCHW", "OIHW", "NCHW"))
    return jnp.concatenate([x, o], axis=1)


def make_params(key, in_planes, out_planes):
    inter = out_planes * 4
    ks = jax.random.split(key, 10)
    params = {
        "bn1": (
            jax.random.uniform(ks[0], (in_planes,), jnp.float32, 0.5, 1.5),   # gamma
            0.1 * jax.random.normal(ks[1], (in_planes,), jnp.float32),        # beta
            0.1 * jax.random.normal(ks[2], (in_planes,), jnp.float32),        # running_mean
            jax.random.uniform(ks[3], (in_planes,), jnp.float32, 0.5, 1.5),   # running_var
        ),
        "conv1": 0.2 * jax.random.normal(ks[4], (inter, in_planes, 1, 1), jnp.float32),
        "bn2": (
            jax.random.uniform(ks[5], (inter,), jnp.float32, 0.5, 1.5),
            0.1 * jax.random.normal(ks[6], (inter,), jnp.float32),
            0.1 * jax.random.normal(ks[7], (inter,), jnp.float32),
            jax.random.uniform(ks[8], (inter,), jnp.float32, 0.5, 1.5),
        ),
        "conv2": 0.1 * jax.random.normal(ks[9], (out_planes, inter, 3, 3), jnp.float32),
    }
    return params


if __name__ == "__main__":
    key = jax.random.PRNGKey(0)
    k_x, k_p = jax.random.split(key)

    N, in_planes, H, W = 2, 4, 16, 16
    out_planes = 4                       # inter_planes = 16
    x = jax.random.normal(k_x, (N, in_planes, H, W), jnp.float32)
    params = make_params(k_p, in_planes, out_planes)

    fn = jax.jit(functools.partial(bottleneck_block, params=params))
    y = fn(x)
    jax.block_until_ready(y)

    y_ref = reference(x, params)
    assert y.shape == (N, in_planes + out_planes, H, W), y.shape
    max_err = float(jnp.max(jnp.abs(y - y_ref)))
    # bf16 MXU operands (f32 accumulation) -> slightly looser tolerance than f32.
    assert jnp.allclose(y, y_ref, atol=5e-2, rtol=5e-2), max_err
    print("KERNEL_OK")
</pallas_src>

<mosaic_0001>
module attributes {stable_mosaic.version = 11 : i64} {
  func.func @_bottleneck_kernel(%arg0: i32, %arg1: memref<512x4xf32, #tpu.memory_space<vmem>>, %arg2: memref<1x4xf32, #tpu.memory_space<vmem>>, %arg3: memref<1x4xf32, #tpu.memory_space<vmem>>, %arg4: memref<4x16xbf16, #tpu.memory_space<vmem>>, %arg5: memref<1x16xf32, #tpu.memory_space<vmem>>, %arg6: memref<1x16xf32, #tpu.memory_space<vmem>>, %arg7: memref<144x4xbf16, #tpu.memory_space<vmem>>, %arg8: memref<512x8xf32, #tpu.memory_space<vmem>>, %arg9: memref<2x18x18x16xbf16, #tpu.memory_space<vmem>>) attributes {dimension_semantics = [#tpu.dimension_semantics<parallel>], iteration_bounds = array<i64: 1>, scalar_prefetch = 0 : i64, scratch_operands = 1 : i64, tpu.core_type = #tpu.core_type<tc>, window_params = [{transform_indices = @transform_0, window_bounds = array<i64: 512, 4>}, {pipeline_mode = #tpu.pipeline_mode<synchronous>, transform_indices = @transform_1, window_bounds = array<i64: 1, 4>}, {pipeline_mode = #tpu.pipeline_mode<synchronous>, transform_indices = @transform_2, window_bounds = array<i64: 1, 4>}, {pipeline_mode = #tpu.pipeline_mode<synchronous>, transform_indices = @transform_3, window_bounds = array<i64: 4, 16>}, {pipeline_mode = #tpu.pipeline_mode<synchronous>, transform_indices = @transform_4, window_bounds = array<i64: 1, 16>}, {pipeline_mode = #tpu.pipeline_mode<synchronous>, transform_indices = @transform_5, window_bounds = array<i64: 1, 16>}, {pipeline_mode = #tpu.pipeline_mode<synchronous>, transform_indices = @transform_6, window_bounds = array<i64: 144, 4>}, {transform_indices = @transform_7, window_bounds = array<i64: 512, 8>}]} {
    %c0 = arith.constant 0 : index
    %c0_0 = arith.constant 0 : index
    %0 = vector.load %arg1[%c0, %c0_0] : memref<512x4xf32, #tpu.memory_space<vmem>>, vector<512x4xf32>
    %c0_1 = arith.constant 0 : index
    %c0_2 = arith.constant 0 : index
    %1 = vector.load %arg2[%c0_1, %c0_2] : memref<1x4xf32, #tpu.memory_space<vmem>>, vector<1x4xf32>
    %2 = vector.broadcast %1 : vector<1x4xf32> to vector<512x4xf32>
    %3 = arith.mulf %0, %2 : vector<512x4xf32>
    %c0_3 = arith.constant 0 : index
    %c0_4 = arith.constant 0 : index
    %4 = vector.load %arg3[%c0_3, %c0_4] : memref<1x4xf32, #tpu.memory_space<vmem>>, vector<1x4xf32>
    %5 = vector.broadcast %4 : vector<1x4xf32> to vector<512x4xf32>
    %6 = arith.addf %3, %5 : vector<512x4xf32>
    %cst = arith.constant 0.000000e+00 : f32
    %7 = vector.broadcast %cst : f32 to vector<512x4xf32>
    %8 = arith.maximumf %6, %7 : vector<512x4xf32>
    %9 = arith.truncf %8 : vector<512x4xf32> to vector<512x4xbf16>
    %c0_5 = arith.constant 0 : index
    %c0_6 = arith.constant 0 : index
    %10 = vector.load %arg4[%c0_5, %c0_6] : memref<4x16xbf16, #tpu.memory_space<vmem>>, vector<4x16xbf16>
    %cst_7 = arith.constant dense<0.000000e+00> : vector<512x16xf32>
    %11 = tpu.matmul %9, %10, %cst_7 {dimension_numbers = #tpu.dot_dimension_numbers<[1], [0], [0], [1], [0, 0, 1, 1], [], []>} : vector<512x4xbf16>, vector<4x16xbf16>, vector<512x16xf32> -> vector<512x16xf32>
    %c0_8 = arith.constant 0 : index
    %c0_9 = arith.constant 0 : index
    %12 = vector.load %arg5[%c0_8, %c0_9] : memref<1x16xf32, #tpu.memory_space<vmem>>, vector<1x16xf32>
    %13 = vector.broadcast %12 : vector<1x16xf32> to vector<512x16xf32>
    %14 = arith.mulf %11, %13 : vector<512x16xf32>
    %c0_10 = arith.constant 0 : index
    %c0_11 = arith.constant 0 : index
    %15 = vector.load %arg6[%c0_10, %c0_11] : memref<1x16xf32, #tpu.memory_space<vmem>>, vector<1x16xf32>
    %16 = vector.broadcast %15 : vector<1x16xf32> to vector<512x16xf32>
    %17 = arith.addf %14, %16 : vector<512x16xf32>
    %cst_12 = arith.constant 0.000000e+00 : f32
    %18 = vector.broadcast %cst_12 : f32 to vector<512x16xf32>
    %19 = arith.maximumf %17, %18 : vector<512x16xf32>
    %cst_13 = arith.constant 0.000000e+00 : bf16
    %20 = vector.broadcast %cst_13 : bf16 to vector<2x18x18x16xbf16>
    %c0_14 = arith.constant 0 : index
    %c0_15 = arith.constant 0 : index
    %c0_16 = arith.constant 0 : index
    %c0_17 = arith.constant 0 : index
    %21 = vector.load %arg9[%c0_14, %c0_15, %c0_16, %c0_17] : memref<2x18x18x16xbf16, #tpu.memory_space<vmem>>, vector<2x18x18x16xbf16>
    tpu.vector_store %arg9[%c0_14, %c0_15, %c0_16, %c0_17], %20 {strides = array<i32>} : memref<2x18x18x16xbf16, #tpu.memory_space<vmem>>, vector<2x18x18x16xbf16>,
    %22 = arith.truncf %19 : vector<512x16xf32> to vector<512x16xbf16>
    %23 = vector.shape_cast %22 : vector<512x16xbf16> to vector<2x16x16x16xbf16>
    %c0_18 = arith.constant 0 : index
    %c1 = arith.constant 1 : index
    %c1_19 = arith.constant 1 : index
    %c0_20 = arith.constant 0 : index
    %24 = vector.load %arg9[%c0_18, %c1, %c1_19, %c0_20] : memref<2x18x18x16xbf16, #tpu.memory_space<vmem>>, vector<2x16x16x16xbf16>
    tpu.vector_store %arg9[%c0_18, %c1, %c1_19, %c0_20], %23 {strides = array<i32>} : memref<2x18x18x16xbf16, #tpu.memory_space<vmem>>, vector<2x16x16x16xbf16>,
    %c0_21 = arith.constant 0 : index
    %c0_22 = arith.constant 0 : index
    %c0_23 = arith.constant 0 : index
    %c0_24 = arith.constant 0 : index
    %25 = vector.load %arg9[%c0_21, %c0_22, %c0_23, %c0_24] : memref<2x18x18x16xbf16, #tpu.memory_space<vmem>>, vector<2x16x16x16xbf16>
    %c0_25 = arith.constant 0 : index
    %c0_26 = arith.constant 0 : index
    %c1_27 = arith.constant 1 : index
    %c0_28 = arith.constant 0 : index
    %26 = vector.load %arg9[%c0_25, %c0_26, %c1_27, %c0_28] : memref<2x18x18x16xbf16, #tpu.memory_space<vmem>>, vector<2x16x16x16xbf16>
    %c0_29 = arith.constant 0 : index
    %c0_30 = arith.constant 0 : index
    %c2 = arith.constant 2 : index
    %c0_31 = arith.constant 0 : index
    %27 = vector.load %arg9[%c0_29, %c0_30, %c2, %c0_31] : memref<2x18x18x16xbf16, #tpu.memory_space<vmem>>, vector<2x16x16x16xbf16>
    %c0_32 = arith.constant 0 : index
    %c1_33 = arith.constant 1 : index
    %c0_34 = arith.constant 0 : index
    %c0_35 = arith.constant 0 : index
    %28 = vector.load %arg9[%c0_32, %c1_33, %c0_34, %c0_35] : memref<2x18x18x16xbf16, #tpu.memory_space<vmem>>, vector<2x16x16x16xbf16>
    %c0_36 = arith.constant 0 : index
    %c1_37 = arith.constant 1 : index
    %c1_38 = arith.constant 1 : index
    %c0_39 = arith.constant 0 : index
    %29 = vector.load %arg9[%c0_36, %c1_37, %c1_38, %c0_39] : memref<2x18x18x16xbf16, #tpu.memory_space<vmem>>, vector<2x16x16x16xbf16>
    %c0_40 = arith.constant 0 : index
    %c1_41 = arith.constant 1 : index
    %c2_42 = arith.constant 2 : index
    %c0_43 = arith.constant 0 : index
    %30 = vector.load %arg9[%c0_40, %c1_41, %c2_42, %c0_43] : memref<2x18x18x16xbf16, #tpu.memory_space<vmem>>, vector<2x16x16x16xbf16>
    %c0_44 = arith.constant 0 : index
    %c2_45 = arith.constant 2 : index
    %c0_46 = arith.constant 0 : index
    %c0_47 = arith.constant 0 : index
    %31 = vector.load %arg9[%c0_44, %c2_45, %c0_46, %c0_47] : memref<2x18x18x16xbf16, #tpu.memory_space<vmem>>, vector<2x16x16x16xbf16>
    %c0_48 = arith.constant 0 : index
    %c2_49 = arith.constant 2 : index
    %c1_50 = arith.constant 1 : index
    %c0_51 = arith.constant 0 : index
    %32 = vector.load %arg9[%c0_48, %c2_49, %c1_50, %c0_51] : memref<2x18x18x16xbf16, #tpu.memory_space<vmem>>, vector<2x16x16x16xbf16>
    %c0_52 = arith.constant 0 : index
    %c2_53 = arith.constant 2 : index
    %c2_54 = arith.constant 2 : index
    %c0_55 = arith.constant 0 : index
    %33 = vector.load %arg9[%c0_52, %c2_53, %c2_54, %c0_55] : memref<2x18x18x16xbf16, #tpu.memory_space<vmem>>, vector<2x16x16x16xbf16>
    %34 = tpu.concatenate %25, %26, %27, %28, %29, %30, %31, %32, %33 in 3 : vector<2x16x16x16xbf16>, vector<2x16x16x16xbf16>, vector<2x16x16x16xbf16>, vector<2x16x16x16xbf16>, vector<2x16x16x16xbf16>, vector<2x16x16x16xbf16>, vector<2x16x16x16xbf16>, vector<2x16x16x16xbf16>, vector<2x16x16x16xbf16> -> vector<2x16x16x144xbf16>
    %35 = vector.shape_cast %34 : vector<2x16x16x144xbf16> to vector<512x144xbf16>
    %c0_56 = arith.constant 0 : index
    %c0_57 = arith.constant 0 : index
    %36 = vector.load %arg7[%c0_56, %c0_57] : memref<144x4xbf16, #tpu.memory_space<vmem>>, vector<144x4xbf16>
    %cst_58 = arith.constant dense<0.000000e+00> : vector<512x4xf32>
    %37 = tpu.matmul %35, %36, %cst_58 {dimension_numbers = #tpu.dot_dimension_numbers<[1], [0], [0], [1], [0, 0, 1, 1], [], []>} : vector<512x144xbf16>, vector<144x4xbf16>, vector<512x4xf32> -> vector<512x4xf32>
    %c0_59 = arith.constant 0 : index
    %c0_60 = arith.constant 0 : index
    %38 = vector.load %arg8[%c0_59, %c0_60] : memref<512x8xf32, #tpu.memory_space<vmem>>, vector<512x4xf32>
    tpu.vector_store %arg8[%c0_59, %c0_60], %0 {strides = array<i32>} : memref<512x8xf32, #tpu.memory_space<vmem>>, vector<512x4xf32>,
    %c0_61 = arith.constant 0 : index
    %c4 = arith.constant 4 : index
    %39 = vector.load %arg8[%c0_61, %c4] : memref<512x8xf32, #tpu.memory_space<vmem>>, vector<512x4xf32>
    tpu.vector_store %arg8[%c0_61, %c4], %37 {strides = array<i32>} : memref<512x8xf32, #tpu.memory_space<vmem>>, vector<512x4xf32>,
    return
  }
  func.func @transform_0(%arg0: i32) -> (i32, i32) {
    %c0_i32 = arith.constant 0 : i32
    %c0_i32_0 = arith.constant 0 : i32
    return %arg0, %c0_i32 : i32, i32
  }
  func.func @transform_1(%arg0: i32) -> (i32, i32) {
    %c0_i32 = arith.constant 0 : i32
    %c0_i32_0 = arith.constant 0 : i32
    %c0_i32_1 = arith.constant 0 : i32
    return %c0_i32, %c0_i32_0 : i32, i32
  }
  func.func @transform_2(%arg0: i32) -> (i32, i32) {
    %c0_i32 = arith.constant 0 : i32
    %c0_i32_0 = arith.constant 0 : i32
    %c0_i32_1 = arith.constant 0 : i32
    return %c0_i32, %c0_i32_0 : i32, i32
  }
  func.func @transform_3(%arg0: i32) -> (i32, i32) {
    %c0_i32 = arith.constant 0 : i32
    %c0_i32_0 = arith.constant 0 : i32
    %c0_i32_1 = arith.constant 0 : i32
    return %c0_i32, %c0_i32_0 : i32, i32
  }
  func.func @transform_4(%arg0: i32) -> (i32, i32) {
    %c0_i32 = arith.constant 0 : i32
    %c0_i32_0 = arith.constant 0 : i32
    %c0_i32_1 = arith.constant 0 : i32
    return %c0_i32, %c0_i32_0 : i32, i32
  }
  func.func @transform_5(%arg0: i32) -> (i32, i32) {
    %c0_i32 = arith.constant 0 : i32
    %c0_i32_0 = arith.constant 0 : i32
    %c0_i32_1 = arith.constant 0 : i32
    return %c0_i32, %c0_i32_0 : i32, i32
  }
  func.func @transform_6(%arg0: i32) -> (i32, i32) {
    %c0_i32 = arith.constant 0 : i32
    %c0_i32_0 = arith.constant 0 : i32
    %c0_i32_1 = arith.constant 0 : i32
    return %c0_i32, %c0_i32_0 : i32, i32
  }
  func.func @transform_7(%arg0: i32) -> (i32, i32) {
    %c0_i32 = arith.constant 0 : i32
    %c0_i32_0 = arith.constant 0 : i32
    return %arg0, %c0_i32 : i32, i32
  }
}

</mosaic_0001>

<llo_original>
// kernel: bottleneck_block.1
$region0: #{bottleneck_block.1}
  #allocation0 [shape = 'u32[]', space=smem, size = 0x4, offset = 0x4, fixed_abs, tag = 'smem constant byte address 0x4 - core index']
  #allocation1 [shape = 'u32[144,128]{1,0:T(1,128)}', space=vmem, size = 0x12000, scoped, tag = 'internal scratch']
  #allocation2 [shape = 'bf16[2,18,18,16]{3,2,1,0:T(8,128)(2,1)}', space=vmem, size = 0x36000, scoped, tag = 'scratch operand']
  %s0 = inlined_call_operand.vmem [shape: f32[512,4], index: 0, kind: input, shape index: {}]
  %s1 = inlined_call_operand.vmem [shape: f32[1,4], index: 1, kind: input, shape index: {}]
  %s2 = inlined_call_operand.vmem [shape: f32[1,4], index: 2, kind: input, shape index: {}]
  %s3 = inlined_call_operand.vmem [shape: bf16[4,16], index: 3, kind: input, shape index: {}]
  %s4 = inlined_call_operand.vmem [shape: f32[1,16], index: 4, kind: input, shape index: {}]
  %s5 = inlined_call_operand.vmem [shape: f32[1,16], index: 5, kind: input, shape index: {}]
  %s6 = inlined_call_operand.vmem [shape: bf16[144,4], index: 6, kind: input, shape index: {}]
  %s7 = inlined_call_operand.vmem [shape: f32[512,8], index: 7, kind: output, shape index: {}]
  %s8 = sld [smem:[#allocation0]]
  $region38: #{bottleneck_block.1} parent=0
    _
  %s10 = ssub.s32 1, %s8
  %s11 = scalar_select 0, %s10, %s8
  // Predicated region
  $region2: #{bottleneck_block.1} parent=0 // pred_check
    _
  $region3: #{bottleneck_block.1} parent=0 // pred_check_branch
    %13 = sbr.rel (0) target = $region5
  $region4: #{bottleneck_block.1} parent=0 // pred_region
    _
  $region5: #{bottleneck_block.1} parent=0 // pred_fallthru
    _
  // Predicated region
  $region6: #{bottleneck_block.1} parent=0 // pred_check
    _
  $region7: #{bottleneck_block.1} parent=0 // pred_check_branch
    %15 = sbr.rel (0) target = $region9
  $region8: #{bottleneck_block.1} parent=0 // pred_region
    _
  $region9: #{bottleneck_block.1} parent=0 // pred_fallthru
    _
  // Predicated region
  $region10: #{bottleneck_block.1} parent=0 // pred_check
    _
  $region11: #{bottleneck_block.1} parent=0 // pred_check_branch
    %17 = sbr.rel (0) target = $region13
  $region12: #{bottleneck_block.1} parent=0 // pred_region
    _
  $region13: #{bottleneck_block.1} parent=0 // pred_fallthru
    _
  // Predicated region
  $region14: #{bottleneck_block.1} parent=0 // pred_check
    _
  $region15: #{bottleneck_block.1} parent=0 // pred_check_branch
    %19 = sbr.rel (0) target = $region17
  $region16: #{bottleneck_block.1} parent=0 // pred_region
    _
  $region17: #{bottleneck_block.1} parent=0 // pred_fallthru
    _
  // Predicated region
  $region18: #{bottleneck_block.1} parent=0 // pred_check
    _
  $region19: #{bottleneck_block.1} parent=0 // pred_check_branch
    %21 = sbr.rel (0) target = $region21
  $region20: #{bottleneck_block.1} parent=0 // pred_region
    _
  $region21: #{bottleneck_block.1} parent=0 // pred_fallthru
    _
  // Predicated region
  $region22: #{bottleneck_block.1} parent=0 // pred_check
    _
  $region23: #{bottleneck_block.1} parent=0 // pred_check_branch
    %23 = sbr.rel (0) target = $region25
  $region24: #{bottleneck_block.1} parent=0 // pred_region
    _
  $region25: #{bottleneck_block.1} parent=0 // pred_fallthru
    _
  // Predicated region
  $region26: #{bottleneck_block.1} parent=0 // pred_check
    _
  $region27: #{bottleneck_block.1} parent=0 // pred_check_branch
    %25 = sbr.rel (0) target = $region29
  $region28: #{bottleneck_block.1} parent=0 // pred_region
    _
  $region29: #{bottleneck_block.1} parent=0 // pred_fallthru
    _
  %v27 = vld [vmem:[%s0] sm:$0xff]
  %v28 = vld [vmem:[%s0 + $0x8] sm:$0xff]
  %v29 = vld [vmem:[%s0 + $0x10] sm:$0xff]
  %v30 = vld [vmem:[%s0 + $0x18] sm:$0xff]
  %v31 = vld [vmem:[%s0 + $0x20] sm:$0xff]
  %v32 = vld [vmem:[%s0 + $0x28] sm:$0xff]
  %v33 = vld [vmem:[%s0 + $0x30] sm:$0xff]
  %v34 = vld [vmem:[%s0 + $0x38] sm:$0xff]
  %v35 = vld [vmem:[%s0 + $0x40] sm:$0xff]
  %v36 = vld [vmem:[%s0 + $0x48] sm:$0xff]
  %v37 = vld [vmem:[%s0 + $0x50] sm:$0xff]
  %v38 = vld [vmem:[%s0 + $0x58] sm:$0xff]
  %v39 = vld [vmem:[%s0 + $0x60] sm:$0xff]
  %v40 = vld [vmem:[%s0 + $0x68] sm:$0xff]
  %v41 = vld [vmem:[%s0 + $0x70] sm:$0xff]
  %v42 = vld [vmem:[%s0 + $0x78] sm:$0xff]
  %v43 = vld [vmem:[%s0 + $0x80] sm:$0xff]
  %v44 = vld [vmem:[%s0 + $0x88] sm:$0xff]
  %v45 = vld [vmem:[%s0 + $0x90] sm:$0xff]
  %v46 = vld [vmem:[%s0 + $0x98] sm:$0xff]
  %v47 = vld [vmem:[%s0 + $0xa0] sm:$0xff]
  %v48 = vld [vmem:[%s0 + $0xa8] sm:$0xff]
  %v49 = vld [vmem:[%s0 + $0xb0] sm:$0xff]
  %v50 = vld [vmem:[%s0 + $0xb8] sm:$0xff]
  %v51 = vld [vmem:[%s0 + $0xc0] sm:$0xff]
  %v52 = vld [vmem:[%s0 + $0xc8] sm:$0xff]
  %v53 = vld [vmem:[%s0 + $0xd0] sm:$0xff]
  %v54 = vld [vmem:[%s0 + $0xd8] sm:$0xff]
  %v55 = vld [vmem:[%s0 + $0xe0] sm:$0xff]
  %v56 = vld [vmem:[%s0 + $0xe8] sm:$0xff]
  %v57 = vld [vmem:[%s0 + $0xf0] sm:$0xff]
  %v58 = vld [vmem:[%s0 + $0xf8] sm:$0xff]
  %v59 = vld [vmem:[%s0 + $0x100] sm:$0xff]
  %v60 = vld [vmem:[%s0 + $0x108] sm:$0xff]
  %v61 = vld [vmem:[%s0 + $0x110] sm:$0xff]
  %v62 = vld [vmem:[%s0 + $0x118] sm:$0xff]
  %v63 = vld [vmem:[%s0 + $0x120] sm:$0xff]
  %v64 = vld [vmem:[%s0 + $0x128] sm:$0xff]
  %v65 = vld [vmem:[%s0 + $0x130] sm:$0xff]
  %v66 = vld [vmem:[%s0 + $0x138] sm:$0xff]
  %v67 = vld [vmem:[%s0 + $0x140] sm:$0xff]
  %v68 = vld [vmem:[%s0 + $0x148] sm:$0xff]
  %v69 = vld [vmem:[%s0 + $0x150] sm:$0xff]
  %v70 = vld [vmem:[%s0 + $0x158] sm:$0xff]
  %v71 = vld [vmem:[%s0 + $0x160] sm:$0xff]
  %v72 = vld [vmem:[%s0 + $0x168] sm:$0xff]
  %v73 = vld [vmem:[%s0 + $0x170] sm:$0xff]
  %v74 = vld [vmem:[%s0 + $0x178] sm:$0xff]
  %v75 = vld [vmem:[%s0 + $0x180] sm:$0xff]
  %v76 = vld [vmem:[%s0 + $0x188] sm:$0xff]
  %v77 = vld [vmem:[%s0 + $0x190] sm:$0xff]
  %v78 = vld [vmem:[%s0 + $0x198] sm:$0xff]
  %v79 = vld [vmem:[%s0 + $0x1a0] sm:$0xff]
  %v80 = vld [vmem:[%s0 + $0x1a8] sm:$0xff]
  %v81 = vld [vmem:[%s0 + $0x1b0] sm:$0xff]
  %v82 = vld [vmem:[%s0 + $0x1b8] sm:$0xff]
  %v83 = vld [vmem:[%s0 + $0x1c0] sm:$0xff]
  %v84 = vld [vmem:[%s0 + $0x1c8] sm:$0xff]
  %v85 = vld [vmem:[%s0 + $0x1d0] sm:$0xff]
  %v86 = vld [vmem:[%s0 + $0x1d8] sm:$0xff]
  %v87 = vld [vmem:[%s0 + $0x1e0] sm:$0xff]
  %v88 = vld [vmem:[%s0 + $0x1e8] sm:$0xff]
  %v89 = vld [vmem:[%s0 + $0x1f0] sm:$0xff]
  %v90 = vld [vmem:[%s0 + $0x1f8] sm:$0xff]
  %v91 = vld [vmem:[%s1] sm:$0x1]
  %v93 = vlaneseq
  %v94 = vshrl.u32 %v93, 7
  %v95 = vsub.s32 0, %v94
  %v96 = vrot.slane %v91, %v95
  %v98 = vmul.f32 %v27, %v96
  %v99 = vmul.f32 %v28, %v96
  %v100 = vmul.f32 %v29, %v96
  %v101 = vmul.f32 %v30, %v96
  %v102 = vmul.f32 %v31, %v96
  %v103 = vmul.f32 %v32, %v96
  %v104 = vmul.f32 %v33, %v96
  %v105 = vmul.f32 %v34, %v96
  %v106 = vmul.f32 %v35, %v96
  %v107 = vmul.f32 %v36, %v96
  %v108 = vmul.f32 %v37, %v96
  %v109 = vmul.f32 %v38, %v96
  %v110 = vmul.f32 %v39, %v96
  %v111 = vmul.f32 %v40, %v96
  %v112 = vmul.f32 %v41, %v96
  %v113 = vmul.f32 %v42, %v96
  %v114 = vmul.f32 %v43, %v96
  %v115 = vmul.f32 %v44, %v96
  %v116 = vmul.f32 %v45, %v96
  %v117 = vmul.f32 %v46, %v96
  %v118 = vmul.f32 %v47, %v96
  %v119 = vmul.f32 %v48, %v96
  %v120 = vmul.f32 %v49, %v96
  %v121 = vmul.f32 %v50, %v96
  %v122 = vmul.f32 %v51, %v96
  %v123 = vmul.f32 %v52, %v96
  %v124 = vmul.f32 %v53, %v96
  %v125 = vmul.f32 %v54, %v96
  %v126 = vmul.f32 %v55, %v96
  %v127 = vmul.f32 %v56, %v96
  %v128 = vmul.f32 %v57, %v96
  %v129 = vmul.f32 %v58, %v96
  %v130 = vmul.f32 %v59, %v96
  %v131 = vmul.f32 %v60, %v96
  %v132 = vmul.f32 %v61, %v96
  %v133 = vmul.f32 %v62, %v96
  %v134 = vmul.f32 %v63, %v96
  %v135 = vmul.f32 %v64, %v96
  %v136 = vmul.f32 %v65, %v96
  %v137 = vmul.f32 %v66, %v96
  %v138 = vmul.f32 %v67, %v96
  %v139 = vmul.f32 %v68, %v96
  %v140 = vmul.f32 %v69, %v96
  %v141 = vmul.f32 %v70, %v96
  %v142 = vmul.f32 %v71, %v96
  %v143 = vmul.f32 %v72, %v96
  %v144 = vmul.f32 %v73, %v96
  %v145 = vmul.f32 %v74, %v96
  %v146 = vmul.f32 %v75, %v96
  %v147 = vmul.f32 %v76, %v96
  %v148 = vmul.f32 %v77, %v96
  %v149 = vmul.f32 %v78, %v96
  %v150 = vmul.f32 %v79, %v96
  %v151 = vmul.f32 %v80, %v96
  %v152 = vmul.f32 %v81, %v96
  %v153 = vmul.f32 %v82, %v96
  %v154 = vmul.f32 %v83, %v96
  %v155 = vmul.f32 %v84, %v96
  %v156 = vmul.f32 %v85, %v96
  %v157 = vmul.f32 %v86, %v96
  %v158 = vmul.f32 %v87, %v96
  %v159 = vmul.f32 %v88, %v96
  %v160 = vmul.f32 %v89, %v96
  %v161 = vmul.f32 %v90, %v96
  %v162 = vld [vmem:[%s2] sm:$0x1]
  %v164 = vlaneseq
  %v165 = vshrl.u32 %v164, 7
  %v166 = vsub.s32 0, %v165
  %v167 = vrot.slane %v162, %v166
  %v169 = vadd.f32 %v98, %v167
  %v170 = vadd.f32 %v99, %v167
  %v171 = vadd.f32 %v100, %v167
  %v172 = vadd.f32 %v101, %v167
  %v173 = vadd.f32 %v102, %v167
  %v174 = vadd.f32 %v103, %v167
  %v175 = vadd.f32 %v104, %v167
  %v176 = vadd.f32 %v105, %v167
  %v177 = vadd.f32 %v106, %v167
  %v178 = vadd.f32 %v107, %v167
  %v179 = vadd.f32 %v108, %v167
  %v180 = vadd.f32 %v109, %v167
  %v181 = vadd.f32 %v110, %v167
  %v182 = vadd.f32 %v111, %v167
  %v183 = vadd.f32 %v112, %v167
  %v184 = vadd.f32 %v113, %v167
  %v185 = vadd.f32 %v114, %v167
  %v186 = vadd.f32 %v115, %v167
  %v187 = vadd.f32 %v116, %v167
  %v188 = vadd.f32 %v117, %v167
  %v189 = vadd.f32 %v118, %v167
  %v190 = vadd.f32 %v119, %v167
  %v191 = vadd.f32 %v120, %v167
  %v192 = vadd.f32 %v121, %v167
  %v193 = vadd.f32 %v122, %v167
  %v194 = vadd.f32 %v123, %v167
  %v195 = vadd.f32 %v124, %v167
  %v196 = vadd.f32 %v125, %v167
  %v197 = vadd.f32 %v126, %v167
  %v198 = vadd.f32 %v127, %v167
  %v199 = vadd.f32 %v128, %v167
  %v200 = vadd.f32 %v129, %v167
  %v201 = vadd.f32 %v130, %v167
  %v202 = vadd.f32 %v131, %v167
  %v203 = vadd.f32 %v132, %v167
  %v204 = vadd.f32 %v133, %v167
  %v205 = vadd.f32 %v134, %v167
  %v206 = vadd.f32 %v135, %v167
  %v207 = vadd.f32 %v136, %v167
  %v208 = vadd.f32 %v137, %v167
  %v209 = vadd.f32 %v138, %v167
  %v210 = vadd.f32 %v139, %v167
  %v211 = vadd.f32 %v140, %v167
  %v212 = vadd.f32 %v141, %v167
  %v213 = vadd.f32 %v142, %v167
  %v214 = vadd.f32 %v143, %v167
  %v215 = vadd.f32 %v144, %v167
  %v216 = vadd.f32 %v145, %v167
  %v217 = vadd.f32 %v146, %v167
  %v218 = vadd.f32 %v147, %v167
  %v219 = vadd.f32 %v148, %v167
  %v220 = vadd.f32 %v149, %v167
  %v221 = vadd.f32 %v150, %v167
  %v222 = vadd.f32 %v151, %v167
  %v223 = vadd.f32 %v152, %v167
  %v224 = vadd.f32 %v153, %v167
  %v225 = vadd.f32 %v154, %v167
  %v226 = vadd.f32 %v155, %v167
  %v227 = vadd.f32 %v156, %v167
  %v228 = vadd.f32 %v157, %v167
  %v229 = vadd.f32 %v158, %v167
  %v230 = vadd.f32 %v159, %v167
  %v231 = vadd.f32 %v160, %v167
  %v232 = vadd.f32 %v161, %v167
  %v233 = vmax.f32 %v169, 0.0
  %v234 = vmax.f32 %v170, 0.0
  %v235 = vmax.f32 %v171, 0.0
  %v236 = vmax.f32 %v172, 0.0
  %v237 = vmax.f32 %v173, 0.0
  %v238 = vmax.f32 %v174, 0.0
  %v239 = vmax.f32 %v175, 0.0
  %v240 = vmax.f32 %v176, 0.0
  %v241 = vmax.f32 %v177, 0.0
  %v242 = vmax.f32 %v178, 0.0
  %v243 = vmax.f32 %v179, 0.0
  %v244 = vmax.f32 %v180, 0.0
  %v245 = vmax.f32 %v181, 0.0
  %v246 = vmax.f32 %v182, 0.0
  %v247 = vmax.f32 %v183, 0.0
  %v248 = vmax.f32 %v184, 0.0
  %v249 = vmax.f32 %v185, 0.0
  %v250 = vmax.f32 %v186, 0.0
  %v251 = vmax.f32 %v187, 0.0
  %v252 = vmax.f32 %v188, 0.0
  %v253 = vmax.f32 %v189, 0.0
  %v254 = vmax.f32 %v190, 0.0
  %v255 = vmax.f32 %v191, 0.0
  %v256 = vmax.f32 %v192, 0.0
  %v257 = vmax.f32 %v193, 0.0
  %v258 = vmax.f32 %v194, 0.0
  %v259 = vmax.f32 %v195, 0.0
  %v260 = vmax.f32 %v196, 0.0
  %v261 = vmax.f32 %v197, 0.0
  %v262 = vmax.f32 %v198, 0.0
  %v263 = vmax.f32 %v199, 0.0
  %v264 = vmax.f32 %v200, 0.0
  %v265 = vmax.f32 %v201, 0.0
  %v266 = vmax.f32 %v202, 0.0
  %v267 = vmax.f32 %v203, 0.0
  %v268 = vmax.f32 %v204, 0.0
  %v269 = vmax.f32 %v205, 0.0
  %v270 = vmax.f32 %v206, 0.0
  %v271 = vmax.f32 %v207, 0.0
  %v272 = vmax.f32 %v208, 0.0
  %v273 = vmax.f32 %v209, 0.0
  %v274 = vmax.f32 %v210, 0.0
  %v275 = vmax.f32 %v211, 0.0
  %v276 = vmax.f32 %v212, 0.0
  %v277 = vmax.f32 %v213, 0.0
  %v278 = vmax.f32 %v214, 0.0
  %v279 = vmax.f32 %v215, 0.0
  %v280 = vmax.f32 %v216, 0.0
  %v281 = vmax.f32 %v217, 0.0
  %v282 = vmax.f32 %v218, 0.0
  %v283 = vmax.f32 %v219, 0.0
  %v284 = vmax.f32 %v220, 0.0
  %v285 = vmax.f32 %v221, 0.0
  %v286 = vmax.f32 %v222, 0.0
  %v287 = vmax.f32 %v223, 0.0
  %v288 = vmax.f32 %v224, 0.0
  %v289 = vmax.f32 %v225, 0.0
  %v290 = vmax.f32 %v226, 0.0
  %v291 = vmax.f32 %v227, 0.0
  %v292 = vmax.f32 %v228, 0.0
  %v293 = vmax.f32 %v229, 0.0
  %v294 = vmax.f32 %v230, 0.0
  %v295 = vmax.f32 %v231, 0.0
  %v296 = vmax.f32 %v232, 0.0
  %v297 = vpack.c.bf16 %v234, %v233
  %v298 = vpack.c.bf16 %v236, %v235
  %v299 = vpack.c.bf16 %v238, %v237
  %v300 = vpack.c.bf16 %v240, %v239
  %v301 = vpack.c.bf16 %v242, %v241
  %v302 = vpack.c.bf16 %v244, %v243
  %v303 = vpack.c.bf16 %v246, %v245
  %v304 = vpack.c.bf16 %v248, %v247
  %v305 = vpack.c.bf16 %v250, %v249
  %v306 = vpack.c.bf16 %v252, %v251
  %v307 = vpack.c.bf16 %v254, %v253
  %v308 = vpack.c.bf16 %v256, %v255
  %v309 = vpack.c.bf16 %v258, %v257
  %v310 = vpack.c.bf16 %v260, %v259
  %v311 = vpack.c.bf16 %v262, %v261
  %v312 = vpack.c.bf16 %v264, %v263
  %v313 = vpack.c.bf16 %v266, %v265
  %v314 = vpack.c.bf16 %v268, %v267
  %v315 = vpack.c.bf16 %v270, %v269
  %v316 = vpack.c.bf16 %v272, %v271
  %v317 = vpack.c.bf16 %v274, %v273
  %v318 = vpack.c.bf16 %v276, %v275
  %v319 = vpack.c.bf16 %v278, %v277
  %v320 = vpack.c.bf16 %v280, %v279
  %v321 = vpack.c.bf16 %v282, %v281
  %v322 = vpack.c.bf16 %v284, %v283
  %v323 = vpack.c.bf16 %v286, %v285
  %v324 = vpack.c.bf16 %v288, %v287
  %v325 = vpack.c.bf16 %v290, %v289
  %v326 = vpack.c.bf16 %v292, %v291
  %v327 = vpack.c.bf16 %v294, %v293
  %v328 = vpack.c.bf16 %v296, %v295
  %v329 = vld [vmem:[%s3] sm:$0x3]
  %vm330 = vcmask 31744
  %v332 = vsel %vm330, %v297, 0
  %v335 = vsel %vm330, %v298, 0
  %v338 = vsel %vm330, %v299, 0
  %v341 = vsel %vm330, %v300, 0
  %v344 = vsel %vm330, %v301, 0
  %v347 = vsel %vm330, %v302, 0
  %v350 = vsel %vm330, %v303, 0
  %v353 = vsel %vm330, %v304, 0
  %v356 = vsel %vm330, %v305, 0
  %v359 = vsel %vm330, %v306, 0
  %v362 = vsel %vm330, %v307, 0
  %v365 = vsel %vm330, %v308, 0
  %v368 = vsel %vm330, %v309, 0
  %v371 = vsel %vm330, %v310, 0
  %v374 = vsel %vm330, %v311, 0
  %v377 = vsel %vm330, %v312, 0
  %v380 = vsel %vm330, %v313, 0
  %v383 = vsel %vm330, %v314, 0
  %v386 = vsel %vm330, %v315, 0
  %v389 = vsel %vm330, %v316, 0
  %v392 = vsel %vm330, %v317, 0
  %v395 = vsel %vm330, %v318, 0
  %v398 = vsel %vm330, %v319, 0
  %v401 = vsel %vm330, %v320, 0
  %v404 = vsel %vm330, %v321, 0
  %v407 = vsel %vm330, %v322, 0
  %v410 = vsel %vm330, %v323, 0
  %v413 = vsel %vm330, %v324, 0
  %v416 = vsel %vm330, %v325, 0
  %v419 = vsel %vm330, %v326, 0
  %v422 = vsel %vm330, %v327, 0
  %v425 = vsel %vm330, %v328, 0
  %vm427 = vcmask 1041408
  %v429 = vsel %vm427, %v329, 0
  %431 = vmatprep.subr.bf16.mxu0 0
  %432 = vmatpush1.bf16.msra.mxu0 %v429
  %433 = vmatprep.subr.bf16.mxu0 0
  %434 = vmatpush1.bf16.msra.mxu0 0
  %435 = vmatprep.subr.bf16.mxu0 0
  %436 = vmatpush1.bf16.msra.mxu0 0
  %437 = vmatprep.subr.bf16.mxu0 0
  %438 = vmatpush1.bf16.msra.mxu0 0
  %439 = vmatprep.subr.bf16.mxu0 0
  %440 = vmatpush1.bf16.msra.mxu0 0
  %441 = vmatprep.subr.bf16.mxu0 0
  %442 = vmatpush1.bf16.msra.mxu0 0
  %443 = vmatprep.subr.bf16.mxu0 0
  %444 = vmatpush1.bf16.msra.mxu0 0
  %445 = vmatprep.subr.bf16.mxu0 0
  %446 = vmatpush1.bf16.msra.mxu0 0
  %447 = vmatprep.subr.bf16.mxu0 0
  %448 = vmatpush1.bf16.msra.mxu0 0
  %449 = vmatprep.subr.bf16.mxu0 0
  %450 = vmatpush1.bf16.msra.mxu0 0
  %451 = vmatprep.subr.bf16.mxu0 0
  %452 = vmatpush1.bf16.msra.mxu0 0
  %453 = vmatprep.subr.bf16.mxu0 0
  %454 = vmatpush1.bf16.msra.mxu0 0
  %455 = vmatprep.subr.bf16.mxu0 0
  %456 = vmatpush1.bf16.msra.mxu0 0
  %457 = vmatprep.subr.bf16.mxu0 0
  %458 = vmatpush1.bf16.msra.mxu0 0
  %459 = vmatprep.subr.bf16.mxu0 0
  %460 = vmatpush1.bf16.msra.mxu0 0
  %461 = vmatprep.subr.bf16.mxu0 0
  %462 = vmatpush1.bf16.msra.mxu0 0
  %463 = vmatprep.mubr.bf16.mxu0 0
  %464 = vmatmul.mubr.bf16.gmra.mrb[0].mxu0 %v332
  %v465 = vpop.f32.mrb[0].mxu0
  %v466 = vadd.f32 0.0, %v465
  %v467 = vpop.f32.mrb[0].mxu0
  %v468 = vpop.f32.mrb[0].mxu0
  %v469 = vadd.f32 0.0, %v468
  %v470 = vpop.f32.mrb[0].mxu0
  %471 = vmatprep.mubr.bf16.mxu0 0
  %472 = vmatmul.mubr.bf16.gmra.mrb[0].mxu0 %v335
  %v473 = vpop.f32.mrb[0].mxu0
  %v474 = vadd.f32 0.0, %v473
  %v475 = vpop.f32.mrb[0].mxu0
  %v476 = vpop.f32.mrb[0].mxu0
  %v477 = vadd.f32 0.0, %v476
  %v478 = vpop.f32.mrb[0].mxu0
  %479 = vmatprep.mubr.bf16.mxu0 0
  %480 = vmatmul.mubr.bf16.gmra.mrb[0].mxu0 %v338
  %v481 = vpop.f32.mrb[0].mxu0
  %v482 = vadd.f32 0.0, %v481
  %v483 = vpop.f32.mrb[0].mxu0
  %v484 = vpop.f32.mrb[0].mxu0
  %v485 = vadd.f32 0.0, %v484
  %v486 = vpop.f32.mrb[0].mxu0
  %487 = vmatprep.mubr.bf16.mxu0 0
  %488 = vmatmul.mubr.bf16.gmra.mrb[0].mxu0 %v341
  %v489 = vpop.f32.mrb[0].mxu0
  %v490 = vadd.f32 0.0, %v489
  %v491 = vpop.f32.mrb[0].mxu0
  %v492 = vpop.f32.mrb[0].mxu0
  %v493 = vadd.f32 0.0, %v492
  %v494 = vpop.f32.mrb[0].mxu0
  %495 = vmatprep.mubr.bf16.mxu0 0
  %496 = vmatmul.mubr.bf16.gmra.mrb[0].mxu0 %v344
  %v497 = vpop.f32.mrb[0].mxu0
  %v498 = vadd.f32 0.0, %v497
  %v499 = vpop.f32.mrb[0].mxu0
  %v500 = vpop.f32.mrb[0].mxu0
  %v501 = vadd.f32 0.0, %v500
  %v502 = vpop.f32.mrb[0].mxu0
  %503 = vmatprep.mubr.bf16.mxu0 0
  %504 = vmatmul.mubr.bf16.gmra.mrb[0].mxu0 %v347
  %v505 = vpop.f32.mrb[0].mxu0
  %v506 = vadd.f32 0.0, %v505
  %v507 = vpop.f32.mrb[0].mxu0
  %v508 = vpop.f32.mrb[0].mxu0
  %v509 = vadd.f32 0.0, %v508
  %v510 = vpop.f32.mrb[0].mxu0
  %511 = vmatprep.mubr.bf16.mxu0 0
  %512 = vmatmul.mubr.bf16.gmra.mrb[0].mxu0 %v350
  %v513 = vpop.f32.mrb[0].mxu0
  %v514 = vadd.f32 0.0, %v513
  %v515 = vpop.f32.mrb[0].mxu0
  %v516 = vpop.f32.mrb[0].mxu0
  %v517 = vadd.f32 0.0, %v516
  %v518 = vpop.f32.mrb[0].mxu0
  %519 = vmatprep.mubr.bf16.mxu0 0
  %520 = vmatmul.mubr.bf16.gmra.mrb[0].mxu0 %v353
  %v521 = vpop.f32.mrb[0].mxu0
  %v522 = vadd.f32 0.0, %v521
  %v523 = vpop.f32.mrb[0].mxu0
  %v524 = vpop.f32.mrb[0].mxu0
  %v525 = vadd.f32 0.0, %v524
  %v526 = vpop.f32.mrb[0].mxu0
  %527 = vmatprep.mubr.bf16.mxu0 0
  %528 = vmatmul.mubr.bf16.gmra.mrb[0].mxu0 %v356
  %v529 = vpop.f32.mrb[0].mxu0
  %v530 = vadd.f32 0.0, %v529
  %v531 = vpop.f32.mrb[0].mxu0
  %v532 = vpop.f32.mrb[0].mxu0
  %v533 = vadd.f32 0.0, %v532
  %v534 = vpop.f32.mrb[0].mxu0
  %535 = vmatprep.mubr.bf16.mxu0 0
  %536 = vmatmul.mubr.bf16.gmra.mrb[0].mxu0 %v359
  %v537 = vpop.f32.mrb[0].mxu0
  %v538 = vadd.f32 0.0, %v537
  %v539 = vpop.f32.mrb[0].mxu0
  %v540 = vpop.f32.mrb[0].mxu0
  %v541 = vadd.f32 0.0, %v540
  %v542 = vpop.f32.mrb[0].mxu0
  %543 = vmatprep.mubr.bf16.mxu0 0
  %544 = vmatmul.mubr.bf16.gmra.mrb[0].mxu0 %v362
  %v545 = vpop.f32.mrb[0].mxu0
  %v546 = vadd.f32 0.0, %v545
  %v547 = vpop.f32.mrb[0].mxu0
  %v548 = vpop.f32.mrb[0].mxu0
  %v549 = vadd.f32 0.0, %v548
  %v550 = vpop.f32.mrb[0].mxu0
  %551 = vmatprep.mubr.bf16.mxu0 0
  %552 = vmatmul.mubr.bf16.gmra.mrb[0].mxu0 %v365
  %v553 = vpop.f32.mrb[0].mxu0
  %v554 = vadd.f32 0.0, %v553
  %v555 = vpop.f32.mrb[0].mxu0
  %v556 = vpop.f32.mrb[0].mxu0
  %v557 = vadd.f32 0.0, %v556
  %v558 = vpop.f32.mrb[0].mxu0
  %559 = vmatprep.mubr.bf16.mxu0 0
  %560 = vmatmul.mubr.bf16.gmra.mrb[0].mxu0 %v368
  %v561 = vpop.f32.mrb[0].mxu0
  %v562 = vadd.f32 0.0, %v561
  %v563 = vpop.f32.mrb[0].mxu0
  %v564 = vpop.f32.mrb[0].mxu0
  %v565 = vadd.f32 0.0, %v564
  %v566 = vpop.f32.mrb[0].mxu0
  %567 = vmatprep.mubr.bf16.mxu0 0
  %568 = vmatmul.mubr.bf16.gmra.mrb[0].mxu0 %v371
  %v569 = vpop.f32.mrb[0].mxu0
  %v570 = vadd.f32 0.0, %v569
  %v571 = vpop.f32.mrb[0].mxu0
  %v572 = vpop.f32.mrb[0].mxu0
  %v573 = vadd.f32 0.0, %v572
  %v574 = vpop.f32.mrb[0].mxu0
  %575 = vmatprep.mubr.bf16.mxu0 0
  %576 = vmatmul.mubr.bf16.gmra.mrb[0].mxu0 %v374
  %v577 = vpop.f32.mrb[0].mxu0
  %v578 = vadd.f32 0.0, %v577
  %v579 = vpop.f32.mrb[0].mxu0
  %v580 = vpop.f32.mrb[0].mxu0
  %v581 = vadd.f32 0.0, %v580
  %v582 = vpop.f32.mrb[0].mxu0
  %583 = vmatprep.mubr.bf16.mxu0 0
  %584 = vmatmul.mubr.bf16.gmra.mrb[0].mxu0 %v377
  %v585 = vpop.f32.mrb[0].mxu0
  %v586 = vadd.f32 0.0, %v585
  %v587 = vpop.f32.mrb[0].mxu0
  %v588 = vpop.f32.mrb[0].mxu0
  %v589 = vadd.f32 0.0, %v588
  %v590 = vpop.f32.mrb[0].mxu0
  %591 = vmatprep.mubr.bf16.mxu0 0
  %592 = vmatmul.mubr.bf16.gmra.mrb[0].mxu0 %v380
  %v593 = vpop.f32.mrb[0].mxu0
  %v594 = vadd.f32 0.0, %v593
  %v595 = vpop.f32.mrb[0].mxu0
  %v596 = vpop.f32.mrb[0].mxu0
  %v597 = vadd.f32 0.0, %v596
  %v598 = vpop.f32.mrb[0].mxu0
  %599 = vmatprep.mubr.bf16.mxu0 0
  %600 = vmatmul.mubr.bf16.gmra.mrb[0].mxu0 %v383
  %v601 = vpop.f32.mrb[0].mxu0
  %v602 = vadd.f32 0.0, %v601
  %v603 = vpop.f32.mrb[0].mxu0
  %v604 = vpop.f32.mrb[0].mxu0
  %v605 = vadd.f32 0.0, %v604
  %v606 = vpop.f32.mrb[0].mxu0
  %607 = vmatprep.mubr.bf16.mxu0 0
  %608 = vmatmul.mubr.bf16.gmra.mrb[0].mxu0 %v386
  %v609 = vpop.f32.mrb[0].mxu0
  %v610 = vadd.f32 0.0, %v609
  %v611 = vpop.f32.mrb[0].mxu0
  %v612 = vpop.f32.mrb[0].mxu0
  %v613 = vadd.f32 0.0, %v612
  %v614 = vpop.f32.mrb[0].mxu0
  %615 = vmatprep.mubr.bf16.mxu0 0
  %616 = vmatmul.mubr.bf16.gmra.mrb[0].mxu0 %v389
  %v617 = vpop.f32.mrb[0].mxu0
  %v618 = vadd.f32 0.0, %v617
  %v619 = vpop.f32.mrb[0].mxu0
  %v620 = vpop.f32.mrb[0].mxu0
  %v621 = vadd.f32 0.0, %v620
  %v622 = vpop.f32.mrb[0].mxu0
  %623 = vmatprep.mubr.bf16.mxu0 0
  %624 = vmatmul.mubr.bf16.gmra.mrb[0].mxu0 %v392
  %v625 = vpop.f32.mrb[0].mxu0
  %v626 = vadd.f32 0.0, %v625
  %v627 = vpop.f32.mrb[0].mxu0
  %v628 = vpop.f32.mrb[0].mxu0
  %v629 = vadd.f32 0.0, %v628
  %v630 = vpop.f32.mrb[0].mxu0
  %631 = vmatprep.mubr.bf16.mxu0 0
  %632 = vmatmul.mubr.bf16.gmra.mrb[0].mxu0 %v395
  %v633 = vpop.f32.mrb[0].mxu0
  %v634 = vadd.f32 0.0, %v633
  %v635 = vpop.f32.mrb[0].mxu0
  %v636 = vpop.f32.mrb[0].mxu0
  %v637 = vadd.f32 0.0, %v636
  %v638 = vpop.f32.mrb[0].mxu0
  %639 = vmatprep.mubr.bf16.mxu0 0
  %640 = vmatmul.mubr.bf16.gmra.mrb[0].mxu0 %v398
  %v641 = vpop.f32.mrb[0].mxu0
  %v642 = vadd.f32 0.0, %v641
  %v643 = vpop.f32.mrb[0].mxu0
  %v644 = vpop.f32.mrb[0].mxu0
  %v645 = vadd.f32 0.0, %v644
  %v646 = vpop.f32.mrb[0].mxu0
  %647 = vmatprep.mubr.bf16.mxu0 0
  %648 = vmatmul.mubr.bf16.gmra.mrb[0].mxu0 %v401
  %v649 = vpop.f32.mrb[0].mxu0
  %v650 = vadd.f32 0.0, %v649
  %v651 = vpop.f32.mrb[0].mxu0
  %v652 = vpop.f32.mrb[0].mxu0
  %v653 = vadd.f32 0.0, %v652
  %v654 = vpop.f32.mrb[0].mxu0
  %655 = vmatprep.mubr.bf16.mxu0 0
  %656 = vmatmul.mubr.bf16.gmra.mrb[0].mxu0 %v404
  %v657 = vpop.f32.mrb[0].mxu0
  %v658 = vadd.f32 0.0, %v657
  %v659 = vpop.f32.mrb[0].mxu0
  %v660 = vpop.f32.mrb[0].mxu0
  %v661 = vadd.f32 0.0, %v660
  %v662 = vpop.f32.mrb[0].mxu0
  %663 = vmatprep.mubr.bf16.mxu0 0
  %664 = vmatmul.mubr.bf16.gmra.mrb[0].mxu0 %v407
  %v665 = vpop.f32.mrb[0].mxu0
  %v666 = vadd.f32 0.0, %v665
  %v667 = vpop.f32.mrb[0].mxu0
  %v668 = vpop.f32.mrb[0].mxu0
  %v669 = vadd.f32 0.0, %v668
  %v670 = vpop.f32.mrb[0].mxu0
  %671 = vmatprep.mubr.bf16.mxu0 0
  %672 = vmatmul.mubr.bf16.gmra.mrb[0].mxu0 %v410
  %v673 = vpop.f32.mrb[0].mxu0
  %v674 = vadd.f32 0.0, %v673
  %v675 = vpop.f32.mrb[0].mxu0
  %v676 = vpop.f32.mrb[0].mxu0
  %v677 = vadd.f32 0.0, %v676
  %v678 = vpop.f32.mrb[0].mxu0
  %679 = vmatprep.mubr.bf16.mxu0 0
  %680 = vmatmul.mubr.bf16.gmra.mrb[0].mxu0 %v413
  %v681 = vpop.f32.mrb[0].mxu0
  %v682 = vadd.f32 0.0, %v681
  %v683 = vpop.f32.mrb[0].mxu0
  %v684 = vpop.f32.mrb[0].mxu0
  %v685 = vadd.f32 0.0, %v684
  %v686 = vpop.f32.mrb[0].mxu0
  %687 = vmatprep.mubr.bf16.mxu0 0
  %688 = vmatmul.mubr.bf16.gmra.mrb[0].mxu0 %v416
  %v689 = vpop.f32.mrb[0].mxu0
  %v690 = vadd.f32 0.0, %v689
  %v691 = vpop.f32.mrb[0].mxu0
  %v692 = vpop.f32.mrb[0].mxu0
  %v693 = vadd.f32 0.0, %v692
  %v694 = vpop.f32.mrb[0].mxu0
  %695 = vmatprep.mubr.bf16.mxu0 0
  %696 = vmatmul.mubr.bf16.gmra.mrb[0].mxu0 %v419
  %v697 = vpop.f32.mrb[0].mxu0
  %v698 = vadd.f32 0.0, %v697
  %v699 = vpop.f32.mrb[0].mxu0
  %v700 = vpop.f32.mrb[0].mxu0
  %v701 = vadd.f32 0.0, %v700
  %v702 = vpop.f32.mrb[0].mxu0
  %703 = vmatprep.mubr.bf16.mxu0 0
  %704 = vmatmul.mubr.bf16.gmra.mrb[0].mxu0 %v422
  %v705 = vpop.f32.mrb[0].mxu0
  %v706 = vadd.f32 0.0, %v705
  %v707 = vpop.f32.mrb[0].mxu0
  %v708 = vpop.f32.mrb[0].mxu0
  %v709 = vadd.f32 0.0, %v708
  %v710 = vpop.f32.mrb[0].mxu0
  %711 = vmatprep.mubr.bf16.mxu0 0
  %712 = vmatmul.mubr.bf16.gmra.mrb[0].mxu0 %v425
  %v713 = vpop.f32.mrb[0].mxu0
  %v714 = vadd.f32 0.0, %v713
  %v715 = vpop.f32.mrb[0].mxu0
  %v716 = vpop.f32.mrb[0].mxu0
  %v717 = vadd.f32 0.0, %v716
  %v718 = vpop.f32.mrb[0].mxu0
  %719 = vdwg.mxu0
  %v720 = vld [vmem:[%s4] sm:$0x1]
  %v722 = vlaneseq
  %v723 = vshrl.u32 %v722, 7
  %v724 = vsub.s32 0, %v723
  %v725 = vrot.slane %v720, %v724
  %v727 = vmul.f32 %v466, %v725
  %v728 = vmul.f32 %v469, %v725
  %v729 = vmul.f32 %v474, %v725
  %v730 = vmul.f32 %v477, %v725
  %v731 = vmul.f32 %v482, %v725
  %v732 = vmul.f32 %v485, %v725
  %v733 = vmul.f32 %v490, %v725
  %v734 = vmul.f32 %v493, %v725
  %v735 = vmul.f32 %v498, %v725
  %v736 = vmul.f32 %v501, %v725
  %v737 = vmul.f32 %v506, %v725
  %v738 = vmul.f32 %v509, %v725
  %v739 = vmul.f32 %v514, %v725
  %v740 = vmul.f32 %v517, %v725
  %v741 = vmul.f32 %v522, %v725
  %v742 = vmul.f32 %v525, %v725
  %v743 = vmul.f32 %v530, %v725
  %v744 = vmul.f32 %v533, %v725
  %v745 = vmul.f32 %v538, %v725
  %v746 = vmul.f32 %v541, %v725
  %v747 = vmul.f32 %v546, %v725
  %v748 = vmul.f32 %v549, %v725
  %v749 = vmul.f32 %v554, %v725
  %v750 = vmul.f32 %v557, %v725
  %v751 = vmul.f32 %v562, %v725
  %v752 = vmul.f32 %v565, %v725
  %v753 = vmul.f32 %v570, %v725
  %v754 = vmul.f32 %v573, %v725
  %v755 = vmul.f32 %v578, %v725
  %v756 = vmul.f32 %v581, %v725
  %v757 = vmul.f32 %v586, %v725
  %v758 = vmul.f32 %v589, %v725
  %v759 = vmul.f32 %v594, %v725
  %v760 = vmul.f32 %v597, %v725
  %v761 = vmul.f32 %v602, %v725
  %v762 = vmul.f32 %v605, %v725
  %v763 = vmul.f32 %v610, %v725
  %v764 = vmul.f32 %v613, %v725
  %v765 = vmul.f32 %v618, %v725
  %v766 = vmul.f32 %v621, %v725
  %v767 = vmul.f32 %v626, %v725
  %v768 = vmul.f32 %v629, %v725
  %v769 = vmul.f32 %v634, %v725
  %v770 = vmul.f32 %v637, %v725
  %v771 = vmul.f32 %v642, %v725
  %v772 = vmul.f32 %v645, %v725
  %v773 = vmul.f32 %v650, %v725
  %v774 = vmul.f32 %v653, %v725
  %v775 = vmul.f32 %v658, %v725
  %v776 = vmul.f32 %v661, %v725
  %v777 = vmul.f32 %v666, %v725
  %v778 = vmul.f32 %v669, %v725
  %v779 = vmul.f32 %v674, %v725
  %v780 = vmul.f32 %v677, %v725
  %v781 = vmul.f32 %v682, %v725
  %v782 = vmul.f32 %v685, %v725
  %v783 = vmul.f32 %v690, %v725
  %v784 = vmul.f32 %v693, %v725
  %v785 = vmul.f32 %v698, %v725
  %v786 = vmul.f32 %v701, %v725
  %v787 = vmul.f32 %v706, %v725
  %v788 = vmul.f32 %v709, %v725
  %v789 = vmul.f32 %v714, %v725
  %v790 = vmul.f32 %v717, %v725
  %v791 = vld [vmem:[%s5] sm:$0x1]
  %v793 = vlaneseq
  %v794 = vshrl.u32 %v793, 7
  %v795 = vsub.s32 0, %v794
  %v796 = vrot.slane %v791, %v795
  %v798 = vadd.f32 %v727, %v796
  %v799 = vadd.f32 %v728, %v796
  %v800 = vadd.f32 %v729, %v796
  %v801 = vadd.f32 %v730, %v796
  %v802 = vadd.f32 %v731, %v796
  %v803 = vadd.f32 %v732, %v796
  %v804 = vadd.f32 %v733, %v796
  %v805 = vadd.f32 %v734, %v796
  %v806 = vadd.f32 %v735, %v796
  %v807 = vadd.f32 %v736, %v796
  %v808 = vadd.f32 %v737, %v796
  %v809 = vadd.f32 %v738, %v796
  %v810 = vadd.f32 %v739, %v796
  %v811 = vadd.f32 %v740, %v796
  %v812 = vadd.f32 %v741, %v796
  %v813 = vadd.f32 %v742, %v796
  %v814 = vadd.f32 %v743, %v796
  %v815 = vadd.f32 %v744, %v796
  %v816 = vadd.f32 %v745, %v796
  %v817 = vadd.f32 %v746, %v796
  %v818 = vadd.f32 %v747, %v796
  %v819 = vadd.f32 %v748, %v796
  %v820 = vadd.f32 %v749, %v796
  %v821 = vadd.f32 %v750, %v796
  %v822 = vadd.f32 %v751, %v796
  %v823 = vadd.f32 %v752, %v796
  %v824 = vadd.f32 %v753, %v796
  %v825 = vadd.f32 %v754, %v796
  %v826 = vadd.f32 %v755, %v796
  %v827 = vadd.f32 %v756, %v796
  %v828 = vadd.f32 %v757, %v796
  %v829 = vadd.f32 %v758, %v796
  %v830 = vadd.f32 %v759, %v796
  %v831 = vadd.f32 %v760, %v796
  %v832 = vadd.f32 %v761, %v796
  %v833 = vadd.f32 %v762, %v796
  %v834 = vadd.f32 %v763, %v796
  %v835 = vadd.f32 %v764, %v796
  %v836 = vadd.f32 %v765, %v796
  %v837 = vadd.f32 %v766, %v796
  %v838 = vadd.f32 %v767, %v796
  %v839 = vadd.f32 %v768, %v796
  %v840 = vadd.f32 %v769, %v796
  %v841 = vadd.f32 %v770, %v796
  %v842 = vadd.f32 %v771, %v796
  %v843 = vadd.f32 %v772, %v796
  %v844 = vadd.f32 %v773, %v796
  %v845 = vadd.f32 %v774, %v796
  %v846 = vadd.f32 %v775, %v796
  %v847 = vadd.f32 %v776, %v796
  %v848 = vadd.f32 %v777, %v796
  %v849 = vadd.f32 %v778, %v796
  %v850 = vadd.f32 %v779, %v796
  %v851 = vadd.f32 %v780, %v796
  %v852 = vadd.f32 %v781, %v796
  %v853 = vadd.f32 %v782, %v796
  %v854 = vadd.f32 %v783, %v796
  %v855 = vadd.f32 %v784, %v796
  %v856 = vadd.f32 %v785, %v796
  %v857 = vadd.f32 %v786, %v796
  %v858 = vadd.f32 %v787, %v796
  %v859 = vadd.f32 %v788, %v796
  %v860 = vadd.f32 %v789, %v796
  %v861 = vadd.f32 %v790, %v796
  %v862 = vmax.f32 %v798, 0.0
  %v863 = vmax.f32 %v799, 0.0
  %v864 = vmax.f32 %v800, 0.0
  %v865 = vmax.f32 %v801, 0.0
  %v866 = vmax.f32 %v802, 0.0
  %v867 = vmax.f32 %v803, 0.0
  %v868 = vmax.f32 %v804, 0.0
  %v869 = vmax.f32 %v805, 0.0
  %v870 = vmax.f32 %v806, 0.0
  %v871 = vmax.f32 %v807, 0.0
  %v872 = vmax.f32 %v808, 0.0
  %v873 = vmax.f32 %v809, 0.0
  %v874 = vmax.f32 %v810, 0.0
  %v875 = vmax.f32 %v811, 0.0
  %v876 = vmax.f32 %v812, 0.0
  %v877 = vmax.f32 %v813, 0.0
  %v878 = vmax.f32 %v814, 0.0
  %v879 = vmax.f32 %v815, 0.0
  %v880 = vmax.f32 %v816, 0.0
  %v881 = vmax.f32 %v817, 0.0
  %v882 = vmax.f32 %v818, 0.0
  %v883 = vmax.f32 %v819, 0.0
  %v884 = vmax.f32 %v820, 0.0
  %v885 = vmax.f32 %v821, 0.0
  %v886 = vmax.f32 %v822, 0.0
  %v887 = vmax.f32 %v823, 0.0
  %v888 = vmax.f32 %v824, 0.0
  %v889 = vmax.f32 %v825, 0.0
  %v890 = vmax.f32 %v826, 0.0
  %v891 = vmax.f32 %v827, 0.0
  %v892 = vmax.f32 %v828, 0.0
  %v893 = vmax.f32 %v829, 0.0
  %v894 = vmax.f32 %v830, 0.0
  %v895 = vmax.f32 %v831, 0.0
  %v896 = vmax.f32 %v832, 0.0
  %v897 = vmax.f32 %v833, 0.0
  %v898 = vmax.f32 %v834, 0.0
  %v899 = vmax.f32 %v835, 0.0
  %v900 = vmax.f32 %v836, 0.0
  %v901 = vmax.f32 %v837, 0.0
  %v902 = vmax.f32 %v838, 0.0
  %v903 = vmax.f32 %v839, 0.0
  %v904 = vmax.f32 %v840, 0.0
  %v905 = vmax.f32 %v841, 0.0
  %v906 = vmax.f32 %v842, 0.0
  %v907 = vmax.f32 %v843, 0.0
  %v908 = vmax.f32 %v844, 0.0
  %v909 = vmax.f32 %v845, 0.0
  %v910 = vmax.f32 %v846, 0.0
  %v911 = vmax.f32 %v847, 0.0
  %v912 = vmax.f32 %v848, 0.0
  %v913 = vmax.f32 %v849, 0.0
  %v914 = vmax.f32 %v850, 0.0
  %v915 = vmax.f32 %v851, 0.0
  %v916 = vmax.f32 %v852, 0.0
  %v917 = vmax.f32 %v853, 0.0
  %v918 = vmax.f32 %v854, 0.0
  %v919 = vmax.f32 %v855, 0.0
  %v920 = vmax.f32 %v856, 0.0
  %v921 = vmax.f32 %v857, 0.0
  %v922 = vmax.f32 %v858, 0.0
  %v923 = vmax.f32 %v859, 0.0
  %v924 = vmax.f32 %v860, 0.0
  %v925 = vmax.f32 %v861, 0.0
  %vm926 = vcmask 125952
  %927 = vst.msk [vmem:[#allocation2] sm:$0xf] %vm926, 0
  %928 = vst.msk [vmem:[#allocation2 + $0x4] sm:$0xf] %vm926, 0
  %vm929 = vcmask 122880
  %930 = vst.msk [vmem:[#allocation2 + $0x8] sm:$0x1] %vm929, 0
  %931 = vst.msk [vmem:[#allocation2 + $0xc] sm:$0xf] %vm926, 0
  %932 = vst.msk [vmem:[#allocation2 + $0x10] sm:$0xf] %vm926, 0
  %933 = vst.msk [vmem:[#allocation2 + $0x14] sm:$0x1] %vm929, 0
  %934 = vst.msk [vmem:[#allocation2 + $0x18] sm:$0xf] %vm926, 0
  %935 = vst.msk [vmem:[#allocation2 + $0x1c] sm:$0xf] %vm926, 0
  %936 = vst.msk [vmem:[#allocation2 + $0x20] sm:$0x1] %vm929, 0
  %937 = vst.msk [vmem:[#allocation2 + $0x24] sm:$0xf] %vm926, 0
  %938 = vst.msk [vmem:[#allocation2 + $0x28] sm:$0xf] %vm926, 0
  %939 = vst.msk [vmem:[#allocation2 + $0x2c] sm:$0x1] %vm929, 0
  %940 = vst.msk [vmem:[#allocation2 + $0x30] sm:$0xf] %vm926, 0
  %941 = vst.msk [vmem:[#allocation2 + $0x34] sm:$0xf] %vm926, 0
  %942 = vst.msk [vmem:[#allocation2 + $0x38] sm:$0x1] %vm929, 0
  %943 = vst.msk [vmem:[#allocation2 + $0x3c] sm:$0xf] %vm926, 0
  %944 = vst.msk [vmem:[#allocation2 + $0x40] sm:$0xf] %vm926, 0
  %945 = vst.msk [vmem:[#allocation2 + $0x44] sm:$0x1] %vm929, 0
  %946 = vst.msk [vmem:[#allocation2 + $0x48] sm:$0xf] %vm926, 0
  %947 = vst.msk [vmem:[#allocation2 + $0x4c] sm:$0xf] %vm926, 0
  %948 = vst.msk [vmem:[#allocation2 + $0x50] sm:$0x1] %vm929, 0
  %949 = vst.msk [vmem:[#allocation2 + $0x54] sm:$0xf] %vm926, 0
  %950 = vst.msk [vmem:[#allocation2 + $0x58] sm:$0xf] %vm926, 0
  %951 = vst.msk [vmem:[#allocation2 + $0x5c] sm:$0x1] %vm929, 0
  %952 = vst.msk [vmem:[#allocation2 + $0x60] sm:$0xf] %vm926, 0
  %953 = vst.msk [vmem:[#allocation2 + $0x64] sm:$0xf] %vm926, 0
  %954 = vst.msk [vmem:[#allocation2 + $0x68] sm:$0x1] %vm929, 0
  %955 = vst.msk [vmem:[#allocation2 + $0x6c] sm:$0xf] %vm926, 0
  %956 = vst.msk [vmem:[#allocation2 + $0x70] sm:$0xf] %vm926, 0
  %957 = vst.msk [vmem:[#allocation2 + $0x74] sm:$0x1] %vm929, 0
  %958 = vst.msk [vmem:[#allocation2 + $0x78] sm:$0xf] %vm926, 0
  %959 = vst.msk [vmem:[#allocation2 + $0x7c] sm:$0xf] %vm926, 0
  %960 = vst.msk [vmem:[#allocation2 + $0x80] sm:$0x1] %vm929, 0
  %961 = vst.msk [vmem:[#allocation2 + $0x84] sm:$0xf] %vm926, 0
  %962 = vst.msk [vmem:[#allocation2 + $0x88] sm:$0xf] %vm926, 0
  %963 = vst.msk [vmem:[#allocation2 + $0x8c] sm:$0x1] %vm929, 0
  %964 = vst.msk [vmem:[#allocation2 + $0x90] sm:$0xf] %vm926, 0
  %965 = vst.msk [vmem:[#allocation2 + $0x94] sm:$0xf] %vm926, 0
  %966 = vst.msk [vmem:[#allocation2 + $0x98] sm:$0x1] %vm929, 0
  %967 = vst.msk [vmem:[#allocation2 + $0x9c] sm:$0xf] %vm926, 0
  %968 = vst.msk [vmem:[#allocation2 + $0xa0] sm:$0xf] %vm926, 0
  %969 = vst.msk [vmem:[#allocation2 + $0xa4] sm:$0x1] %vm929, 0
  %970 = vst.msk [vmem:[#allocation2 + $0xa8] sm:$0xf] %vm926, 0
  %971 = vst.msk [vmem:[#allocation2 + $0xac] sm:$0xf] %vm926, 0
  %972 = vst.msk [vmem:[#allocation2 + $0xb0] sm:$0x1] %vm929, 0
  %973 = vst.msk [vmem:[#allocation2 + $0xb4] sm:$0xf] %vm926, 0
  %974 = vst.msk [vmem:[#allocation2 + $0xb8] sm:$0xf] %vm926, 0
  %975 = vst.msk [vmem:[#allocation2 + $0xbc] sm:$0x1] %vm929, 0
  %976 = vst.msk [vmem:[#allocation2 + $0xc0] sm:$0xf] %vm926, 0
  %977 = vst.msk [vmem:[#allocation2 + $0xc4] sm:$0xf] %vm926, 0
  %978 = vst.msk [vmem:[#allocation2 + $0xc8] sm:$0x1] %vm929, 0
  %979 = vst.msk [vmem:[#allocation2 + $0xcc] sm:$0xf] %vm926, 0
  %980 = vst.msk [vmem:[#allocation2 + $0xd0] sm:$0xf] %vm926, 0
  %981 = vst.msk [vmem:[#allocation2 + $0xd4] sm:$0x1] %vm929, 0
  %982 = vst.msk [vmem:[#allocation2 + $0xd8] sm:$0xf] %vm926, 0
  %983 = vst.msk [vmem:[#allocation2 + $0xdc] sm:$0xf] %vm926, 0
  %984 = vst.msk [vmem:[#allocation2 + $0xe0] sm:$0x1] %vm929, 0
  %985 = vst.msk [vmem:[#allocation2 + $0xe4] sm:$0xf] %vm926, 0
  %986 = vst.msk [vmem:[#allocation2 + $0xe8] sm:$0xf] %vm926, 0
  %987 = vst.msk [vmem:[#allocation2 + $0xec] sm:$0x1] %vm929, 0
  %988 = vst.msk [vmem:[#allocation2 + $0xf0] sm:$0xf] %vm926, 0
  %989 = vst.msk [vmem:[#allocation2 + $0xf4] sm:$0xf] %vm926, 0
  %990 = vst.msk [vmem:[#allocation2 + $0xf8] sm:$0x1] %vm929, 0
  %991 = vst.msk [vmem:[#allocation2 + $0xfc] sm:$0xf] %vm926, 0
  %992 = vst.msk [vmem:[#allocation2 + $0x100] sm:$0xf] %vm926, 0
  %993 = vst.msk [vmem:[#allocation2 + $0x104] sm:$0x1] %vm929, 0
  %994 = vst.msk [vmem:[#allocation2 + $0x108] sm:$0xf] %vm926, 0
  %995 = vst.msk [vmem:[#allocation2 + $0x10c] sm:$0xf] %vm926, 0
  %996 = vst.msk [vmem:[#allocation2 + $0x110] sm:$0x1] %vm929, 0
  %997 = vst.msk [vmem:[#allocation2 + $0x114] sm:$0xf] %vm926, 0
  %998 = vst.msk [vmem:[#allocation2 + $0x118] sm:$0xf] %vm926, 0
  %999 = vst.msk [vmem:[#allocation2 + $0x11c] sm:$0x1] %vm929, 0
  %1000 = vst.msk [vmem:[#allocation2 + $0x120] sm:$0xf] %vm926, 0
  %1001 = vst.msk [vmem:[#allocation2 + $0x124] sm:$0xf] %vm926, 0
  %1002 = vst.msk [vmem:[#allocation2 + $0x128] sm:$0x1] %vm929, 0
  %1003 = vst.msk [vmem:[#allocation2 + $0x12c] sm:$0xf] %vm926, 0
  %1004 = vst.msk [vmem:[#allocation2 + $0x130] sm:$0xf] %vm926, 0
  %1005 = vst.msk [vmem:[#allocation2 + $0x134] sm:$0x1] %vm929, 0
  %1006 = vst.msk [vmem:[#allocation2 + $0x138] sm:$0xf] %vm926, 0
  %1007 = vst.msk [vmem:[#allocation2 + $0x13c] sm:$0xf] %vm926, 0
  %1008 = vst.msk [vmem:[#allocation2 + $0x140] sm:$0x1] %vm929, 0
  %1009 = vst.msk [vmem:[#allocation2 + $0x144] sm:$0xf] %vm926, 0
  %1010 = vst.msk [vmem:[#allocation2 + $0x148] sm:$0xf] %vm926, 0
  %1011 = vst.msk [vmem:[#allocation2 + $0x14c] sm:$0x1] %vm929, 0
  %1012 = vst.msk [vmem:[#allocation2 + $0x150] sm:$0xf] %vm926, 0
  %1013 = vst.msk [vmem:[#allocation2 + $0x154] sm:$0xf] %vm926, 0
  %1014 = vst.msk [vmem:[#allocation2 + $0x158] sm:$0x1] %vm929, 0
  %1015 = vst.msk [vmem:[#allocation2 + $0x15c] sm:$0xf] %vm926, 0
  %1016 = vst.msk [vmem:[#allocation2 + $0x160] sm:$0xf] %vm926, 0
  %1017 = vst.msk [vmem:[#allocation2 + $0x164] sm:$0x1] %vm929, 0
  %1018 = vst.msk [vmem:[#allocation2 + $0x168] sm:$0xf] %vm926, 0
  %1019 = vst.msk [vmem:[#allocation2 + $0x16c] sm:$0xf] %vm926, 0
  %1020 = vst.msk [vmem:[#allocation2 + $0x170] sm:$0x1] %vm929, 0
  %1021 = vst.msk [vmem:[#allocation2 + $0x174] sm:$0xf] %vm926, 0
  %1022 = vst.msk [vmem:[#allocation2 + $0x178] sm:$0xf] %vm926, 0
  %1023 = vst.msk [vmem:[#allocation2 + $0x17c] sm:$0x1] %vm929, 0
  %1024 = vst.msk [vmem:[#allocation2 + $0x180] sm:$0xf] %vm926, 0
  %1025 = vst.msk [vmem:[#allocation2 + $0x184] sm:$0xf] %vm926, 0
  %1026 = vst.msk [vmem:[#allocation2 + $0x188] sm:$0x1] %vm929, 0
  %1027 = vst.msk [vmem:[#allocation2 + $0x18c] sm:$0xf] %vm926, 0
  %1028 = vst.msk [vmem:[#allocation2 + $0x190] sm:$0xf] %vm926, 0
  %1029 = vst.msk [vmem:[#allocation2 + $0x194] sm:$0x1] %vm929, 0
  %1030 = vst.msk [vmem:[#allocation2 + $0x198] sm:$0xf] %vm926, 0
  %1031 = vst.msk [vmem:[#allocation2 + $0x19c] sm:$0xf] %vm926, 0
  %1032 = vst.msk [vmem:[#allocation2 + $0x1a0] sm:$0x1] %vm929, 0
  %1033 = vst.msk [vmem:[#allocation2 + $0x1a4] sm:$0xf] %vm926, 0
  %1034 = vst.msk [vmem:[#allocation2 + $0x1a8] sm:$0xf] %vm926, 0
  %1035 = vst.msk [vmem:[#allocation2 + $0x1ac] sm:$0x1] %vm929, 0
  %v1036 = vpack.c.bf16 %v863, %v862
  %v1037 = vpack.c.bf16 %v865, %v864
  %v1038 = vpack.c.bf16 %v867, %v866
  %v1039 = vpack.c.bf16 %v869, %v868
  %v1040 = vpack.c.bf16 %v871, %v870
  %v1041 = vpack.c.bf16 %v873, %v872
  %v1042 = vpack.c.bf16 %v875, %v874
  %v1043 = vpack.c.bf16 %v877, %v876
  %v1044 = vpack.c.bf16 %v879, %v878
  %v1045 = vpack.c.bf16 %v881, %v880
  %v1046 = vpack.c.bf16 %v883, %v882
  %v1047 = vpack.c.bf16 %v885, %v884
  %v1048 = vpack.c.bf16 %v887, %v886
  %v1049 = vpack.c.bf16 %v889, %v888
  %v1050 = vpack.c.bf16 %v891, %v890
  %v1051 = vpack.c.bf16 %v893, %v892
  %v1052 = vpack.c.bf16 %v895, %v894
  %v1053 = vpack.c.bf16 %v897, %v896
  %v1054 = vpack.c.bf16 %v899, %v898
  %v1055 = vpack.c.bf16 %v901, %v900
  %v1056 = vpack.c.bf16 %v903, %v902
  %v1057 = vpack.c.bf16 %v905, %v904
  %v1058 = vpack.c.bf16 %v907, %v906
  %v1059 = vpack.c.bf16 %v909, %v908
  %v1060 = vpack.c.bf16 %v911, %v910
  %v1061 = vpack.c.bf16 %v913, %v912
  %v1062 = vpack.c.bf16 %v915, %v914
  %v1063 = vpack.c.bf16 %v917, %v916
  %v1064 = vpack.c.bf16 %v919, %v918
  %v1065 = vpack.c.bf16 %v921, %v920
  %v1066 = vpack.c.bf16 %v923, %v922
  %v1067 = vpack.c.bf16 %v925, %v924
  %v1100 = vunpack.c.l.b16 %v1036
  %v1101 = vunpack.c.h.b16 %v1036
  %v1102 = vunpack.c.l.b16 %v1037
  %v1103 = vunpack.c.h.b16 %v1037
  %v1104 = vunpack.c.l.b16 %v1038
  %v1105 = vunpack.c.h.b16 %v1038
  %v1106 = vunpack.c.l.b16 %v1039
  %v1107 = vunpack.c.h.b16 %v1039
  %v1108 = vunpack.c.l.b16 %v1040
  %v1109 = vunpack.c.h.b16 %v1040
  %v1110 = vunpack.c.l.b16 %v1041
  %v1111 = vunpack.c.h.b16 %v1041
  %v1112 = vunpack.c.l.b16 %v1042
  %v1113 = vunpack.c.h.b16 %v1042
  %v1114 = vunpack.c.l.b16 %v1043
  %v1115 = vunpack.c.h.b16 %v1043
  %v1116 = vunpack.c.l.b16 %v1044
  %v1117 = vunpack.c.h.b16 %v1044
  %v1118 = vunpack.c.l.b16 %v1045
  %v1119 = vunpack.c.h.b16 %v1045
  %v1120 = vunpack.c.l.b16 %v1046
  %v1121 = vunpack.c.h.b16 %v1046
  %v1122 = vunpack.c.l.b16 %v1047
  %v1123 = vunpack.c.h.b16 %v1047
  %v1124 = vunpack.c.l.b16 %v1048
  %v1125 = vunpack.c.h.b16 %v1048
  %v1126 = vunpack.c.l.b16 %v1049
  %v1127 = vunpack.c.h.b16 %v1049
  %v1128 = vunpack.c.l.b16 %v1050
  %v1129 = vunpack.c.h.b16 %v1050
  %v1130 = vunpack.c.l.b16 %v1051
  %v1131 = vunpack.c.h.b16 %v1051
  %v1132 = vunpack.c.l.b16 %v1052
  %v1133 = vunpack.c.h.b16 %v1052
  %v1134 = vunpack.c.l.b16 %v1053
  %v1135 = vunpack.c.h.b16 %v1053
  %v1136 = vunpack.c.l.b16 %v1054
  %v1137 = vunpack.c.h.b16 %v1054
  %v1138 = vunpack.c.l.b16 %v1055
  %v1139 = vunpack.c.h.b16 %v1055
  %v1140 = vunpack.c.l.b16 %v1056
  %v1141 = vunpack.c.h.b16 %v1056
  %v1142 = vunpack.c.l.b16 %v1057
  %v1143 = vunpack.c.h.b16 %v1057
  %v1144 = vunpack.c.l.b16 %v1058
  %v1145 = vunpack.c.h.b16 %v1058
  %v1146 = vunpack.c.l.b16 %v1059
  %v1147 = vunpack.c.h.b16 %v1059
  %v1148 = vunpack.c.l.b16 %v1060
  %v1149 = vunpack.c.h.b16 %v1060
  %v1150 = vunpack.c.l.b16 %v1061
  %v1151 = vunpack.c.h.b16 %v1061
  %v1152 = vunpack.c.l.b16 %v1062
  %v1153 = vunpack.c.h.b16 %v1062
  %v1154 = vunpack.c.l.b16 %v1063
  %v1155 = vunpack.c.h.b16 %v1063
  %v1156 = vunpack.c.l.b16 %v1064
  %v1157 = vunpack.c.h.b16 %v1064
  %v1158 = vunpack.c.l.b16 %v1065
  %v1159 = vunpack.c.h.b16 %v1065
  %v1160 = vunpack.c.l.b16 %v1066
  %v1161 = vunpack.c.h.b16 %v1066
  %v1162 = vunpack.c.l.b16 %v1067
  %v1163 = vunpack.c.h.b16 %v1067
  %v1164 = vpack.c.b16 %v1100, %v1100
  %v1165 = vpack.c.b16 %v1101, %v1101
  %v1166 = vpack.c.b16 %v1102, %v1102
  %v1167 = vpack.c.b16 %v1103, %v1103
  %v1168 = vpack.c.b16 %v1104, %v1104
  %v1169 = vpack.c.b16 %v1105, %v1105
  %v1170 = vpack.c.b16 %v1106, %v1106
  %v1171 = vpack.c.b16 %v1107, %v1107
  %v1172 = vpack.c.b16 %v1108, %v1108
  %v1173 = vpack.c.b16 %v1109, %v1109
  %v1174 = vpack.c.b16 %v1110, %v1110
  %v1175 = vpack.c.b16 %v1111, %v1111
  %v1176 = vpack.c.b16 %v1112, %v1112
  %v1177 = vpack.c.b16 %v1113, %v1113
  %v1178 = vpack.c.b16 %v1114, %v1114
  %v1179 = vpack.c.b16 %v1115, %v1115
  %v1180 = vpack.c.b16 %v1116, %v1116
  %v1181 = vpack.c.b16 %v1117, %v1117
  %v1182 = vpack.c.b16 %v1118, %v1118
  %v1183 = vpack.c.b16 %v1119, %v1119
  %v1184 = vpack.c.b16 %v1120, %v1120
  %v1185 = vpack.c.b16 %v1121, %v1121
  %v1186 = vpack.c.b16 %v1122, %v1122
  %v1187 = vpack.c.b16 %v1123, %v1123
  %v1188 = vpack.c.b16 %v1124, %v1124
  %v1189 = vpack.c.b16 %v1125, %v1125
  %v1190 = vpack.c.b16 %v1126, %v1126
  %v1191 = vpack.c.b16 %v1127, %v1127
  %v1192 = vpack.c.b16 %v1128, %v1128
  %v1193 = vpack.c.b16 %v1129, %v1129
  %v1194 = vpack.c.b16 %v1130, %v1130
  %v1195 = vpack.c.b16 %v1131, %v1131
  %v1196 = vpack.c.b16 %v1132, %v1132
  %v1197 = vpack.c.b16 %v1133, %v1133
  %v1198 = vpack.c.b16 %v1134, %v1134
  %v1199 = vpack.c.b16 %v1135, %v1135
  %v1200 = vpack.c.b16 %v1136, %v1136
  %v1201 = vpack.c.b16 %v1137, %v1137
  %v1202 = vpack.c.b16 %v1138, %v1138
  %v1203 = vpack.c.b16 %v1139, %v1139
  %v1204 = vpack.c.b16 %v1140, %v1140
  %v1205 = vpack.c.b16 %v1141, %v1141
  %v1206 = vpack.c.b16 %v1142, %v1142
  %v1207 = vpack.c.b16 %v1143, %v1143
  %v1208 = vpack.c.b16 %v1144, %v1144
  %v1209 = vpack.c.b16 %v1145, %v1145
  %v1210 = vpack.c.b16 %v1146, %v1146
  %v1211 = vpack.c.b16 %v1147, %v1147
  %v1212 = vpack.c.b16 %v1148, %v1148
  %v1213 = vpack.c.b16 %v1149, %v1149
  %v1214 = vpack.c.b16 %v1150, %v1150
  %v1215 = vpack.c.b16 %v1151, %v1151
  %v1216 = vpack.c.b16 %v1152, %v1152
  %v1217 = vpack.c.b16 %v1153, %v1153
  %v1218 = vpack.c.b16 %v1154, %v1154
  %v1219 = vpack.c.b16 %v1155, %v1155
  %v1220 = vpack.c.b16 %v1156, %v1156
  %v1221 = vpack.c.b16 %v1157, %v1157
  %v1222 = vpack.c.b16 %v1158, %v1158
  %v1223 = vpack.c.b16 %v1159, %v1159
  %v1224 = vpack.c.b16 %v1160, %v1160
  %v1225 = vpack.c.b16 %v1161, %v1161
  %v1226 = vpack.c.b16 %v1162, %v1162
  %v1227 = vpack.c.b16 %v1163, %v1163
  %vm1228 = vsmask.f32 256
  %vm1229 = vsmask.f32 4368
  %vm1230 = vmor %vm1228, %vm1229
  %v1232 = vshrl.u32 %v1164, 16
  %v1234 = vrot.slane %v1232, 7
  %v1235 = vshll.u32 %v1164, 16
  %v1237 = vor.u32 %v1234, %v1235
  %v1238 = vrot.slane %v1234, 4
  %v1240 = vshrl.u32 %v1165, 16
  %v1242 = vrot.slane %v1240, 7
  %v1243 = vshll.u32 %v1165, 16
  %v1245 = vor.u32 %v1242, %v1243
  %v1246 = vsel %vm1230, %v1238, %v1245
  %v1247 = vrot.slane %v1242, 4
  %v1249 = vshrl.u32 %v1166, 16
  %v1251 = vrot.slane %v1249, 7
  %v1252 = vshll.u32 %v1166, 16
  %v1254 = vor.u32 %v1251, %v1252
  %v1255 = vrot.slane %v1251, 4
  %v1257 = vshrl.u32 %v1167, 16
  %v1259 = vrot.slane %v1257, 7
  %v1260 = vshll.u32 %v1167, 16
  %v1262 = vor.u32 %v1259, %v1260
  %v1263 = vsel %vm1230, %v1255, %v1262
  %v1264 = vrot.slane %v1259, 4
  %v1266 = vshrl.u32 %v1168, 16
  %v1268 = vrot.slane %v1266, 7
  %v1269 = vshll.u32 %v1168, 16
  %v1271 = vor.u32 %v1268, %v1269
  %v1272 = vrot.slane %v1268, 4
  %v1274 = vshrl.u32 %v1169, 16
  %v1276 = vrot.slane %v1274, 7
  %v1277 = vshll.u32 %v1169, 16
  %v1279 = vor.u32 %v1276, %v1277
  %v1280 = vsel %vm1230, %v1272, %v1279
  %v1281 = vrot.slane %v1276, 4
  %v1283 = vshrl.u32 %v1170, 16
  %v1285 = vrot.slane %v1283, 7
  %v1286 = vshll.u32 %v1170, 16
  %v1288 = vor.u32 %v1285, %v1286
  %v1289 = vrot.slane %v1285, 4
  %v1291 = vshrl.u32 %v1171, 16
  %v1293 = vrot.slane %v1291, 7
  %v1294 = vshll.u32 %v1171, 16
  %v1296 = vor.u32 %v1293, %v1294
  %v1297 = vsel %vm1230, %v1289, %v1296
  %v1298 = vrot.slane %v1293, 4
  %v1300 = vshrl.u32 %v1172, 16
  %v1302 = vrot.slane %v1300, 7
  %v1303 = vshll.u32 %v1172, 16
  %v1305 = vor.u32 %v1302, %v1303
  %v1306 = vrot.slane %v1302, 4
  %v1308 = vshrl.u32 %v1173, 16
  %v1310 = vrot.slane %v1308, 7
  %v1311 = vshll.u32 %v1173, 16
  %v1313 = vor.u32 %v1310, %v1311
  %v1314 = vsel %vm1230, %v1306, %v1313
  %v1315 = vrot.slane %v1310, 4
  %v1317 = vshrl.u32 %v1174, 16
  %v1319 = vrot.slane %v1317, 7
  %v1320 = vshll.u32 %v1174, 16
  %v1322 = vor.u32 %v1319, %v1320
  %v1323 = vrot.slane %v1319, 4
  %v1325 = vshrl.u32 %v1175, 16
  %v1327 = vrot.slane %v1325, 7
  %v1328 = vshll.u32 %v1175, 16
  %v1330 = vor.u32 %v1327, %v1328
  %v1331 = vsel %vm1230, %v1323, %v1330
  %v1332 = vrot.slane %v1327, 4
  %v1334 = vshrl.u32 %v1176, 16
  %v1336 = vrot.slane %v1334, 7
  %v1337 = vshll.u32 %v1176, 16
  %v1339 = vor.u32 %v1336, %v1337
  %v1340 = vrot.slane %v1336, 4
  %v1342 = vshrl.u32 %v1177, 16
  %v1344 = vrot.slane %v1342, 7
  %v1345 = vshll.u32 %v1177, 16
  %v1347 = vor.u32 %v1344, %v1345
  %v1348 = vsel %vm1230, %v1340, %v1347
  %v1349 = vrot.slane %v1344, 4
  %v1351 = vshrl.u32 %v1178, 16
  %v1353 = vrot.slane %v1351, 7
  %v1354 = vshll.u32 %v1178, 16
  %v1356 = vor.u32 %v1353, %v1354
  %v1357 = vrot.slane %v1353, 4
  %v1359 = vshrl.u32 %v1179, 16
  %v1361 = vrot.slane %v1359, 7
  %v1362 = vshll.u32 %v1179, 16
  %v1364 = vor.u32 %v1361, %v1362
  %v1365 = vsel %vm1230, %v1357, %v1364
  %v1366 = vrot.slane %v1361, 4
  %v1368 = vshrl.u32 %v1180, 16
  %v1370 = vrot.slane %v1368, 7
  %v1371 = vshll.u32 %v1180, 16
  %v1373 = vor.u32 %v1370, %v1371
  %v1374 = vrot.slane %v1370, 4
  %v1376 = vshrl.u32 %v1181, 16
  %v1378 = vrot.slane %v1376, 7
  %v1379 = vshll.u32 %v1181, 16
  %v1381 = vor.u32 %v1378, %v1379
  %v1382 = vsel %vm1230, %v1374, %v1381
  %v1383 = vrot.slane %v1378, 4
  %v1385 = vshrl.u32 %v1182, 16
  %v1387 = vrot.slane %v1385, 7
  %v1388 = vshll.u32 %v1182, 16
  %v1390 = vor.u32 %v1387, %v1388
  %v1391 = vrot.slane %v1387, 4
  %v1393 = vshrl.u32 %v1183, 16
  %v1395 = vrot.slane %v1393, 7
  %v1396 = vshll.u32 %v1183, 16
  %v1398 = vor.u32 %v1395, %v1396
  %v1399 = vsel %vm1230, %v1391, %v1398
  %v1400 = vrot.slane %v1395, 4
  %v1402 = vshrl.u32 %v1184, 16
  %v1404 = vrot.slane %v1402, 7
  %v1405 = vshll.u32 %v1184, 16
  %v1407 = vor.u32 %v1404, %v1405
  %v1408 = vrot.slane %v1404, 4
  %v1410 = vshrl.u32 %v1185, 16
  %v1412 = vrot.slane %v1410, 7
  %v1413 = vshll.u32 %v1185, 16
  %v1415 = vor.u32 %v1412, %v1413
  %v1416 = vsel %vm1230, %v1408, %v1415
  %v1417 = vrot.slane %v1412, 4
  %v1419 = vshrl.u32 %v1186, 16
  %v1421 = vrot.slane %v1419, 7
  %v1422 = vshll.u32 %v1186, 16
  %v1424 = vor.u32 %v1421, %v1422
  %v1425 = vrot.slane %v1421, 4
  %v1427 = vshrl.u32 %v1187, 16
  %v1429 = vrot.slane %v1427, 7
  %v1430 = vshll.u32 %v1187, 16
  %v1432 = vor.u32 %v1429, %v1430
  %v1433 = vsel %vm1230, %v1425, %v1432
  %v1434 = vrot.slane %v1429, 4
  %v1436 = vshrl.u32 %v1188, 16
  %v1438 = vrot.slane %v1436, 7
  %v1439 = vshll.u32 %v1188, 16
  %v1441 = vor.u32 %v1438, %v1439
  %v1442 = vrot.slane %v1438, 4
  %v1444 = vshrl.u32 %v1189, 16
  %v1446 = vrot.slane %v1444, 7
  %v1447 = vshll.u32 %v1189, 16
  %v1449 = vor.u32 %v1446, %v1447
  %v1450 = vsel %vm1230, %v1442, %v1449
  %v1451 = vrot.slane %v1446, 4
  %v1453 = vshrl.u32 %v1190, 16
  %v1455 = vrot.slane %v1453, 7
  %v1456 = vshll.u32 %v1190, 16
  %v1458 = vor.u32 %v1455, %v1456
  %v1459 = vrot.slane %v1455, 4
  %v1461 = vshrl.u32 %v1191, 16
  %v1463 = vrot.slane %v1461, 7
  %v1464 = vshll.u32 %v1191, 16
  %v1466 = vor.u32 %v1463, %v1464
  %v1467 = vsel %vm1230, %v1459, %v1466
  %v1468 = vrot.slane %v1463, 4
  %v1470 = vshrl.u32 %v1192, 16
  %v1472 = vrot.slane %v1470, 7
  %v1473 = vshll.u32 %v1192, 16
  %v1475 = vor.u32 %v1472, %v1473
  %v1476 = vrot.slane %v1472, 4
  %v1478 = vshrl.u32 %v1193, 16
  %v1480 = vrot.slane %v1478, 7
  %v1481 = vshll.u32 %v1193, 16
  %v1483 = vor.u32 %v1480, %v1481
  %v1484 = vsel %vm1230, %v1476, %v1483
  %v1485 = vrot.slane %v1480, 4
  %v1487 = vshrl.u32 %v1194, 16
  %v1489 = vrot.slane %v1487, 7
  %v1490 = vshll.u32 %v1194, 16
  %v1492 = vor.u32 %v1489, %v1490
  %v1493 = vrot.slane %v1489, 4
  %v1495 = vshrl.u32 %v1195, 16
  %v1497 = vrot.slane %v1495, 7
  %v1498 = vshll.u32 %v1195, 16
  %v1500 = vor.u32 %v1497, %v1498
  %v1501 = vsel %vm1230, %v1493, %v1500
  %v1502 = vrot.slane %v1497, 4
  %v1504 = vshrl.u32 %v1196, 16
  %v1506 = vrot.slane %v1504, 7
  %v1507 = vshll.u32 %v1196, 16
  %v1509 = vor.u32 %v1506, %v1507
  %v1510 = vrot.slane %v1506, 4
  %v1512 = vshrl.u32 %v1197, 16
  %v1514 = vrot.slane %v1512, 7
  %v1515 = vshll.u32 %v1197, 16
  %v1517 = vor.u32 %v1514, %v1515
  %v1518 = vsel %vm1230, %v1510, %v1517
  %v1519 = vrot.slane %v1514, 4
  %v1521 = vshrl.u32 %v1198, 16
  %v1523 = vrot.slane %v1521, 7
  %v1524 = vshll.u32 %v1198, 16
  %v1526 = vor.u32 %v1523, %v1524
  %v1527 = vrot.slane %v1523, 4
  %v1529 = vshrl.u32 %v1199, 16
  %v1531 = vrot.slane %v1529, 7
  %v1532 = vshll.u32 %v1199, 16
  %v1534 = vor.u32 %v1531, %v1532
  %v1535 = vsel %vm1230, %v1527, %v1534
  %v1536 = vrot.slane %v1531, 4
  %v1538 = vshrl.u32 %v1200, 16
  %v1540 = vrot.slane %v1538, 7
  %v1541 = vshll.u32 %v1200, 16
  %v1543 = vor.u32 %v1540, %v1541
  %v1544 = vrot.slane %v1540, 4
  %v1546 = vshrl.u32 %v1201, 16
  %v1548 = vrot.slane %v1546, 7
  %v1549 = vshll.u32 %v1201, 16
  %v1551 = vor.u32 %v1548, %v1549
  %v1552 = vsel %vm1230, %v1544, %v1551
  %v1553 = vrot.slane %v1548, 4
  %v1555 = vshrl.u32 %v1202, 16
  %v1557 = vrot.slane %v1555, 7
  %v1558 = vshll.u32 %v1202, 16
  %v1560 = vor.u32 %v1557, %v1558
  %v1561 = vrot.slane %v1557, 4
  %v1563 = vshrl.u32 %v1203, 16
  %v1565 = vrot.slane %v1563, 7
  %v1566 = vshll.u32 %v1203, 16
  %v1568 = vor.u32 %v1565, %v1566
  %v1569 = vsel %vm1230, %v1561, %v1568
  %v1570 = vrot.slane %v1565, 4
  %v1572 = vshrl.u32 %v1204, 16
  %v1574 = vrot.slane %v1572, 7
  %v1575 = vshll.u32 %v1204, 16
  %v1577 = vor.u32 %v1574, %v1575
  %v1578 = vrot.slane %v1574, 4
  %v1580 = vshrl.u32 %v1205, 16
  %v1582 = vrot.slane %v1580, 7
  %v1583 = vshll.u32 %v1205, 16
  %v1585 = vor.u32 %v1582, %v1583
  %v1586 = vsel %vm1230, %v1578, %v1585
  %v1587 = vrot.slane %v1582, 4
  %v1589 = vshrl.u32 %v1206, 16
  %v1591 = vrot.slane %v1589, 7
  %v1592 = vshll.u32 %v1206, 16
  %v1594 = vor.u32 %v1591, %v1592
  %v1595 = vrot.slane %v1591, 4
  %v1597 = vshrl.u32 %v1207, 16
  %v1599 = vrot.slane %v1597, 7
  %v1600 = vshll.u32 %v1207, 16
  %v1602 = vor.u32 %v1599, %v1600
  %v1603 = vsel %vm1230, %v1595, %v1602
  %v1604 = vrot.slane %v1599, 4
  %v1606 = vshrl.u32 %v1208, 16
  %v1608 = vrot.slane %v1606, 7
  %v1609 = vshll.u32 %v1208, 16
  %v1611 = vor.u32 %v1608, %v1609
  %v1612 = vrot.slane %v1608, 4
  %v1614 = vshrl.u32 %v1209, 16
  %v1616 = vrot.slane %v1614, 7
  %v1617 = vshll.u32 %v1209, 16
  %v1619 = vor.u32 %v1616, %v1617
  %v1620 = vsel %vm1230, %v1612, %v1619
  %v1621 = vrot.slane %v1616, 4
  %v1623 = vshrl.u32 %v1210, 16
  %v1625 = vrot.slane %v1623, 7
  %v1626 = vshll.u32 %v1210, 16
  %v1628 = vor.u32 %v1625, %v1626
  %v1629 = vrot.slane %v1625, 4
  %v1631 = vshrl.u32 %v1211, 16
  %v1633 = vrot.slane %v1631, 7
  %v1634 = vshll.u32 %v1211, 16
  %v1636 = vor.u32 %v1633, %v1634
  %v1637 = vsel %vm1230, %v1629, %v1636
  %v1638 = vrot.slane %v1633, 4
  %v1640 = vshrl.u32 %v1212, 16
  %v1642 = vrot.slane %v1640, 7
  %v1643 = vshll.u32 %v1212, 16
  %v1645 = vor.u32 %v1642, %v1643
  %v1646 = vrot.slane %v1642, 4
  %v1648 = vshrl.u32 %v1213, 16
  %v1650 = vrot.slane %v1648, 7
  %v1651 = vshll.u32 %v1213, 16
  %v1653 = vor.u32 %v1650, %v1651
  %v1654 = vsel %vm1230, %v1646, %v1653
  %v1655 = vrot.slane %v1650, 4
  %v1657 = vshrl.u32 %v1214, 16
  %v1659 = vrot.slane %v1657, 7
  %v1660 = vshll.u32 %v1214, 16
  %v1662 = vor.u32 %v1659, %v1660
  %v1663 = vrot.slane %v1659, 4
  %v1665 = vshrl.u32 %v1215, 16
  %v1667 = vrot.slane %v1665, 7
  %v1668 = vshll.u32 %v1215, 16
  %v1670 = vor.u32 %v1667, %v1668
  %v1671 = vsel %vm1230, %v1663, %v1670
  %v1672 = vrot.slane %v1667, 4
  %v1674 = vshrl.u32 %v1216, 16
  %v1676 = vrot.slane %v1674, 7
  %v1677 = vshll.u32 %v1216, 16
  %v1679 = vor.u32 %v1676, %v1677
  %v1680 = vrot.slane %v1676, 4
  %v1682 = vshrl.u32 %v1217, 16
  %v1684 = vrot.slane %v1682, 7
  %v1685 = vshll.u32 %v1217, 16
  %v1687 = vor.u32 %v1684, %v1685
  %v1688 = vsel %vm1230, %v1680, %v1687
  %v1689 = vrot.slane %v1684, 4
  %v1691 = vshrl.u32 %v1218, 16
  %v1693 = vrot.slane %v1691, 7
  %v1694 = vshll.u32 %v1218, 16
  %v1696 = vor.u32 %v1693, %v1694
  %v1697 = vrot.slane %v1693, 4
  %v1699 = vshrl.u32 %v1219, 16
  %v1701 = vrot.slane %v1699, 7
  %v1702 = vshll.u32 %v1219, 16
  %v1704 = vor.u32 %v1701, %v1702
  %v1705 = vsel %vm1230, %v1697, %v1704
  %v1706 = vrot.slane %v1701, 4
  %v1708 = vshrl.u32 %v1220, 16
  %v1710 = vrot.slane %v1708, 7
  %v1711 = vshll.u32 %v1220, 16
  %v1713 = vor.u32 %v1710, %v1711
  %v1714 = vrot.slane %v1710, 4
  %v1716 = vshrl.u32 %v1221, 16
  %v1718 = vrot.slane %v1716, 7
  %v1719 = vshll.u32 %v1221, 16
  %v1721 = vor.u32 %v1718, %v1719
  %v1722 = vsel %vm1230, %v1714, %v1721
  %v1723 = vrot.slane %v1718, 4
  %v1725 = vshrl.u32 %v1222, 16
  %v1727 = vrot.slane %v1725, 7
  %v1728 = vshll.u32 %v1222, 16
  %v1730 = vor.u32 %v1727, %v1728
  %v1731 = vrot.slane %v1727, 4
  %v1733 = vshrl.u32 %v1223, 16
  %v1735 = vrot.slane %v1733, 7
  %v1736 = vshll.u32 %v1223, 16
  %v1738 = vor.u32 %v1735, %v1736
  %v1739 = vsel %vm1230, %v1731, %v1738
  %v1740 = vrot.slane %v1735, 4
  %v1742 = vshrl.u32 %v1224, 16
  %v1744 = vrot.slane %v1742, 7
  %v1745 = vshll.u32 %v1224, 16
  %v1747 = vor.u32 %v1744, %v1745
  %v1748 = vrot.slane %v1744, 4
  %v1750 = vshrl.u32 %v1225, 16
  %v1752 = vrot.slane %v1750, 7
  %v1753 = vshll.u32 %v1225, 16
  %v1755 = vor.u32 %v1752, %v1753
  %v1756 = vsel %vm1230, %v1748, %v1755
  %v1757 = vrot.slane %v1752, 4
  %v1759 = vshrl.u32 %v1226, 16
  %v1761 = vrot.slane %v1759, 7
  %v1762 = vshll.u32 %v1226, 16
  %v1764 = vor.u32 %v1761, %v1762
  %v1765 = vrot.slane %v1761, 4
  %v1767 = vshrl.u32 %v1227, 16
  %v1769 = vrot.slane %v1767, 7
  %v1770 = vshll.u32 %v1227, 16
  %v1772 = vor.u32 %v1769, %v1770
  %v1773 = vsel %vm1230, %v1765, %v1772
  %v1774 = vrot.slane %v1769, 4
  %s1871 = scalar_lea.vmem [#allocation2], 12
  %vm1872 = vcmask 125952
  %vm1873 = vsmask.f32 7938
  %vm1874 = vmand %vm1872, %vm1873
  %v1875 = vld [vmem:[%s1871] sm:$0xf]
  %v1876 = vsel %vm1874, %v1237, %v1875
  %1877 = vst [vmem:[%s1871] sm:$0xf] %v1876
  %1878 = vst.msk [vmem:[%s1871 + $0x4] sm:$0xf] %vm926, %v1246
  %vm1879 = vcmask 122880
  %vm1880 = vmand %vm1879, %vm1228
  %v1881 = vld [vmem:[%s1871 + $0x8] sm:$0x1]
  %v1882 = vsel %vm1880, %v1247, %v1881
  %1883 = vst [vmem:[%s1871 + $0x8] sm:$0x1] %v1882
  %v1884 = vld [vmem:[%s1871 + $0xc] sm:$0xf]
  %v1885 = vsel %vm1874, %v1254, %v1884
  %1886 = vst [vmem:[%s1871 + $0xc] sm:$0xf] %v1885
  %1887 = vst.msk [vmem:[%s1871 + $0x10] sm:$0xf] %vm926, %v1263
  %v1888 = vld [vmem:[%s1871 + $0x14] sm:$0x1]
  %v1889 = vsel %vm1880, %v1264, %v1888
  %1890 = vst [vmem:[%s1871 + $0x14] sm:$0x1] %v1889
  %v1891 = vld [vmem:[%s1871 + $0x18] sm:$0xf]
  %v1892 = vsel %vm1874, %v1271, %v1891
  %1893 = vst [vmem:[%s1871 + $0x18] sm:$0xf] %v1892
  %1894 = vst.msk [vmem:[%s1871 + $0x1c] sm:$0xf] %vm926, %v1280
  %v1895 = vld [vmem:[%s1871 + $0x20] sm:$0x1]
  %v1896 = vsel %vm1880, %v1281, %v1895
  %1897 = vst [vmem:[%s1871 + $0x20] sm:$0x1] %v1896
  %v1898 = vld [vmem:[%s1871 + $0x24] sm:$0xf]
  %v1899 = vsel %vm1874, %v1288, %v1898
  %1900 = vst [vmem:[%s1871 + $0x24] sm:$0xf] %v1899
  %1901 = vst.msk [vmem:[%s1871 + $0x28] sm:$0xf] %vm926, %v1297
  %v1902 = vld [vmem:[%s1871 + $0x2c] sm:$0x1]
  %v1903 = vsel %vm1880, %v1298, %v1902
  %1904 = vst [vmem:[%s1871 + $0x2c] sm:$0x1] %v1903
  %v1905 = vld [vmem:[%s1871 + $0x30] sm:$0xf]
  %v1906 = vsel %vm1874, %v1305, %v1905
  %1907 = vst [vmem:[%s1871 + $0x30] sm:$0xf] %v1906
  %1908 = vst.msk [vmem:[%s1871 + $0x34] sm:$0xf] %vm926, %v1314
  %v1909 = vld [vmem:[%s1871 + $0x38] sm:$0x1]
  %v1910 = vsel %vm1880, %v1315, %v1909
  %1911 = vst [vmem:[%s1871 + $0x38] sm:$0x1] %v1910
  %v1912 = vld [vmem:[%s1871 + $0x3c] sm:$0xf]
  %v1913 = vsel %vm1874, %v1322, %v1912
  %1914 = vst [vmem:[%s1871 + $0x3c] sm:$0xf] %v1913
  %1915 = vst.msk [vmem:[%s1871 + $0x40] sm:$0xf] %vm926, %v1331
  %v1916 = vld [vmem:[%s1871 + $0x44] sm:$0x1]
  %v1917 = vsel %vm1880, %v1332, %v1916
  %1918 = vst [vmem:[%s1871 + $0x44] sm:$0x1] %v1917
  %v1919 = vld [vmem:[%s1871 + $0x48] sm:$0xf]
  %v1920 = vsel %vm1874, %v1339, %v1919
  %1921 = vst [vmem:[%s1871 + $0x48] sm:$0xf] %v1920
  %1922 = vst.msk [vmem:[%s1871 + $0x4c] sm:$0xf] %vm926, %v1348
  %v1923 = vld [vmem:[%s1871 + $0x50] sm:$0x1]
  %v1924 = vsel %vm1880, %v1349, %v1923
  %1925 = vst [vmem:[%s1871 + $0x50] sm:$0x1] %v1924
  %v1926 = vld [vmem:[%s1871 + $0x54] sm:$0xf]
  %v1927 = vsel %vm1874, %v1356, %v1926
  %1928 = vst [vmem:[%s1871 + $0x54] sm:$0xf] %v1927
  %1929 = vst.msk [vmem:[%s1871 + $0x58] sm:$0xf] %vm926, %v1365
  %v1930 = vld [vmem:[%s1871 + $0x5c] sm:$0x1]
  %v1931 = vsel %vm1880, %v1366, %v1930
  %1932 = vst [vmem:[%s1871 + $0x5c] sm:$0x1] %v1931
  %v1933 = vld [vmem:[%s1871 + $0x60] sm:$0xf]
  %v1934 = vsel %vm1874, %v1373, %v1933
  %1935 = vst [vmem:[%s1871 + $0x60] sm:$0xf] %v1934
  %1936 = vst.msk [vmem:[%s1871 + $0x64] sm:$0xf] %vm926, %v1382
  %v1937 = vld [vmem:[%s1871 + $0x68] sm:$0x1]
  %v1938 = vsel %vm1880, %v1383, %v1937
  %1939 = vst [vmem:[%s1871 + $0x68] sm:$0x1] %v1938
  %v1940 = vld [vmem:[%s1871 + $0x6c] sm:$0xf]
  %v1941 = vsel %vm1874, %v1390, %v1940
  %1942 = vst [vmem:[%s1871 + $0x6c] sm:$0xf] %v1941
  %1943 = vst.msk [vmem:[%s1871 + $0x70] sm:$0xf] %vm926, %v1399
  %v1944 = vld [vmem:[%s1871 + $0x74] sm:$0x1]
  %v1945 = vsel %vm1880, %v1400, %v1944
  %1946 = vst [vmem:[%s1871 + $0x74] sm:$0x1] %v1945
  %v1947 = vld [vmem:[%s1871 + $0x78] sm:$0xf]
  %v1948 = vsel %vm1874, %v1407, %v1947
  %1949 = vst [vmem:[%s1871 + $0x78] sm:$0xf] %v1948
  %1950 = vst.msk [vmem:[%s1871 + $0x7c] sm:$0xf] %vm926, %v1416
  %v1951 = vld [vmem:[%s1871 + $0x80] sm:$0x1]
  %v1952 = vsel %vm1880, %v1417, %v1951
  %1953 = vst [vmem:[%s1871 + $0x80] sm:$0x1] %v1952
  %v1954 = vld [vmem:[%s1871 + $0x84] sm:$0xf]
  %v1955 = vsel %vm1874, %v1424, %v1954
  %1956 = vst [vmem:[%s1871 + $0x84] sm:$0xf] %v1955
  %1957 = vst.msk [vmem:[%s1871 + $0x88] sm:$0xf] %vm926, %v1433
  %v1958 = vld [vmem:[%s1871 + $0x8c] sm:$0x1]
  %v1959 = vsel %vm1880, %v1434, %v1958
  %1960 = vst [vmem:[%s1871 + $0x8c] sm:$0x1] %v1959
  %v1961 = vld [vmem:[%s1871 + $0x90] sm:$0xf]
  %v1962 = vsel %vm1874, %v1441, %v1961
  %1963 = vst [vmem:[%s1871 + $0x90] sm:$0xf] %v1962
  %1964 = vst.msk [vmem:[%s1871 + $0x94] sm:$0xf] %vm926, %v1450
  %v1965 = vld [vmem:[%s1871 + $0x98] sm:$0x1]
  %v1966 = vsel %vm1880, %v1451, %v1965
  %1967 = vst [vmem:[%s1871 + $0x98] sm:$0x1] %v1966
  %v1968 = vld [vmem:[%s1871 + $0x9c] sm:$0xf]
  %v1969 = vsel %vm1874, %v1458, %v1968
  %1970 = vst [vmem:[%s1871 + $0x9c] sm:$0xf] %v1969
  %1971 = vst.msk [vmem:[%s1871 + $0xa0] sm:$0xf] %vm926, %v1467
  %v1972 = vld [vmem:[%s1871 + $0xa4] sm:$0x1]
  %v1973 = vsel %vm1880, %v1468, %v1972
  %1974 = vst [vmem:[%s1871 + $0xa4] sm:$0x1] %v1973
  %v1975 = vld [vmem:[%s1871 + $0xa8] sm:$0xf]
  %v1976 = vsel %vm1874, %v1475, %v1975
  %1977 = vst [vmem:[%s1871 + $0xa8] sm:$0xf] %v1976
  %1978 = vst.msk [vmem:[%s1871 + $0xac] sm:$0xf] %vm926, %v1484
  %v1979 = vld [vmem:[%s1871 + $0xb0] sm:$0x1]
  %v1980 = vsel %vm1880, %v1485, %v1979
  %1981 = vst [vmem:[%s1871 + $0xb0] sm:$0x1] %v1980
  %v1982 = vld [vmem:[%s1871 + $0xb4] sm:$0xf]
  %v1983 = vsel %vm1874, %v1492, %v1982
  %1984 = vst [vmem:[%s1871 + $0xb4] sm:$0xf] %v1983
  %1985 = vst.msk [vmem:[%s1871 + $0xb8] sm:$0xf] %vm926, %v1501
  %v1986 = vld [vmem:[%s1871 + $0xbc] sm:$0x1]
  %v1987 = vsel %vm1880, %v1502, %v1986
  %1988 = vst [vmem:[%s1871 + $0xbc] sm:$0x1] %v1987
  %v1989 = vld [vmem:[%s1871 + $0xd8] sm:$0xf]
  %v1990 = vsel %vm1874, %v1509, %v1989
  %1991 = vst [vmem:[%s1871 + $0xd8] sm:$0xf] %v1990
  %1992 = vst.msk [vmem:[%s1871 + $0xdc] sm:$0xf] %vm926, %v1518
  %v1993 = vld [vmem:[%s1871 + $0xe0] sm:$0x1]
  %v1994 = vsel %vm1880, %v1519, %v1993
  %1995 = vst [vmem:[%s1871 + $0xe0] sm:$0x1] %v1994
  %v1996 = vld [vmem:[%s1871 + $0xe4] sm:$0xf]
  %v1997 = vsel %vm1874, %v1526, %v1996
  %1998 = vst [vmem:[%s1871 + $0xe4] sm:$0xf] %v1997
  %1999 = vst.msk [vmem:[%s1871 + $0xe8] sm:$0xf] %vm926, %v1535
  %v2000 = vld [vmem:[%s1871 + $0xec] sm:$0x1]
  %v2001 = vsel %vm1880, %v1536, %v2000
  %2002 = vst [vmem:[%s1871 + $0xec] sm:$0x1] %v2001
  %v2003 = vld [vmem:[%s1871 + $0xf0] sm:$0xf]
  %v2004 = vsel %vm1874, %v1543, %v2003
  %2005 = vst [vmem:[%s1871 + $0xf0] sm:$0xf] %v2004
  %2006 = vst.msk [vmem:[%s1871 + $0xf4] sm:$0xf] %vm926, %v1552
  %v2007 = vld [vmem:[%s1871 + $0xf8] sm:$0x1]
  %v2008 = vsel %vm1880, %v1553, %v2007
  %2009 = vst [vmem:[%s1871 + $0xf8] sm:$0x1] %v2008
  %v2010 = vld [vmem:[%s1871 + $0xfc] sm:$0xf]
  %v2011 = vsel %vm1874, %v1560, %v2010
  %2012 = vst [vmem:[%s1871 + $0xfc] sm:$0xf] %v2011
  %2013 = vst.msk [vmem:[%s1871 + $0x100] sm:$0xf] %vm926, %v1569
  %v2014 = vld [vmem:[%s1871 + $0x104] sm:$0x1]
  %v2015 = vsel %vm1880, %v1570, %v2014
  %2016 = vst [vmem:[%s1871 + $0x104] sm:$0x1] %v2015
  %v2017 = vld [vmem:[%s1871 + $0x108] sm:$0xf]
  %v2018 = vsel %vm1874, %v1577, %v2017
  %2019 = vst [vmem:[%s1871 + $0x108] sm:$0xf] %v2018
  %2020 = vst.msk [vmem:[%s1871 + $0x10c] sm:$0xf] %vm926, %v1586
  %v2021 = vld [vmem:[%s1871 + $0x110] sm:$0x1]
  %v2022 = vsel %vm1880, %v1587, %v2021
  %2023 = vst [vmem:[%s1871 + $0x110] sm:$0x1] %v2022
  %v2024 = vld [vmem:[%s1871 + $0x114] sm:$0xf]
  %v2025 = vsel %vm1874, %v1594, %v2024
  %2026 = vst [vmem:[%s1871 + $0x114] sm:$0xf] %v2025
  %2027 = vst.msk [vmem:[%s1871 + $0x118] sm:$0xf] %vm926, %v1603
  %v2028 = vld [vmem:[%s1871 + $0x11c] sm:$0x1]
  %v2029 = vsel %vm1880, %v1604, %v2028
  %2030 = vst [vmem:[%s1871 + $0x11c] sm:$0x1] %v2029
  %v2031 = vld [vmem:[%s1871 + $0x120] sm:$0xf]
  %v2032 = vsel %vm1874, %v1611, %v2031
  %2033 = vst [vmem:[%s1871 + $0x120] sm:$0xf] %v2032
  %2034 = vst.msk [vmem:[%s1871 + $0x124] sm:$0xf] %vm926, %v1620
  %v2035 = vld [vmem:[%s1871 + $0x128] sm:$0x1]
  %v2036 = vsel %vm1880, %v1621, %v2035
  %2037 = vst [vmem:[%s1871 + $0x128] sm:$0x1] %v2036
  %v2038 = vld [vmem:[%s1871 + $0x12c] sm:$0xf]
  %v2039 = vsel %vm1874, %v1628, %v2038
  %2040 = vst [vmem:[%s1871 + $0x12c] sm:$0xf] %v2039
  %2041 = vst.msk [vmem:[%s1871 + $0x130] sm:$0xf] %vm926, %v1637
  %v2042 = vld [vmem:[%s1871 + $0x134] sm:$0x1]
  %v2043 = vsel %vm1880, %v1638, %v2042
  %2044 = vst [vmem:[%s1871 + $0x134] sm:$0x1] %v2043
  %v2045 = vld [vmem:[%s1871 + $0x138] sm:$0xf]
  %v2046 = vsel %vm1874, %v1645, %v2045
  %2047 = vst [vmem:[%s1871 + $0x138] sm:$0xf] %v2046
  %2048 = vst.msk [vmem:[%s1871 + $0x13c] sm:$0xf] %vm926, %v1654
  %v2049 = vld [vmem:[%s1871 + $0x140] sm:$0x1]
  %v2050 = vsel %vm1880, %v1655, %v2049
  %2051 = vst [vmem:[%s1871 + $0x140] sm:$0x1] %v2050
  %v2052 = vld [vmem:[%s1871 + $0x144] sm:$0xf]
  %v2053 = vsel %vm1874, %v1662, %v2052
  %2054 = vst [vmem:[%s1871 + $0x144] sm:$0xf] %v2053
  %2055 = vst.msk [vmem:[%s1871 + $0x148] sm:$0xf] %vm926, %v1671
  %v2056 = vld [vmem:[%s1871 + $0x14c] sm:$0x1]
  %v2057 = vsel %vm1880, %v1672, %v2056
  %2058 = vst [vmem:[%s1871 + $0x14c] sm:$0x1] %v2057
  %v2059 = vld [vmem:[%s1871 + $0x150] sm:$0xf]
  %v2060 = vsel %vm1874, %v1679, %v2059
  %2061 = vst [vmem:[%s1871 + $0x150] sm:$0xf] %v2060
  %2062 = vst.msk [vmem:[%s1871 + $0x154] sm:$0xf] %vm926, %v1688
  %v2063 = vld [vmem:[%s1871 + $0x158] sm:$0x1]
  %v2064 = vsel %vm1880, %v1689, %v2063
  %2065 = vst [vmem:[%s1871 + $0x158] sm:$0x1] %v2064
  %v2066 = vld [vmem:[%s1871 + $0x15c] sm:$0xf]
  %v2067 = vsel %vm1874, %v1696, %v2066
  %2068 = vst [vmem:[%s1871 + $0x15c] sm:$0xf] %v2067
  %2069 = vst.msk [vmem:[%s1871 + $0x160] sm:$0xf] %vm926, %v1705
  %v2070 = vld [vmem:[%s1871 + $0x164] sm:$0x1]
  %v2071 = vsel %vm1880, %v1706, %v2070
  %2072 = vst [vmem:[%s1871 + $0x164] sm:$0x1] %v2071
  %v2073 = vld [vmem:[%s1871 + $0x168] sm:$0xf]
  %v2074 = vsel %vm1874, %v1713, %v2073
  %2075 = vst [vmem:[%s1871 + $0x168] sm:$0xf] %v2074
  %2076 = vst.msk [vmem:[%s1871 + $0x16c] sm:$0xf] %vm926, %v1722
  %v2077 = vld [vmem:[%s1871 + $0x170] sm:$0x1]
  %v2078 = vsel %vm1880, %v1723, %v2077
  %2079 = vst [vmem:[%s1871 + $0x170] sm:$0x1] %v2078
  %v2080 = vld [vmem:[%s1871 + $0x174] sm:$0xf]
  %v2081 = vsel %vm1874, %v1730, %v2080
  %2082 = vst [vmem:[%s1871 + $0x174] sm:$0xf] %v2081
  %2083 = vst.msk [vmem:[%s1871 + $0x178] sm:$0xf] %vm926, %v1739
  %v2084 = vld [vmem:[%s1871 + $0x17c] sm:$0x1]
  %v2085 = vsel %vm1880, %v1740, %v2084
  %2086 = vst [vmem:[%s1871 + $0x17c] sm:$0x1] %v2085
  %v2087 = vld [vmem:[%s1871 + $0x180] sm:$0xf]
  %v2088 = vsel %vm1874, %v1747, %v2087
  %2089 = vst [vmem:[%s1871 + $0x180] sm:$0xf] %v2088
  %2090 = vst.msk [vmem:[%s1871 + $0x184] sm:$0xf] %vm926, %v1756
  %v2091 = vld [vmem:[%s1871 + $0x188] sm:$0x1]
  %v2092 = vsel %vm1880, %v1757, %v2091
  %2093 = vst [vmem:[%s1871 + $0x188] sm:$0x1] %v2092
  %v2094 = vld [vmem:[%s1871 + $0x18c] sm:$0xf]
  %v2095 = vsel %vm1874, %v1764, %v2094
  %2096 = vst [vmem:[%s1871 + $0x18c] sm:$0xf] %v2095
  %2097 = vst.msk [vmem:[%s1871 + $0x190] sm:$0xf] %vm926, %v1773
  %v2098 = vld [vmem:[%s1871 + $0x194] sm:$0x1]
  %v2099 = vsel %vm1880, %v1774, %v2098
  %2100 = vst [vmem:[%s1871 + $0x194] sm:$0x1] %v2099
  %v2101 = vld [vmem:[#allocation2] sm:$0xf]
  %v2102 = vld [vmem:[#allocation2 + $0x4] sm:$0xf]
  %v2103 = vld [vmem:[#allocation2 + $0xc] sm:$0xf]
  %v2104 = vld [vmem:[#allocation2 + $0x10] sm:$0xf]
  %v2105 = vld [vmem:[#allocation2 + $0x18] sm:$0xf]
  %v2106 = vld [vmem:[#allocation2 + $0x1c] sm:$0xf]
  %v2107 = vld [vmem:[#allocation2 + $0x24] sm:$0xf]
  %v2108 = vld [vmem:[#allocation2 + $0x28] sm:$0xf]
  %v2109 = vld [vmem:[#allocation2 + $0x30] sm:$0xf]
  %v2110 = vld [vmem:[#allocation2 + $0x34] sm:$0xf]
  %v2111 = vld [vmem:[#allocation2 + $0x3c] sm:$0xf]
  %v2112 = vld [vmem:[#allocation2 + $0x40] sm:$0xf]
  %v2113 = vld [vmem:[#allocation2 + $0x48] sm:$0xf]
  %v2114 = vld [vmem:[#allocation2 + $0x4c] sm:$0xf]
  %v2115 = vld [vmem:[#allocation2 + $0x54] sm:$0xf]
  %v2116 = vld [vmem:[#allocation2 + $0x58] sm:$0xf]
  %v2117 = vld [vmem:[#allocation2 + $0x60] sm:$0xf]
  %v2118 = vld [vmem:[#allocation2 + $0x64] sm:$0xf]
  %v2119 = vld [vmem:[#allocation2 + $0x6c] sm:$0xf]
  %v2120 = vld [vmem:[#allocation2 + $0x70] sm:$0xf]
  %v2121 = vld [vmem:[#allocation2 + $0x78] sm:$0xf]
  %v2122 = vld [vmem:[#allocation2 + $0x7c] sm:$0xf]
  %v2123 = vld [vmem:[#allocation2 + $0x84] sm:$0xf]
  %v2124 = vld [vmem:[#allocation2 + $0x88] sm:$0xf]
  %v2125 = vld [vmem:[#allocation2 + $0x90] sm:$0xf]
  %v2126 = vld [vmem:[#allocation2 + $0x94] sm:$0xf]
  %v2127 = vld [vmem:[#allocation2 + $0x9c] sm:$0xf]
  %v2128 = vld [vmem:[#allocation2 + $0xa0] sm:$0xf]
  %v2129 = vld [vmem:[#allocation2 + $0xa8] sm:$0xf]
  %v2130 = vld [vmem:[#allocation2 + $0xac] sm:$0xf]
  %v2131 = vld [vmem:[#allocation2 + $0xb4] sm:$0xf]
  %v2132 = vld [vmem:[#allocation2 + $0xb8] sm:$0xf]
  %v2133 = vld [vmem:[#allocation2 + $0xd8] sm:$0xf]
  %v2134 = vld [vmem:[#allocation2 + $0xdc] sm:$0xf]
  %v2135 = vld [vmem:[#allocation2 + $0xe4] sm:$0xf]
  %v2136 = vld [vmem:[#allocation2 + $0xe8] sm:$0xf]
  %v2137 = vld [vmem:[#allocation2 + $0xf0] sm:$0xf]
  %v2138 = vld [vmem:[#allocation2 + $0xf4] sm:$0xf]
  %v2139 = vld [vmem:[#allocation2 + $0xfc] sm:$0xf]
  %v2140 = vld [vmem:[#allocation2 + $0x100] sm:$0xf]
  %v2141 = vld [vmem:[#allocation2 + $0x108] sm:$0xf]
  %v2142 = vld [vmem:[#allocation2 + $0x10c] sm:$0xf]
  %v2143 = vld [vmem:[#allocation2 + $0x114] sm:$0xf]
  %v2144 = vld [vmem:[#allocation2 + $0x118] sm:$0xf]
  %v2145 = vld [vmem:[#allocation2 + $0x120] sm:$0xf]
  %v2146 = vld [vmem:[#allocation2 + $0x124] sm:$0xf]
  %v2147 = vld [vmem:[#allocation2 + $0x12c] sm:$0xf]
  %v2148 = vld [vmem:[#allocation2 + $0x130] sm:$0xf]
  %v2149 = vld [vmem:[#allocation2 + $0x138] sm:$0xf]
  %v2150 = vld [vmem:[#allocation2 + $0x13c] sm:$0xf]
  %v2151 = vld [vmem:[#allocation2 + $0x144] sm:$0xf]
  %v2152 = vld [vmem:[#allocation2 + $0x148] sm:$0xf]
  %v2153 = vld [vmem:[#allocation2 + $0x150] sm:$0xf]
  %v2154 = vld [vmem:[#allocation2 + $0x154] sm:$0xf]
  %v2155 = vld [vmem:[#allocation2 + $0x15c] sm:$0xf]
  %v2156 = vld [vmem:[#allocation2 + $0x160] sm:$0xf]
  %v2157 = vld [vmem:[#allocation2 + $0x168] sm:$0xf]
  %v2158 = vld [vmem:[#allocation2 + $0x16c] sm:$0xf]
  %v2159 = vld [vmem:[#allocation2 + $0x174] sm:$0xf]
  %v2160 = vld [vmem:[#allocation2 + $0x178] sm:$0xf]
  %v2161 = vld [vmem:[#allocation2 + $0x180] sm:$0xf]
  %v2162 = vld [vmem:[#allocation2 + $0x184] sm:$0xf]
  %v2163 = vld [vmem:[#allocation2 + $0x18c] sm:$0xf]
  %v2164 = vld [vmem:[#allocation2 + $0x190] sm:$0xf]
  %v2165 = vld [vmem:[#allocation2 + $0x8] sm:$0x1]
  %v2166 = vld [vmem:[#allocation2 + $0x14] sm:$0x1]
  %v2167 = vld [vmem:[#allocation2 + $0x20] sm:$0x1]
  %v2168 = vld [vmem:[#allocation2 + $0x2c] sm:$0x1]
  %v2169 = vld [vmem:[#allocation2 + $0x38] sm:$0x1]
  %v2170 = vld [vmem:[#allocation2 + $0x44] sm:$0x1]
  %v2171 = vld [vmem:[#allocation2 + $0x50] sm:$0x1]
  %v2172 = vld [vmem:[#allocation2 + $0x5c] sm:$0x1]
  %v2173 = vld [vmem:[#allocation2 + $0x68] sm:$0x1]
  %v2174 = vld [vmem:[#allocation2 + $0x74] sm:$0x1]
  %v2175 = vld [vmem:[#allocation2 + $0x80] sm:$0x1]
  %v2176 = vld [vmem:[#allocation2 + $0x8c] sm:$0x1]
  %v2177 = vld [vmem:[#allocation2 + $0x98] sm:$0x1]
  %v2178 = vld [vmem:[#allocation2 + $0xa4] sm:$0x1]
  %v2179 = vld [vmem:[#allocation2 + $0xb0] sm:$0x1]
  %v2180 = vld [vmem:[#allocation2 + $0xbc] sm:$0x1]
  %v2181 = vld [vmem:[#allocation2 + $0xe0] sm:$0x1]
  %v2182 = vld [vmem:[#allocation2 + $0xec] sm:$0x1]
  %v2183 = vld [vmem:[#allocation2 + $0xf8] sm:$0x1]
  %v2184 = vld [vmem:[#allocation2 + $0x104] sm:$0x1]
  %v2185 = vld [vmem:[#allocation2 + $0x110] sm:$0x1]
  %v2186 = vld [vmem:[#allocation2 + $0x11c] sm:$0x1]
  %v2187 = vld [vmem:[#allocation2 + $0x128] sm:$0x1]
  %v2188 = vld [vmem:[#allocation2 + $0x134] sm:$0x1]
  %v2189 = vld [vmem:[#allocation2 + $0x140] sm:$0x1]
  %v2190 = vld [vmem:[#allocation2 + $0x14c] sm:$0x1]
  %v2191 = vld [vmem:[#allocation2 + $0x158] sm:$0x1]
  %v2192 = vld [vmem:[#allocation2 + $0x164] sm:$0x1]
  %v2193 = vld [vmem:[#allocation2 + $0x170] sm:$0x1]
  %v2194 = vld [vmem:[#allocation2 + $0x17c] sm:$0x1]
  %v2195 = vld [vmem:[#allocation2 + $0x188] sm:$0x1]
  %v2196 = vld [vmem:[#allocation2 + $0x194] sm:$0x1]
  %v2197 = vld [vmem:[#allocation2] sm:$0xe]
  %v2198 = vld [vmem:[#allocation2 + $0xc] sm:$0xe]
  %v2199 = vld [vmem:[#allocation2 + $0x18] sm:$0xe]
  %v2200 = vld [vmem:[#allocation2 + $0x24] sm:$0xe]
  %v2201 = vld [vmem:[#allocation2 + $0x30] sm:$0xe]
  %v2202 = vld [vmem:[#allocation2 + $0x3c] sm:$0xe]
  %v2203 = vld [vmem:[#allocation2 + $0x48] sm:$0xe]
  %v2204 = vld [vmem:[#allocation2 + $0x54] sm:$0xe]
  %v2205 = vld [vmem:[#allocation2 + $0x60] sm:$0xe]
  %v2206 = vld [vmem:[#allocation2 + $0x6c] sm:$0xe]
  %v2207 = vld [vmem:[#allocation2 + $0x78] sm:$0xe]
  %v2208 = vld [vmem:[#allocation2 + $0x84] sm:$0xe]
  %v2209 = vld [vmem:[#allocation2 + $0x90] sm:$0xe]
  %v2210 = vld [vmem:[#allocation2 + $0x9c] sm:$0xe]
  %v2211 = vld [vmem:[#allocation2 + $0xa8] sm:$0xe]
  %v2212 = vld [vmem:[#allocation2 + $0xb4] sm:$0xe]
  %v2213 = vld [vmem:[#allocation2 + $0xd8] sm:$0xe]
  %v2214 = vld [vmem:[#allocation2 + $0xe4] sm:$0xe]
  %v2215 = vld [vmem:[#allocation2 + $0xf0] sm:$0xe]
  %v2216 = vld [vmem:[#allocation2 + $0xfc] sm:$0xe]
  %v2217 = vld [vmem:[#allocation2 + $0x108] sm:$0xe]
  %v2218 = vld [vmem:[#allocation2 + $0x114] sm:$0xe]
  %v2219 = vld [vmem:[#allocation2 + $0x120] sm:$0xe]
  %v2220 = vld [vmem:[#allocation2 + $0x12c] sm:$0xe]
  %v2221 = vld [vmem:[#allocation2 + $0x138] sm:$0xe]
  %v2222 = vld [vmem:[#allocation2 + $0x144] sm:$0xe]
  %v2223 = vld [vmem:[#allocation2 + $0x150] sm:$0xe]
  %v2224 = vld [vmem:[#allocation2 + $0x15c] sm:$0xe]
  %v2225 = vld [vmem:[#allocation2 + $0x168] sm:$0xe]
  %v2226 = vld [vmem:[#allocation2 + $0x174] sm:$0xe]
  %v2227 = vld [vmem:[#allocation2 + $0x180] sm:$0xe]
  %v2228 = vld [vmem:[#allocation2 + $0x18c] sm:$0xe]
  %v2229 = vld [vmem:[%s1871] sm:$0xf]
  %v2230 = vld [vmem:[%s1871 + $0x4] sm:$0xf]
  %v2231 = vld [vmem:[%s1871 + $0xc] sm:$0xf]
  %v2232 = vld [vmem:[%s1871 + $0x10] sm:$0xf]
  %v2233 = vld [vmem:[%s1871 + $0x18] sm:$0xf]
  %v2234 = vld [vmem:[%s1871 + $0x1c] sm:$0xf]
  %v2235 = vld [vmem:[%s1871 + $0x24] sm:$0xf]
  %v2236 = vld [vmem:[%s1871 + $0x28] sm:$0xf]
  %v2237 = vld [vmem:[%s1871 + $0x30] sm:$0xf]
  %v2238 = vld [vmem:[%s1871 + $0x34] sm:$0xf]
  %v2239 = vld [vmem:[%s1871 + $0x3c] sm:$0xf]
  %v2240 = vld [vmem:[%s1871 + $0x40] sm:$0xf]
  %v2241 = vld [vmem:[%s1871 + $0x48] sm:$0xf]
  %v2242 = vld [vmem:[%s1871 + $0x4c] sm:$0xf]
  %v2243 = vld [vmem:[%s1871 + $0x54] sm:$0xf]
  %v2244 = vld [vmem:[%s1871 + $0x58] sm:$0xf]
  %v2245 = vld [vmem:[%s1871 + $0x60] sm:$0xf]
  %v2246 = vld [vmem:[%s1871 + $0x64] sm:$0xf]
  %v2247 = vld [vmem:[%s1871 + $0x6c] sm:$0xf]
  %v2248 = vld [vmem:[%s1871 + $0x70] sm:$0xf]
  %v2249 = vld [vmem:[%s1871 + $0x78] sm:$0xf]
  %v2250 = vld [vmem:[%s1871 + $0x7c] sm:$0xf]
  %v2251 = vld [vmem:[%s1871 + $0x84] sm:$0xf]
  %v2252 = vld [vmem:[%s1871 + $0x88] sm:$0xf]
  %v2253 = vld [vmem:[%s1871 + $0x90] sm:$0xf]
  %v2254 = vld [vmem:[%s1871 + $0x94] sm:$0xf]
  %v2255 = vld [vmem:[%s1871 + $0x9c] sm:$0xf]
  %v2256 = vld [vmem:[%s1871 + $0xa0] sm:$0xf]
  %v2257 = vld [vmem:[%s1871 + $0xa8] sm:$0xf]
  %v2258 = vld [vmem:[%s1871 + $0xac] sm:$0xf]
  %v2259 = vld [vmem:[%s1871 + $0xb4] sm:$0xf]
  %v2260 = vld [vmem:[%s1871 + $0xb8] sm:$0xf]
  %v2261 = vld [vmem:[%s1871 + $0xd8] sm:$0xf]
  %v2262 = vld [vmem:[%s1871 + $0xdc] sm:$0xf]
  %v2263 = vld [vmem:[%s1871 + $0xe4] sm:$0xf]
  %v2264 = vld [vmem:[%s1871 + $0xe8] sm:$0xf]
  %v2265 = vld [vmem:[%s1871 + $0xf0] sm:$0xf]
  %v2266 = vld [vmem:[%s1871 + $0xf4] sm:$0xf]
  %v2267 = vld [vmem:[%s1871 + $0xfc] sm:$0xf]
  %v2268 = vld [vmem:[%s1871 + $0x100] sm:$0xf]
  %v2269 = vld [vmem:[%s1871 + $0x108] sm:$0xf]
  %v2270 = vld [vmem:[%s1871 + $0x10c] sm:$0xf]
  %v2271 = vld [vmem:[%s1871 + $0x114] sm:$0xf]
  %v2272 = vld [vmem:[%s1871 + $0x118] sm:$0xf]
  %v2273 = vld [vmem:[%s1871 + $0x120] sm:$0xf]
  %v2274 = vld [vmem:[%s1871 + $0x124] sm:$0xf]
  %v2275 = vld [vmem:[%s1871 + $0x12c] sm:$0xf]
  %v2276 = vld [vmem:[%s1871 + $0x130] sm:$0xf]
  %v2277 = vld [vmem:[%s1871 + $0x138] sm:$0xf]
  %v2278 = vld [vmem:[%s1871 + $0x13c] sm:$0xf]
  %v2279 = vld [vmem:[%s1871 + $0x144] sm:$0xf]
  %v2280 = vld [vmem:[%s1871 + $0x148] sm:$0xf]
  %v2281 = vld [vmem:[%s1871 + $0x150] sm:$0xf]
  %v2282 = vld [vmem:[%s1871 + $0x154] sm:$0xf]
  %v2283 = vld [vmem:[%s1871 + $0x15c] sm:$0xf]
  %v2284 = vld [vmem:[%s1871 + $0x160] sm:$0xf]
  %v2285 = vld [vmem:[%s1871 + $0x168] sm:$0xf]
  %v2286 = vld [vmem:[%s1871 + $0x16c] sm:$0xf]
  %v2287 = vld [vmem:[%s1871 + $0x174] sm:$0xf]
  %v2288 = vld [vmem:[%s1871 + $0x178] sm:$0xf]
  %v2289 = vld [vmem:[%s1871 + $0x180] sm:$0xf]
  %v2290 = vld [vmem:[%s1871 + $0x184] sm:$0xf]
  %v2291 = vld [vmem:[%s1871 + $0x18c] sm:$0xf]
  %v2292 = vld [vmem:[%s1871 + $0x190] sm:$0xf]
  %v2293 = vld [vmem:[%s1871 + $0x8] sm:$0x1]
  %v2294 = vld [vmem:[%s1871 + $0x14] sm:$0x1]
  %v2295 = vld [vmem:[%s1871 + $0x20] sm:$0x1]
  %v2296 = vld [vmem:[%s1871 + $0x2c] sm:$0x1]
  %v2297 = vld [vmem:[%s1871 + $0x38] sm:$0x1]
  %v2298 = vld [vmem:[%s1871 + $0x44] sm:$0x1]
  %v2299 = vld [vmem:[%s1871 + $0x50] sm:$0x1]
  %v2300 = vld [vmem:[%s1871 + $0x5c] sm:$0x1]
  %v2301 = vld [vmem:[%s1871 + $0x68] sm:$0x1]
  %v2302 = vld [vmem:[%s1871 + $0x74] sm:$0x1]
  %v2303 = vld [vmem:[%s1871 + $0x80] sm:$0x1]
  %v2304 = vld [vmem:[%s1871 + $0x8c] sm:$0x1]
  %v2305 = vld [vmem:[%s1871 + $0x98] sm:$0x1]
  %v2306 = vld [vmem:[%s1871 + $0xa4] sm:$0x1]
  %v2307 = vld [vmem:[%s1871 + $0xb0] sm:$0x1]
  %v2308 = vld [vmem:[%s1871 + $0xbc] sm:$0x1]
  %v2309 = vld [vmem:[%s1871 + $0xe0] sm:$0x1]
  %v2310 = vld [vmem:[%s1871 + $0xec] sm:$0x1]
  %v2311 = vld [vmem:[%s1871 + $0xf8] sm:$0x1]
  %v2312 = vld [vmem:[%s1871 + $0x104] sm:$0x1]
  %v2313 = vld [vmem:[%s1871 + $0x110] sm:$0x1]
  %v2314 = vld [vmem:[%s1871 + $0x11c] sm:$0x1]
  %v2315 = vld [vmem:[%s1871 + $0x128] sm:$0x1]
  %v2316 = vld [vmem:[%s1871 + $0x134] sm:$0x1]
  %v2317 = vld [vmem:[%s1871 + $0x140] sm:$0x1]
  %v2318 = vld [vmem:[%s1871 + $0x14c] sm:$0x1]
  %v2319 = vld [vmem:[%s1871 + $0x158] sm:$0x1]
  %v2320 = vld [vmem:[%s1871 + $0x164] sm:$0x1]
  %v2321 = vld [vmem:[%s1871 + $0x170] sm:$0x1]
  %v2322 = vld [vmem:[%s1871 + $0x17c] sm:$0x1]
  %v2323 = vld [vmem:[%s1871 + $0x188] sm:$0x1]
  %v2324 = vld [vmem:[%s1871 + $0x194] sm:$0x1]
  %v2325 = vld [vmem:[%s1871] sm:$0xe]
  %v2326 = vld [vmem:[%s1871 + $0xc] sm:$0xe]
  %v2327 = vld [vmem:[%s1871 + $0x18] sm:$0xe]
  %v2328 = vld [vmem:[%s1871 + $0x24] sm:$0xe]
  %v2329 = vld [vmem:[%s1871 + $0x30] sm:$0xe]
  %v2330 = vld [vmem:[%s1871 + $0x3c] sm:$0xe]
  %v2331 = vld [vmem:[%s1871 + $0x48] sm:$0xe]
  %v2332 = vld [vmem:[%s1871 + $0x54] sm:$0xe]
  %v2333 = vld [vmem:[%s1871 + $0x60] sm:$0xe]
  %v2334 = vld [vmem:[%s1871 + $0x6c] sm:$0xe]
  %v2335 = vld [vmem:[%s1871 + $0x78] sm:$0xe]
  %v2336 = vld [vmem:[%s1871 + $0x84] sm:$0xe]
  %v2337 = vld [vmem:[%s1871 + $0x90] sm:$0xe]
  %v2338 = vld [vmem:[%s1871 + $0x9c] sm:$0xe]
  %v2339 = vld [vmem:[%s1871 + $0xa8] sm:$0xe]
  %v2340 = vld [vmem:[%s1871 + $0xb4] sm:$0xe]
  %v2341 = vld [vmem:[%s1871 + $0xd8] sm:$0xe]
  %v2342 = vld [vmem:[%s1871 + $0xe4] sm:$0xe]
  %v2343 = vld [vmem:[%s1871 + $0xf0] sm:$0xe]
  %v2344 = vld [vmem:[%s1871 + $0xfc] sm:$0xe]
  %v2345 = vld [vmem:[%s1871 + $0x108] sm:$0xe]
  %v2346 = vld [vmem:[%s1871 + $0x114] sm:$0xe]
  %v2347 = vld [vmem:[%s1871 + $0x120] sm:$0xe]
  %v2348 = vld [vmem:[%s1871 + $0x12c] sm:$0xe]
  %v2349 = vld [vmem:[%s1871 + $0x138] sm:$0xe]
  %v2350 = vld [vmem:[%s1871 + $0x144] sm:$0xe]
  %v2351 = vld [vmem:[%s1871 + $0x150] sm:$0xe]
  %v2352 = vld [vmem:[%s1871 + $0x15c] sm:$0xe]
  %v2353 = vld [vmem:[%s1871 + $0x168] sm:$0xe]
  %v2354 = vld [vmem:[%s1871 + $0x174] sm:$0xe]
  %v2355 = vld [vmem:[%s1871 + $0x180] sm:$0xe]
  %v2356 = vld [vmem:[%s1871 + $0x18c] sm:$0xe]
  %s2357 = scalar_lea.vmem [#allocation2], 24
  %v2358 = vld [vmem:[%s2357] sm:$0xf]
  %v2359 = vld [vmem:[%s2357 + $0x4] sm:$0xf]
  %v2360 = vld [vmem:[%s2357 + $0xc] sm:$0xf]
  %v2361 = vld [vmem:[%s2357 + $0x10] sm:$0xf]
  %v2362 = vld [vmem:[%s2357 + $0x18] sm:$0xf]
  %v2363 = vld [vmem:[%s2357 + $0x1c] sm:$0xf]
  %v2364 = vld [vmem:[%s2357 + $0x24] sm:$0xf]
  %v2365 = vld [vmem:[%s2357 + $0x28] sm:$0xf]
  %v2366 = vld [vmem:[%s2357 + $0x30] sm:$0xf]
  %v2367 = vld [vmem:[%s2357 + $0x34] sm:$0xf]
  %v2368 = vld [vmem:[%s2357 + $0x3c] sm:$0xf]
  %v2369 = vld [vmem:[%s2357 + $0x40] sm:$0xf]
  %v2370 = vld [vmem:[%s2357 + $0x48] sm:$0xf]
  %v2371 = vld [vmem:[%s2357 + $0x4c] sm:$0xf]
  %v2372 = vld [vmem:[%s2357 + $0x54] sm:$0xf]
  %v2373 = vld [vmem:[%s2357 + $0x58] sm:$0xf]
  %v2374 = vld [vmem:[%s2357 + $0x60] sm:$0xf]
  %v2375 = vld [vmem:[%s2357 + $0x64] sm:$0xf]
  %v2376 = vld [vmem:[%s2357 + $0x6c] sm:$0xf]
  %v2377 = vld [vmem:[%s2357 + $0x70] sm:$0xf]
  %v2378 = vld [vmem:[%s2357 + $0x78] sm:$0xf]
  %v2379 = vld [vmem:[%s2357 + $0x7c] sm:$0xf]
  %v2380 = vld [vmem:[%s2357 + $0x84] sm:$0xf]
  %v2381 = vld [vmem:[%s2357 + $0x88] sm:$0xf]
  %v2382 = vld [vmem:[%s2357 + $0x90] sm:$0xf]
  %v2383 = vld [vmem:[%s2357 + $0x94] sm:$0xf]
  %v2384 = vld [vmem:[%s2357 + $0x9c] sm:$0xf]
  %v2385 = vld [vmem:[%s2357 + $0xa0] sm:$0xf]
  %v2386 = vld [vmem:[%s2357 + $0xa8] sm:$0xf]
  %v2387 = vld [vmem:[%s2357 + $0xac] sm:$0xf]
  %v2388 = vld [vmem:[%s2357 + $0xb4] sm:$0xf]
  %v2389 = vld [vmem:[%s2357 + $0xb8] sm:$0xf]
  %v2390 = vld [vmem:[%s2357 + $0xd8] sm:$0xf]
  %v2391 = vld [vmem:[%s2357 + $0xdc] sm:$0xf]
  %v2392 = vld [vmem:[%s2357 + $0xe4] sm:$0xf]
  %v2393 = vld [vmem:[%s2357 + $0xe8] sm:$0xf]
  %v2394 = vld [vmem:[%s2357 + $0xf0] sm:$0xf]
  %v2395 = vld [vmem:[%s2357 + $0xf4] sm:$0xf]
  %v2396 = vld [vmem:[%s2357 + $0xfc] sm:$0xf]
  %v2397 = vld [vmem:[%s2357 + $0x100] sm:$0xf]
  %v2398 = vld [vmem:[%s2357 + $0x108] sm:$0xf]
  %v2399 = vld [vmem:[%s2357 + $0x10c] sm:$0xf]
  %v2400 = vld [vmem:[%s2357 + $0x114] sm:$0xf]
  %v2401 = vld [vmem:[%s2357 + $0x118] sm:$0xf]
  %v2402 = vld [vmem:[%s2357 + $0x120] sm:$0xf]
  %v2403 = vld [vmem:[%s2357 + $0x124] sm:$0xf]
  %v2404 = vld [vmem:[%s2357 + $0x12c] sm:$0xf]
  %v2405 = vld [vmem:[%s2357 + $0x130] sm:$0xf]
  %v2406 = vld [vmem:[%s2357 + $0x138] sm:$0xf]
  %v2407 = vld [vmem:[%s2357 + $0x13c] sm:$0xf]
  %v2408 = vld [vmem:[%s2357 + $0x144] sm:$0xf]
  %v2409 = vld [vmem:[%s2357 + $0x148] sm:$0xf]
  %v2410 = vld [vmem:[%s2357 + $0x150] sm:$0xf]
  %v2411 = vld [vmem:[%s2357 + $0x154] sm:$0xf]
  %v2412 = vld [vmem:[%s2357 + $0x15c] sm:$0xf]
  %v2413 = vld [vmem:[%s2357 + $0x160] sm:$0xf]
  %v2414 = vld [vmem:[%s2357 + $0x168] sm:$0xf]
  %v2415 = vld [vmem:[%s2357 + $0x16c] sm:$0xf]
  %v2416 = vld [vmem:[%s2357 + $0x174] sm:$0xf]
  %v2417 = vld [vmem:[%s2357 + $0x178] sm:$0xf]
  %v2418 = vld [vmem:[%s2357 + $0x180] sm:$0xf]
  %v2419 = vld [vmem:[%s2357 + $0x184] sm:$0xf]
  %v2420 = vld [vmem:[%s2357 + $0x18c] sm:$0xf]
  %v2421 = vld [vmem:[%s2357 + $0x190] sm:$0xf]
  %v2422 = vld [vmem:[%s2357 + $0x8] sm:$0x1]
  %v2423 = vld [vmem:[%s2357 + $0x14] sm:$0x1]
  %v2424 = vld [vmem:[%s2357 + $0x20] sm:$0x1]
  %v2425 = vld [vmem:[%s2357 + $0x2c] sm:$0x1]
  %v2426 = vld [vmem:[%s2357 + $0x38] sm:$0x1]
  %v2427 = vld [vmem:[%s2357 + $0x44] sm:$0x1]
  %v2428 = vld [vmem:[%s2357 + $0x50] sm:$0x1]
  %v2429 = vld [vmem:[%s2357 + $0x5c] sm:$0x1]
  %v2430 = vld [vmem:[%s2357 + $0x68] sm:$0x1]
  %v2431 = vld [vmem:[%s2357 + $0x74] sm:$0x1]
  %v2432 = vld [vmem:[%s2357 + $0x80] sm:$0x1]
  %v2433 = vld [vmem:[%s2357 + $0x8c] sm:$0x1]
  %v2434 = vld [vmem:[%s2357 + $0x98] sm:$0x1]
  %v2435 = vld [vmem:[%s2357 + $0xa4] sm:$0x1]
  %v2436 = vld [vmem:[%s2357 + $0xb0] sm:$0x1]
  %v2437 = vld [vmem:[%s2357 + $0xbc] sm:$0x1]
  %v2438 = vld [vmem:[%s2357 + $0xe0] sm:$0x1]
  %v2439 = vld [vmem:[%s2357 + $0xec] sm:$0x1]
  %v2440 = vld [vmem:[%s2357 + $0xf8] sm:$0x1]
  %v2441 = vld [vmem:[%s2357 + $0x104] sm:$0x1]
  %v2442 = vld [vmem:[%s2357 + $0x110] sm:$0x1]
  %v2443 = vld [vmem:[%s2357 + $0x11c] sm:$0x1]
  %v2444 = vld [vmem:[%s2357 + $0x128] sm:$0x1]
  %v2445 = vld [vmem:[%s2357 + $0x134] sm:$0x1]
  %v2446 = vld [vmem:[%s2357 + $0x140] sm:$0x1]
  %v2447 = vld [vmem:[%s2357 + $0x14c] sm:$0x1]
  %v2448 = vld [vmem:[%s2357 + $0x158] sm:$0x1]
  %v2449 = vld [vmem:[%s2357 + $0x164] sm:$0x1]
  %v2450 = vld [vmem:[%s2357 + $0x170] sm:$0x1]
  %v2451 = vld [vmem:[%s2357 + $0x17c] sm:$0x1]
  %v2452 = vld [vmem:[%s2357 + $0x188] sm:$0x1]
  %v2453 = vld [vmem:[%s2357 + $0x194] sm:$0x1]
  %v2454 = vld [vmem:[%s2357] sm:$0xe]
  %v2455 = vld [vmem:[%s2357 + $0xc] sm:$0xe]
  %v2456 = vld [vmem:[%s2357 + $0x18] sm:$0xe]
  %v2457 = vld [vmem:[%s2357 + $0x24] sm:$0xe]
  %v2458 = vld [vmem:[%s2357 + $0x30] sm:$0xe]
  %v2459 = vld [vmem:[%s2357 + $0x3c] sm:$0xe]
  %v2460 = vld [vmem:[%s2357 + $0x48] sm:$0xe]
  %v2461 = vld [vmem:[%s2357 + $0x54] sm:$0xe]
  %v2462 = vld [vmem:[%s2357 + $0x60] sm:$0xe]
  %v2463 = vld [vmem:[%s2357 + $0x6c] sm:$0xe]
  %v2464 = vld [vmem:[%s2357 + $0x78] sm:$0xe]
  %v2465 = vld [vmem:[%s2357 + $0x84] sm:$0xe]
  %v2466 = vld [vmem:[%s2357 + $0x90] sm:$0xe]
  %v2467 = vld [vmem:[%s2357 + $0x9c] sm:$0xe]
  %v2468 = vld [vmem:[%s2357 + $0xa8] sm:$0xe]
  %v2469 = vld [vmem:[%s2357 + $0xb4] sm:$0xe]
  %v2470 = vld [vmem:[%s2357 + $0xd8] sm:$0xe]
  %v2471 = vld [vmem:[%s2357 + $0xe4] sm:$0xe]
  %v2472 = vld [vmem:[%s2357 + $0xf0] sm:$0xe]
  %v2473 = vld [vmem:[%s2357 + $0xfc] sm:$0xe]
  %v2474 = vld [vmem:[%s2357 + $0x108] sm:$0xe]
  %v2475 = vld [vmem:[%s2357 + $0x114] sm:$0xe]
  %v2476 = vld [vmem:[%s2357 + $0x120] sm:$0xe]
  %v2477 = vld [vmem:[%s2357 + $0x12c] sm:$0xe]
  %v2478 = vld [vmem:[%s2357 + $0x138] sm:$0xe]
  %v2479 = vld [vmem:[%s2357 + $0x144] sm:$0xe]
  %v2480 = vld [vmem:[%s2357 + $0x150] sm:$0xe]
  %v2481 = vld [vmem:[%s2357 + $0x15c] sm:$0xe]
  %v2482 = vld [vmem:[%s2357 + $0x168] sm:$0xe]
  %v2483 = vld [vmem:[%s2357 + $0x174] sm:$0xe]
  %v2484 = vld [vmem:[%s2357 + $0x180] sm:$0xe]
  %v2485 = vld [vmem:[%s2357 + $0x18c] sm:$0xe]
  %v2550 = vunpack.c.l.b16 %v2101
  %v2551 = vunpack.c.l.b16 %v2102
  %v2552 = vunpack.c.l.b16 %v2103
  %v2553 = vunpack.c.l.b16 %v2104
  %v2554 = vunpack.c.l.b16 %v2105
  %v2555 = vunpack.c.l.b16 %v2106
  %v2556 = vunpack.c.l.b16 %v2107
  %v2557 = vunpack.c.l.b16 %v2108
  %v2558 = vunpack.c.l.b16 %v2109
  %v2559 = vunpack.c.l.b16 %v2110
  %v2560 = vunpack.c.l.b16 %v2111
  %v2561 = vunpack.c.l.b16 %v2112
  %v2562 = vunpack.c.l.b16 %v2113
  %v2563 = vunpack.c.l.b16 %v2114
  %v2564 = vunpack.c.l.b16 %v2115
  %v2565 = vunpack.c.l.b16 %v2116
  %v2566 = vunpack.c.l.b16 %v2117
  %v2567 = vunpack.c.l.b16 %v2118
  %v2568 = vunpack.c.l.b16 %v2119
  %v2569 = vunpack.c.l.b16 %v2120
  %v2570 = vunpack.c.l.b16 %v2121
  %v2571 = vunpack.c.l.b16 %v2122
  %v2572 = vunpack.c.l.b16 %v2123
  %v2573 = vunpack.c.l.b16 %v2124
  %v2574 = vunpack.c.l.b16 %v2125
  %v2575 = vunpack.c.l.b16 %v2126
  %v2576 = vunpack.c.l.b16 %v2127
  %v2577 = vunpack.c.l.b16 %v2128
  %v2578 = vunpack.c.l.b16 %v2129
  %v2579 = vunpack.c.l.b16 %v2130
  %v2580 = vunpack.c.l.b16 %v2131
  %v2581 = vunpack.c.l.b16 %v2132
  %v2582 = vunpack.c.l.b16 %v2133
  %v2583 = vunpack.c.l.b16 %v2134
  %v2584 = vunpack.c.l.b16 %v2135
  %v2585 = vunpack.c.l.b16 %v2136
  %v2586 = vunpack.c.l.b16 %v2137
  %v2587 = vunpack.c.l.b16 %v2138
  %v2588 = vunpack.c.l.b16 %v2139
  %v2589 = vunpack.c.l.b16 %v2140
  %v2590 = vunpack.c.l.b16 %v2141
  %v2591 = vunpack.c.l.b16 %v2142
  %v2592 = vunpack.c.l.b16 %v2143
  %v2593 = vunpack.c.l.b16 %v2144
  %v2594 = vunpack.c.l.b16 %v2145
  %v2595 = vunpack.c.l.b16 %v2146
  %v2596 = vunpack.c.l.b16 %v2147
  %v2597 = vunpack.c.l.b16 %v2148
  %v2598 = vunpack.c.l.b16 %v2149
  %v2599 = vunpack.c.l.b16 %v2150
  %v2600 = vunpack.c.l.b16 %v2151
  %v2601 = vunpack.c.l.b16 %v2152
  %v2602 = vunpack.c.l.b16 %v2153
  %v2603 = vunpack.c.l.b16 %v2154
  %v2604 = vunpack.c.l.b16 %v2155
  %v2605 = vunpack.c.l.b16 %v2156
  %v2606 = vunpack.c.l.b16 %v2157
  %v2607 = vunpack.c.l.b16 %v2158
  %v2608 = vunpack.c.l.b16 %v2159
  %v2609 = vunpack.c.l.b16 %v2160
  %v2610 = vunpack.c.l.b16 %v2161
  %v2611 = vunpack.c.l.b16 %v2162
  %v2612 = vunpack.c.l.b16 %v2163
  %v2613 = vunpack.c.l.b16 %v2164
  %v2614 = vpack.c.b16 %v2551, %v2550
  %v2615 = vpack.c.b16 %v2553, %v2552
  %v2616 = vpack.c.b16 %v2555, %v2554
  %v2617 = vpack.c.b16 %v2557, %v2556
  %v2618 = vpack.c.b16 %v2559, %v2558
  %v2619 = vpack.c.b16 %v2561, %v2560
  %v2620 = vpack.c.b16 %v2563, %v2562
  %v2621 = vpack.c.b16 %v2565, %v2564
  %v2622 = vpack.c.b16 %v2567, %v2566
  %v2623 = vpack.c.b16 %v2569, %v2568
  %v2624 = vpack.c.b16 %v2571, %v2570
  %v2625 = vpack.c.b16 %v2573, %v2572
  %v2626 = vpack.c.b16 %v2575, %v2574
  %v2627 = vpack.c.b16 %v2577, %v2576
  %v2628 = vpack.c.b16 %v2579, %v2578
  %v2629 = vpack.c.b16 %v2581, %v2580
  %v2630 = vpack.c.b16 %v2583, %v2582
  %v2631 = vpack.c.b16 %v2585, %v2584
  %v2632 = vpack.c.b16 %v2587, %v2586
  %v2633 = vpack.c.b16 %v2589, %v2588
  %v2634 = vpack.c.b16 %v2591, %v2590
  %v2635 = vpack.c.b16 %v2593, %v2592
  %v2636 = vpack.c.b16 %v2595, %v2594
  %v2637 = vpack.c.b16 %v2597, %v2596
  %v2638 = vpack.c.b16 %v2599, %v2598
  %v2639 = vpack.c.b16 %v2601, %v2600
  %v2640 = vpack.c.b16 %v2603, %v2602
  %v2641 = vpack.c.b16 %v2605, %v2604
  %v2642 = vpack.c.b16 %v2607, %v2606
  %v2643 = vpack.c.b16 %v2609, %v2608
  %v2644 = vpack.c.b16 %v2611, %v2610
  %v2645 = vpack.c.b16 %v2613, %v2612
  %v2678 = vunpack.c.l.b16 %v2165
  %v2679 = vunpack.c.l.b16 %v2166
  %v2680 = vunpack.c.l.b16 %v2167
  %v2681 = vunpack.c.l.b16 %v2168
  %v2682 = vunpack.c.l.b16 %v2169
  %v2683 = vunpack.c.l.b16 %v2170
  %v2684 = vunpack.c.l.b16 %v2171
  %v2685 = vunpack.c.l.b16 %v2172
  %v2686 = vunpack.c.l.b16 %v2173
  %v2687 = vunpack.c.l.b16 %v2174
  %v2688 = vunpack.c.l.b16 %v2175
  %v2689 = vunpack.c.l.b16 %v2176
  %v2690 = vunpack.c.l.b16 %v2177
  %v2691 = vunpack.c.l.b16 %v2178
  %v2692 = vunpack.c.l.b16 %v2179
  %v2693 = vunpack.c.l.b16 %v2180
  %v2694 = vunpack.c.l.b16 %v2181
  %v2695 = vunpack.c.l.b16 %v2182
  %v2696 = vunpack.c.l.b16 %v2183
  %v2697 = vunpack.c.l.b16 %v2184
  %v2698 = vunpack.c.l.b16 %v2185
  %v2699 = vunpack.c.l.b16 %v2186
  %v2700 = vunpack.c.l.b16 %v2187
  %v2701 = vunpack.c.l.b16 %v2188
  %v2702 = vunpack.c.l.b16 %v2189
  %v2703 = vunpack.c.l.b16 %v2190
  %v2704 = vunpack.c.l.b16 %v2191
  %v2705 = vunpack.c.l.b16 %v2192
  %v2706 = vunpack.c.l.b16 %v2193
  %v2707 = vunpack.c.l.b16 %v2194
  %v2708 = vunpack.c.l.b16 %v2195
  %v2709 = vunpack.c.l.b16 %v2196
  %v2710 = vpack.c.b16 %v2678, %v2678
  %v2711 = vpack.c.b16 %v2679, %v2679
  %v2712 = vpack.c.b16 %v2680, %v2680
  %v2713 = vpack.c.b16 %v2681, %v2681
  %v2714 = vpack.c.b16 %v2682, %v2682
  %v2715 = vpack.c.b16 %v2683, %v2683
  %v2716 = vpack.c.b16 %v2684, %v2684
  %v2717 = vpack.c.b16 %v2685, %v2685
  %v2718 = vpack.c.b16 %v2686, %v2686
  %v2719 = vpack.c.b16 %v2687, %v2687
  %v2720 = vpack.c.b16 %v2688, %v2688
  %v2721 = vpack.c.b16 %v2689, %v2689
  %v2722 = vpack.c.b16 %v2690, %v2690
  %v2723 = vpack.c.b16 %v2691, %v2691
  %v2724 = vpack.c.b16 %v2692, %v2692
  %v2725 = vpack.c.b16 %v2693, %v2693
  %v2726 = vpack.c.b16 %v2694, %v2694
  %v2727 = vpack.c.b16 %v2695, %v2695
  %v2728 = vpack.c.b16 %v2696, %v2696
  %v2729 = vpack.c.b16 %v2697, %v2697
  %v2730 = vpack.c.b16 %v2698, %v2698
  %v2731 = vpack.c.b16 %v2699, %v2699
  %v2732 = vpack.c.b16 %v2700, %v2700
  %v2733 = vpack.c.b16 %v2701, %v2701
  %v2734 = vpack.c.b16 %v2702, %v2702
  %v2735 = vpack.c.b16 %v2703, %v2703
  %v2736 = vpack.c.b16 %v2704, %v2704
  %v2737 = vpack.c.b16 %v2705, %v2705
  %v2738 = vpack.c.b16 %v2706, %v2706
  %v2739 = vpack.c.b16 %v2707, %v2707
  %v2740 = vpack.c.b16 %v2708, %v2708
  %v2741 = vpack.c.b16 %v2709, %v2709
  %vm2742 = vsmask.f32 7424
  %v2744 = vshrl.u32 %v2614, 16
  %v2746 = vshll.u32 %v2614, 16
  %v2748 = vrot.slane %v2746, 1
  %v2749 = vor.u32 %v2744, %v2748
  %v2751 = vshll.u32 %v2710, 16
  %v2753 = vrot.slane %v2751, 1
  %v2754 = vsel %vm2742, %v2749, %v2753
  %v2756 = vshrl.u32 %v2615, 16
  %v2758 = vshll.u32 %v2615, 16
  %v2760 = vrot.slane %v2758, 1
  %v2761 = vor.u32 %v2756, %v2760
  %v2763 = vshll.u32 %v2711, 16
  %v2765 = vrot.slane %v2763, 1
  %v2766 = vsel %vm2742, %v2761, %v2765
  %v2768 = vshrl.u32 %v2616, 16
  %v2770 = vshll.u32 %v2616, 16
  %v2772 = vrot.slane %v2770, 1
  %v2773 = vor.u32 %v2768, %v2772
  %v2775 = vshll.u32 %v2712, 16
  %v2777 = vrot.slane %v2775, 1
  %v2778 = vsel %vm2742, %v2773, %v2777
  %v2780 = vshrl.u32 %v2617, 16
  %v2782 = vshll.u32 %v2617, 16
  %v2784 = vrot.slane %v2782, 1
  %v2785 = vor.u32 %v2780, %v2784
  %v2787 = vshll.u32 %v2713, 16
  %v2789 = vrot.slane %v2787, 1
  %v2790 = vsel %vm2742, %v2785, %v2789
  %v2792 = vshrl.u32 %v2618, 16
  %v2794 = vshll.u32 %v2618, 16
  %v2796 = vrot.slane %v2794, 1
  %v2797 = vor.u32 %v2792, %v2796
  %v2799 = vshll.u32 %v2714, 16
  %v2801 = vrot.slane %v2799, 1
  %v2802 = vsel %vm2742, %v2797, %v2801
  %v2804 = vshrl.u32 %v2619, 16
  %v2806 = vshll.u32 %v2619, 16
  %v2808 = vrot.slane %v2806, 1
  %v2809 = vor.u32 %v2804, %v2808
  %v2811 = vshll.u32 %v2715, 16
  %v2813 = vrot.slane %v2811, 1
  %v2814 = vsel %vm2742, %v2809, %v2813
  %v2816 = vshrl.u32 %v2620, 16
  %v2818 = vshll.u32 %v2620, 16
  %v2820 = vrot.slane %v2818, 1
  %v2821 = vor.u32 %v2816, %v2820
  %v2823 = vshll.u32 %v2716, 16
  %v2825 = vrot.slane %v2823, 1
  %v2826 = vsel %vm2742, %v2821, %v2825
  %v2828 = vshrl.u32 %v2621, 16
  %v2830 = vshll.u32 %v2621, 16
  %v2832 = vrot.slane %v2830, 1
  %v2833 = vor.u32 %v2828, %v2832
  %v2835 = vshll.u32 %v2717, 16
  %v2837 = vrot.slane %v2835, 1
  %v2838 = vsel %vm2742, %v2833, %v2837
  %v2840 = vshrl.u32 %v2622, 16
  %v2842 = vshll.u32 %v2622, 16
  %v2844 = vrot.slane %v2842, 1
  %v2845 = vor.u32 %v2840, %v2844
  %v2847 = vshll.u32 %v2718, 16
  %v2849 = vrot.slane %v2847, 1
  %v2850 = vsel %vm2742, %v2845, %v2849
  %v2852 = vshrl.u32 %v2623, 16
  %v2854 = vshll.u32 %v2623, 16
  %v2856 = vrot.slane %v2854, 1
  %v2857 = vor.u32 %v2852, %v2856
  %v2859 = vshll.u32 %v2719, 16
  %v2861 = vrot.slane %v2859, 1
  %v2862 = vsel %vm2742, %v2857, %v2861
  %v2864 = vshrl.u32 %v2624, 16
  %v2866 = vshll.u32 %v2624, 16
  %v2868 = vrot.slane %v2866, 1
  %v2869 = vor.u32 %v2864, %v2868
  %v2871 = vshll.u32 %v2720, 16
  %v2873 = vrot.slane %v2871, 1
  %v2874 = vsel %vm2742, %v2869, %v2873
  %v2876 = vshrl.u32 %v2625, 16
  %v2878 = vshll.u32 %v2625, 16
  %v2880 = vrot.slane %v2878, 1
  %v2881 = vor.u32 %v2876, %v2880
  %v2883 = vshll.u32 %v2721, 16
  %v2885 = vrot.slane %v2883, 1
  %v2886 = vsel %vm2742, %v2881, %v2885
  %v2888 = vshrl.u32 %v2626, 16
  %v2890 = vshll.u32 %v2626, 16
  %v2892 = vrot.slane %v2890, 1
  %v2893 = vor.u32 %v2888, %v2892
  %v2895 = vshll.u32 %v2722, 16
  %v2897 = vrot.slane %v2895, 1
  %v2898 = vsel %vm2742, %v2893, %v2897
  %v2900 = vshrl.u32 %v2627, 16
  %v2902 = vshll.u32 %v2627, 16
  %v2904 = vrot.slane %v2902, 1
  %v2905 = vor.u32 %v2900, %v2904
  %v2907 = vshll.u32 %v2723, 16
  %v2909 = vrot.slane %v2907, 1
  %v2910 = vsel %vm2742, %v2905, %v2909
  %v2912 = vshrl.u32 %v2628, 16
  %v2914 = vshll.u32 %v2628, 16
  %v2916 = vrot.slane %v2914, 1
  %v2917 = vor.u32 %v2912, %v2916
  %v2919 = vshll.u32 %v2724, 16
  %v2921 = vrot.slane %v2919, 1
  %v2922 = vsel %vm2742, %v2917, %v2921
  %v2924 = vshrl.u32 %v2629, 16
  %v2926 = vshll.u32 %v2629, 16
  %v2928 = vrot.slane %v2926, 1
  %v2929 = vor.u32 %v2924, %v2928
  %v2931 = vshll.u32 %v2725, 16
  %v2933 = vrot.slane %v2931, 1
  %v2934 = vsel %vm2742, %v2929, %v2933
  %v2936 = vshrl.u32 %v2630, 16
  %v2938 = vshll.u32 %v2630, 16
  %v2940 = vrot.slane %v2938, 1
  %v2941 = vor.u32 %v2936, %v2940
  %v2943 = vshll.u32 %v2726, 16
  %v2945 = vrot.slane %v2943, 1
  %v2946 = vsel %vm2742, %v2941, %v2945
  %v2948 = vshrl.u32 %v2631, 16
  %v2950 = vshll.u32 %v2631, 16
  %v2952 = vrot.slane %v2950, 1
  %v2953 = vor.u32 %v2948, %v2952
  %v2955 = vshll.u32 %v2727, 16
  %v2957 = vrot.slane %v2955, 1
  %v2958 = vsel %vm2742, %v2953, %v2957
  %v2960 = vshrl.u32 %v2632, 16
  %v2962 = vshll.u32 %v2632, 16
  %v2964 = vrot.slane %v2962, 1
  %v2965 = vor.u32 %v2960, %v2964
  %v2967 = vshll.u32 %v2728, 16
  %v2969 = vrot.slane %v2967, 1
  %v2970 = vsel %vm2742, %v2965, %v2969
  %v2972 = vshrl.u32 %v2633, 16
  %v2974 = vshll.u32 %v2633, 16
  %v2976 = vrot.slane %v2974, 1
  %v2977 = vor.u32 %v2972, %v2976
  %v2979 = vshll.u32 %v2729, 16
  %v2981 = vrot.slane %v2979, 1
  %v2982 = vsel %vm2742, %v2977, %v2981
  %v2984 = vshrl.u32 %v2634, 16
  %v2986 = vshll.u32 %v2634, 16
  %v2988 = vrot.slane %v2986, 1
  %v2989 = vor.u32 %v2984, %v2988
  %v2991 = vshll.u32 %v2730, 16
  %v2993 = vrot.slane %v2991, 1
  %v2994 = vsel %vm2742, %v2989, %v2993
  %v2996 = vshrl.u32 %v2635, 16
  %v2998 = vshll.u32 %v2635, 16
  %v3000 = vrot.slane %v2998, 1
  %v3001 = vor.u32 %v2996, %v3000
  %v3003 = vshll.u32 %v2731, 16
  %v3005 = vrot.slane %v3003, 1
  %v3006 = vsel %vm2742, %v3001, %v3005
  %v3008 = vshrl.u32 %v2636, 16
  %v3010 = vshll.u32 %v2636, 16
  %v3012 = vrot.slane %v3010, 1
  %v3013 = vor.u32 %v3008, %v3012
  %v3015 = vshll.u32 %v2732, 16
  %v3017 = vrot.slane %v3015, 1
  %v3018 = vsel %vm2742, %v3013, %v3017
  %v3020 = vshrl.u32 %v2637, 16
  %v3022 = vshll.u32 %v2637, 16
  %v3024 = vrot.slane %v3022, 1
  %v3025 = vor.u32 %v3020, %v3024
  %v3027 = vshll.u32 %v2733, 16
  %v3029 = vrot.slane %v3027, 1
  %v3030 = vsel %vm2742, %v3025, %v3029
  %v3032 = vshrl.u32 %v2638, 16
  %v3034 = vshll.u32 %v2638, 16
  %v3036 = vrot.slane %v3034, 1
  %v3037 = vor.u32 %v3032, %v3036
  %v3039 = vshll.u32 %v2734, 16
  %v3041 = vrot.slane %v3039, 1
  %v3042 = vsel %vm2742, %v3037, %v3041
  %v3044 = vshrl.u32 %v2639, 16
  %v3046 = vshll.u32 %v2639, 16
  %v3048 = vrot.slane %v3046, 1
  %v3049 = vor.u32 %v3044, %v3048
  %v3051 = vshll.u32 %v2735, 16
  %v3053 = vrot.slane %v3051, 1
  %v3054 = vsel %vm2742, %v3049, %v3053
  %v3056 = vshrl.u32 %v2640, 16
  %v3058 = vshll.u32 %v2640, 16
  %v3060 = vrot.slane %v3058, 1
  %v3061 = vor.u32 %v3056, %v3060
  %v3063 = vshll.u32 %v2736, 16
  %v3065 = vrot.slane %v3063, 1
  %v3066 = vsel %vm2742, %v3061, %v3065
  %v3068 = vshrl.u32 %v2641, 16
  %v3070 = vshll.u32 %v2641, 16
  %v3072 = vrot.slane %v3070, 1
  %v3073 = vor.u32 %v3068, %v3072
  %v3075 = vshll.u32 %v2737, 16
  %v3077 = vrot.slane %v3075, 1
  %v3078 = vsel %vm2742, %v3073, %v3077
  %v3080 = vshrl.u32 %v2642, 16
  %v3082 = vshll.u32 %v2642, 16
  %v3084 = vrot.slane %v3082, 1
  %v3085 = vor.u32 %v3080, %v3084
  %v3087 = vshll.u32 %v2738, 16
  %v3089 = vrot.slane %v3087, 1
  %v3090 = vsel %vm2742, %v3085, %v3089
  %v3092 = vshrl.u32 %v2643, 16
  %v3094 = vshll.u32 %v2643, 16
  %v3096 = vrot.slane %v3094, 1
  %v3097 = vor.u32 %v3092, %v3096
  %v3099 = vshll.u32 %v2739, 16
  %v3101 = vrot.slane %v3099, 1
  %v3102 = vsel %vm2742, %v3097, %v3101
  %v3104 = vshrl.u32 %v2644, 16
  %v3106 = vshll.u32 %v2644, 16
  %v3108 = vrot.slane %v3106, 1
  %v3109 = vor.u32 %v3104, %v3108
  %v3111 = vshll.u32 %v2740, 16
  %v3113 = vrot.slane %v3111, 1
  %v3114 = vsel %vm2742, %v3109, %v3113
  %v3116 = vshrl.u32 %v2645, 16
  %v3118 = vshll.u32 %v2645, 16
  %v3120 = vrot.slane %v3118, 1
  %v3121 = vor.u32 %v3116, %v3120
  %v3123 = vshll.u32 %v2741, 16
  %v3125 = vrot.slane %v3123, 1
  %v3126 = vsel %vm2742, %v3121, %v3125
  %3127 = vrot.lane.b32.xlu0 %v2754, 16
  %v3128 = vpop.permute.xlu0 %3127
  %3129 = vrot.lane.b32.xlu0 %v2766, 16
  %v3130 = vpop.permute.xlu0 %3129
  %3131 = vrot.lane.b32.xlu0 %v2778, 16
  %v3132 = vpop.permute.xlu0 %3131
  %3133 = vrot.lane.b32.xlu0 %v2790, 16
  %v3134 = vpop.permute.xlu0 %3133
  %3135 = vrot.lane.b32.xlu0 %v2802, 16
  %v3136 = vpop.permute.xlu0 %3135
  %3137 = vrot.lane.b32.xlu0 %v2814, 16
  %v3138 = vpop.permute.xlu0 %3137
  %3139 = vrot.lane.b32.xlu0 %v2826, 16
  %v3140 = vpop.permute.xlu0 %3139
  %3141 = vrot.lane.b32.xlu0 %v2838, 16
  %v3142 = vpop.permute.xlu0 %3141
  %3143 = vrot.lane.b32.xlu0 %v2850, 16
  %v3144 = vpop.permute.xlu0 %3143
  %3145 = vrot.lane.b32.xlu0 %v2862, 16
  %v3146 = vpop.permute.xlu0 %3145
  %3147 = vrot.lane.b32.xlu0 %v2874, 16
  %v3148 = vpop.permute.xlu0 %3147
  %3149 = vrot.lane.b32.xlu0 %v2886, 16
  %v3150 = vpop.permute.xlu0 %3149
  %3151 = vrot.lane.b32.xlu0 %v2898, 16
  %v3152 = vpop.permute.xlu0 %3151
  %3153 = vrot.lane.b32.xlu0 %v2910, 16
  %v3154 = vpop.permute.xlu0 %3153
  %3155 = vrot.lane.b32.xlu0 %v2922, 16
  %v3156 = vpop.permute.xlu0 %3155
  %3157 = vrot.lane.b32.xlu0 %v2934, 16
  %v3158 = vpop.permute.xlu0 %3157
  %3159 = vrot.lane.b32.xlu0 %v2946, 16
  %v3160 = vpop.permute.xlu0 %3159
  %3161 = vrot.lane.b32.xlu0 %v2958, 16
  %v3162 = vpop.permute.xlu0 %3161
  %3163 = vrot.lane.b32.xlu0 %v2970, 16
  %v3164 = vpop.permute.xlu0 %3163
  %3165 = vrot.lane.b32.xlu0 %v2982, 16
  %v3166 = vpop.permute.xlu0 %3165
  %3167 = vrot.lane.b32.xlu0 %v2994, 16
  %v3168 = vpop.permute.xlu0 %3167
  %3169 = vrot.lane.b32.xlu0 %v3006, 16
  %v3170 = vpop.permute.xlu0 %3169
  %3171 = vrot.lane.b32.xlu0 %v3018, 16
  %v3172 = vpop.permute.xlu0 %3171
  %3173 = vrot.lane.b32.xlu0 %v3030, 16
  %v3174 = vpop.permute.xlu0 %3173
  %3175 = vrot.lane.b32.xlu0 %v3042, 16
  %v3176 = vpop.permute.xlu0 %3175
  %3177 = vrot.lane.b32.xlu0 %v3054, 16
  %v3178 = vpop.permute.xlu0 %3177
  %3179 = vrot.lane.b32.xlu0 %v3066, 16
  %v3180 = vpop.permute.xlu0 %3179
  %3181 = vrot.lane.b32.xlu0 %v3078, 16
  %v3182 = vpop.permute.xlu0 %3181
  %3183 = vrot.lane.b32.xlu0 %v3090, 16
  %v3184 = vpop.permute.xlu0 %3183
  %3185 = vrot.lane.b32.xlu0 %v3102, 16
  %v3186 = vpop.permute.xlu0 %3185
  %3187 = vrot.lane.b32.xlu0 %v3114, 16
  %v3188 = vpop.permute.xlu0 %3187
  %3189 = vrot.lane.b32.xlu0 %v3126, 16
  %v3190 = vpop.permute.xlu0 %3189
  %v3223 = vunpack.c.l.b16 %v2197
  %v3224 = vunpack.c.l.b16 %v2198
  %v3225 = vunpack.c.l.b16 %v2199
  %v3226 = vunpack.c.l.b16 %v2200
  %v3227 = vunpack.c.l.b16 %v2201
  %v3228 = vunpack.c.l.b16 %v2202
  %v3229 = vunpack.c.l.b16 %v2203
  %v3230 = vunpack.c.l.b16 %v2204
  %v3231 = vunpack.c.l.b16 %v2205
  %v3232 = vunpack.c.l.b16 %v2206
  %v3233 = vunpack.c.l.b16 %v2207
  %v3234 = vunpack.c.l.b16 %v2208
  %v3235 = vunpack.c.l.b16 %v2209
  %v3236 = vunpack.c.l.b16 %v2210
  %v3237 = vunpack.c.l.b16 %v2211
  %v3238 = vunpack.c.l.b16 %v2212
  %v3239 = vunpack.c.l.b16 %v2213
  %v3240 = vunpack.c.l.b16 %v2214
  %v3241 = vunpack.c.l.b16 %v2215
  %v3242 = vunpack.c.l.b16 %v2216
  %v3243 = vunpack.c.l.b16 %v2217
  %v3244 = vunpack.c.l.b16 %v2218
  %v3245 = vunpack.c.l.b16 %v2219
  %v3246 = vunpack.c.l.b16 %v2220
  %v3247 = vunpack.c.l.b16 %v2221
  %v3248 = vunpack.c.l.b16 %v2222
  %v3249 = vunpack.c.l.b16 %v2223
  %v3250 = vunpack.c.l.b16 %v2224
  %v3251 = vunpack.c.l.b16 %v2225
  %v3252 = vunpack.c.l.b16 %v2226
  %v3253 = vunpack.c.l.b16 %v2227
  %v3254 = vunpack.c.l.b16 %v2228
  %v3255 = vpack.c.b16 %v2551, %v3223
  %v3256 = vpack.c.b16 %v2553, %v3224
  %v3257 = vpack.c.b16 %v2555, %v3225
  %v3258 = vpack.c.b16 %v2557, %v3226
  %v3259 = vpack.c.b16 %v2559, %v3227
  %v3260 = vpack.c.b16 %v2561, %v3228
  %v3261 = vpack.c.b16 %v2563, %v3229
  %v3262 = vpack.c.b16 %v2565, %v3230
  %v3263 = vpack.c.b16 %v2567, %v3231
  %v3264 = vpack.c.b16 %v2569, %v3232
  %v3265 = vpack.c.b16 %v2571, %v3233
  %v3266 = vpack.c.b16 %v2573, %v3234
  %v3267 = vpack.c.b16 %v2575, %v3235
  %v3268 = vpack.c.b16 %v2577, %v3236
  %v3269 = vpack.c.b16 %v2579, %v3237
  %v3270 = vpack.c.b16 %v2581, %v3238
  %v3271 = vpack.c.b16 %v2583, %v3239
  %v3272 = vpack.c.b16 %v2585, %v3240
  %v3273 = vpack.c.b16 %v2587, %v3241
  %v3274 = vpack.c.b16 %v2589, %v3242
  %v3275 = vpack.c.b16 %v2591, %v3243
  %v3276 = vpack.c.b16 %v2593, %v3244
  %v3277 = vpack.c.b16 %v2595, %v3245
  %v3278 = vpack.c.b16 %v2597, %v3246
  %v3279 = vpack.c.b16 %v2599, %v3247
  %v3280 = vpack.c.b16 %v2601, %v3248
  %v3281 = vpack.c.b16 %v2603, %v3249
  %v3282 = vpack.c.b16 %v2605, %v3250
  %v3283 = vpack.c.b16 %v2607, %v3251
  %v3284 = vpack.c.b16 %v2609, %v3252
  %v3285 = vpack.c.b16 %v2611, %v3253
  %v3286 = vpack.c.b16 %v2613, %v3254
  %vm3287 = vcmask 1046528
  %v3288 = vrot.slane %v3255, 1
  %v3289 = vrot.slane %v2710, 1
  %v3290 = vsel %vm3287, %v3288, %v3289
  %v3291 = vrot.slane %v3256, 1
  %v3292 = vrot.slane %v2711, 1
  %v3293 = vsel %vm3287, %v3291, %v3292
  %v3294 = vrot.slane %v3257, 1
  %v3295 = vrot.slane %v2712, 1
  %v3296 = vsel %vm3287, %v3294, %v3295
  %v3297 = vrot.slane %v3258, 1
  %v3298 = vrot.slane %v2713, 1
  %v3299 = vsel %vm3287, %v3297, %v3298
  %v3300 = vrot.slane %v3259, 1
  %v3301 = vrot.slane %v2714, 1
  %v3302 = vsel %vm3287, %v3300, %v3301
  %v3303 = vrot.slane %v3260, 1
  %v3304 = vrot.slane %v2715, 1
  %v3305 = vsel %vm3287, %v3303, %v3304
  %v3306 = vrot.slane %v3261, 1
  %v3307 = vrot.slane %v2716, 1
  %v3308 = vsel %vm3287, %v3306, %v3307
  %v3309 = vrot.slane %v3262, 1
  %v3310 = vrot.slane %v2717, 1
  %v3311 = vsel %vm3287, %v3309, %v3310
  %v3312 = vrot.slane %v3263, 1
  %v3313 = vrot.slane %v2718, 1
  %v3314 = vsel %vm3287, %v3312, %v3313
  %v3315 = vrot.slane %v3264, 1
  %v3316 = vrot.slane %v2719, 1
  %v3317 = vsel %vm3287, %v3315, %v3316
  %v3318 = vrot.slane %v3265, 1
  %v3319 = vrot.slane %v2720, 1
  %v3320 = vsel %vm3287, %v3318, %v3319
  %v3321 = vrot.slane %v3266, 1
  %v3322 = vrot.slane %v2721, 1
  %v3323 = vsel %vm3287, %v3321, %v3322
  %v3324 = vrot.slane %v3267, 1
  %v3325 = vrot.slane %v2722, 1
  %v3326 = vsel %vm3287, %v3324, %v3325
  %v3327 = vrot.slane %v3268, 1
  %v3328 = vrot.slane %v2723, 1
  %v3329 = vsel %vm3287, %v3327, %v3328
  %v3330 = vrot.slane %v3269, 1
  %v3331 = vrot.slane %v2724, 1
  %v3332 = vsel %vm3287, %v3330, %v3331
  %v3333 = vrot.slane %v3270, 1
  %v3334 = vrot.slane %v2725, 1
  %v3335 = vsel %vm3287, %v3333, %v3334
  %v3336 = vrot.slane %v3271, 1
  %v3337 = vrot.slane %v2726, 1
  %v3338 = vsel %vm3287, %v3336, %v3337
  %v3339 = vrot.slane %v3272, 1
  %v3340 = vrot.slane %v2727, 1
  %v3341 = vsel %vm3287, %v3339, %v3340
  %v3342 = vrot.slane %v3273, 1
  %v3343 = vrot.slane %v2728, 1
  %v3344 = vsel %vm3287, %v3342, %v3343
  %v3345 = vrot.slane %v3274, 1
  %v3346 = vrot.slane %v2729, 1
  %v3347 = vsel %vm3287, %v3345, %v3346
  %v3348 = vrot.slane %v3275, 1
  %v3349 = vrot.slane %v2730, 1
  %v3350 = vsel %vm3287, %v3348, %v3349
  %v3351 = vrot.slane %v3276, 1
  %v3352 = vrot.slane %v2731, 1
  %v3353 = vsel %vm3287, %v3351, %v3352
  %v3354 = vrot.slane %v3277, 1
  %v3355 = vrot.slane %v2732, 1
  %v3356 = vsel %vm3287, %v3354, %v3355
  %v3357 = vrot.slane %v3278, 1
  %v3358 = vrot.slane %v2733, 1
  %v3359 = vsel %vm3287, %v3357, %v3358
  %v3360 = vrot.slane %v3279, 1
  %v3361 = vrot.slane %v2734, 1
  %v3362 = vsel %vm3287, %v3360, %v3361
  %v3363 = vrot.slane %v3280, 1
  %v3364 = vrot.slane %v2735, 1
  %v3365 = vsel %vm3287, %v3363, %v3364
  %v3366 = vrot.slane %v3281, 1
  %v3367 = vrot.slane %v2736, 1
  %v3368 = vsel %vm3287, %v3366, %v3367
  %v3369 = vrot.slane %v3282, 1
  %v3370 = vrot.slane %v2737, 1
  %v3371 = vsel %vm3287, %v3369, %v3370
  %v3372 = vrot.slane %v3283, 1
  %v3373 = vrot.slane %v2738, 1
  %v3374 = vsel %vm3287, %v3372, %v3373
  %v3375 = vrot.slane %v3284, 1
  %v3376 = vrot.slane %v2739, 1
  %v3377 = vsel %vm3287, %v3375, %v3376
  %v3378 = vrot.slane %v3285, 1
  %v3379 = vrot.slane %v2740, 1
  %v3380 = vsel %vm3287, %v3378, %v3379
  %v3381 = vrot.slane %v3286, 1
  %v3382 = vrot.slane %v2741, 1
  %v3383 = vsel %vm3287, %v3381, %v3382
  %3384 = vrot.lane.b32.xlu0 %v3290, 32
  %v3385 = vpop.permute.xlu0 %3384
  %3386 = vrot.lane.b32.xlu0 %v3293, 32
  %v3387 = vpop.permute.xlu0 %3386
  %3388 = vrot.lane.b32.xlu0 %v3296, 32
  %v3389 = vpop.permute.xlu0 %3388
  %3390 = vrot.lane.b32.xlu0 %v3299, 32
  %v3391 = vpop.permute.xlu0 %3390
  %3392 = vrot.lane.b32.xlu0 %v3302, 32
  %v3393 = vpop.permute.xlu0 %3392
  %3394 = vrot.lane.b32.xlu0 %v3305, 32
  %v3395 = vpop.permute.xlu0 %3394
  %3396 = vrot.lane.b32.xlu0 %v3308, 32
  %v3397 = vpop.permute.xlu0 %3396
  %3398 = vrot.lane.b32.xlu0 %v3311, 32
  %v3399 = vpop.permute.xlu0 %3398
  %3400 = vrot.lane.b32.xlu0 %v3314, 32
  %v3401 = vpop.permute.xlu0 %3400
  %3402 = vrot.lane.b32.xlu0 %v3317, 32
  %v3403 = vpop.permute.xlu0 %3402
  %3404 = vrot.lane.b32.xlu0 %v3320, 32
  %v3405 = vpop.permute.xlu0 %3404
  %3406 = vrot.lane.b32.xlu0 %v3323, 32
  %v3407 = vpop.permute.xlu0 %3406
  %3408 = vrot.lane.b32.xlu0 %v3326, 32
  %v3409 = vpop.permute.xlu0 %3408
  %3410 = vrot.lane.b32.xlu0 %v3329, 32
  %v3411 = vpop.permute.xlu0 %3410
  %3412 = vrot.lane.b32.xlu0 %v3332, 32
  %v3413 = vpop.permute.xlu0 %3412
  %3414 = vrot.lane.b32.xlu0 %v3335, 32
  %v3415 = vpop.permute.xlu0 %3414
  %3416 = vrot.lane.b32.xlu0 %v3338, 32
  %v3417 = vpop.permute.xlu0 %3416
  %3418 = vrot.lane.b32.xlu0 %v3341, 32
  %v3419 = vpop.permute.xlu0 %3418
  %3420 = vrot.lane.b32.xlu0 %v3344, 32
  %v3421 = vpop.permute.xlu0 %3420
  %3422 = vrot.lane.b32.xlu0 %v3347, 32
  %v3423 = vpop.permute.xlu0 %3422
  %3424 = vrot.lane.b32.xlu0 %v3350, 32
  %v3425 = vpop.permute.xlu0 %3424
  %3426 = vrot.lane.b32.xlu0 %v3353, 32
  %v3427 = vpop.permute.xlu0 %3426
  %3428 = vrot.lane.b32.xlu0 %v3356, 32
  %v3429 = vpop.permute.xlu0 %3428
  %3430 = vrot.lane.b32.xlu0 %v3359, 32
  %v3431 = vpop.permute.xlu0 %3430
  %3432 = vrot.lane.b32.xlu0 %v3362, 32
  %v3433 = vpop.permute.xlu0 %3432
  %3434 = vrot.lane.b32.xlu0 %v3365, 32
  %v3435 = vpop.permute.xlu0 %3434
  %3436 = vrot.lane.b32.xlu0 %v3368, 32
  %v3437 = vpop.permute.xlu0 %3436
  %3438 = vrot.lane.b32.xlu0 %v3371, 32
  %v3439 = vpop.permute.xlu0 %3438
  %3440 = vrot.lane.b32.xlu0 %v3374, 32
  %v3441 = vpop.permute.xlu0 %3440
  %3442 = vrot.lane.b32.xlu0 %v3377, 32
  %v3443 = vpop.permute.xlu0 %3442
  %3444 = vrot.lane.b32.xlu0 %v3380, 32
  %v3445 = vpop.permute.xlu0 %3444
  %3446 = vrot.lane.b32.xlu0 %v3383, 32
  %v3447 = vpop.permute.xlu0 %3446
  %v3512 = vunpack.c.l.b16 %v2229
  %v3513 = vunpack.c.l.b16 %v2230
  %v3514 = vunpack.c.l.b16 %v2231
  %v3515 = vunpack.c.l.b16 %v2232
  %v3516 = vunpack.c.l.b16 %v2233
  %v3517 = vunpack.c.l.b16 %v2234
  %v3518 = vunpack.c.l.b16 %v2235
  %v3519 = vunpack.c.l.b16 %v2236
  %v3520 = vunpack.c.l.b16 %v2237
  %v3521 = vunpack.c.l.b16 %v2238
  %v3522 = vunpack.c.l.b16 %v2239
  %v3523 = vunpack.c.l.b16 %v2240
  %v3524 = vunpack.c.l.b16 %v2241
  %v3525 = vunpack.c.l.b16 %v2242
  %v3526 = vunpack.c.l.b16 %v2243
  %v3527 = vunpack.c.l.b16 %v2244
  %v3528 = vunpack.c.l.b16 %v2245
  %v3529 = vunpack.c.l.b16 %v2246
  %v3530 = vunpack.c.l.b16 %v2247
  %v3531 = vunpack.c.l.b16 %v2248
  %v3532 = vunpack.c.l.b16 %v2249
  %v3533 = vunpack.c.l.b16 %v2250
  %v3534 = vunpack.c.l.b16 %v2251
  %v3535 = vunpack.c.l.b16 %v2252
  %v3536 = vunpack.c.l.b16 %v2253
  %v3537 = vunpack.c.l.b16 %v2254
  %v3538 = vunpack.c.l.b16 %v2255
  %v3539 = vunpack.c.l.b16 %v2256
  %v3540 = vunpack.c.l.b16 %v2257
  %v3541 = vunpack.c.l.b16 %v2258
  %v3542 = vunpack.c.l.b16 %v2259
  %v3543 = vunpack.c.l.b16 %v2260
  %v3544 = vunpack.c.l.b16 %v2261
  %v3545 = vunpack.c.l.b16 %v2262
  %v3546 = vunpack.c.l.b16 %v2263
  %v3547 = vunpack.c.l.b16 %v2264
  %v3548 = vunpack.c.l.b16 %v2265
  %v3549 = vunpack.c.l.b16 %v2266
  %v3550 = vunpack.c.l.b16 %v2267
  %v3551 = vunpack.c.l.b16 %v2268
  %v3552 = vunpack.c.l.b16 %v2269
  %v3553 = vunpack.c.l.b16 %v2270
  %v3554 = vunpack.c.l.b16 %v2271
  %v3555 = vunpack.c.l.b16 %v2272
  %v3556 = vunpack.c.l.b16 %v2273
  %v3557 = vunpack.c.l.b16 %v2274
  %v3558 = vunpack.c.l.b16 %v2275
  %v3559 = vunpack.c.l.b16 %v2276
  %v3560 = vunpack.c.l.b16 %v2277
  %v3561 = vunpack.c.l.b16 %v2278
  %v3562 = vunpack.c.l.b16 %v2279
  %v3563 = vunpack.c.l.b16 %v2280
  %v3564 = vunpack.c.l.b16 %v2281
  %v3565 = vunpack.c.l.b16 %v2282
  %v3566 = vunpack.c.l.b16 %v2283
  %v3567 = vunpack.c.l.b16 %v2284
  %v3568 = vunpack.c.l.b16 %v2285
  %v3569 = vunpack.c.l.b16 %v2286
  %v3570 = vunpack.c.l.b16 %v2287
  %v3571 = vunpack.c.l.b16 %v2288
  %v3572 = vunpack.c.l.b16 %v2289
  %v3573 = vunpack.c.l.b16 %v2290
  %v3574 = vunpack.c.l.b16 %v2291
  %v3575 = vunpack.c.l.b16 %v2292
  %v3576 = vpack.c.b16 %v3513, %v3512
  %v3577 = vpack.c.b16 %v3515, %v3514
  %v3578 = vpack.c.b16 %v3517, %v3516
  %v3579 = vpack.c.b16 %v3519, %v3518
  %v3580 = vpack.c.b16 %v3521, %v3520
  %v3581 = vpack.c.b16 %v3523, %v3522
  %v3582 = vpack.c.b16 %v3525, %v3524
  %v3583 = vpack.c.b16 %v3527, %v3526
  %v3584 = vpack.c.b16 %v3529, %v3528
  %v3585 = vpack.c.b16 %v3531, %v3530
  %v3586 = vpack.c.b16 %v3533, %v3532
  %v3587 = vpack.c.b16 %v3535, %v3534
  %v3588 = vpack.c.b16 %v3537, %v3536
  %v3589 = vpack.c.b16 %v3539, %v3538
  %v3590 = vpack.c.b16 %v3541, %v3540
  %v3591 = vpack.c.b16 %v3543, %v3542
  %v3592 = vpack.c.b16 %v3545, %v3544
  %v3593 = vpack.c.b16 %v3547, %v3546
  %v3594 = vpack.c.b16 %v3549, %v3548
  %v3595 = vpack.c.b16 %v3551, %v3550
  %v3596 = vpack.c.b16 %v3553, %v3552
  %v3597 = vpack.c.b16 %v3555, %v3554
  %v3598 = vpack.c.b16 %v3557, %v3556
  %v3599 = vpack.c.b16 %v3559, %v3558
  %v3600 = vpack.c.b16 %v3561, %v3560
  %v3601 = vpack.c.b16 %v3563, %v3562
  %v3602 = vpack.c.b16 %v3565, %v3564
  %v3603 = vpack.c.b16 %v3567, %v3566
  %v3604 = vpack.c.b16 %v3569, %v3568
  %v3605 = vpack.c.b16 %v3571, %v3570
  %v3606 = vpack.c.b16 %v3573, %v3572
  %v3607 = vpack.c.b16 %v3575, %v3574
  %3608 = vrot.lane.b32.xlu0 %v3576, 48
  %v3609 = vpop.permute.xlu0 %3608
  %3610 = vrot.lane.b32.xlu0 %v3577, 48
  %v3611 = vpop.permute.xlu0 %3610
  %3612 = vrot.lane.b32.xlu0 %v3578, 48
  %v3613 = vpop.permute.xlu0 %3612
  %3614 = vrot.lane.b32.xlu0 %v3579, 48
  %v3615 = vpop.permute.xlu0 %3614
  %3616 = vrot.lane.b32.xlu0 %v3580, 48
  %v3617 = vpop.permute.xlu0 %3616
  %3618 = vrot.lane.b32.xlu0 %v3581, 48
  %v3619 = vpop.permute.xlu0 %3618
  %3620 = vrot.lane.b32.xlu0 %v3582, 48
  %v3621 = vpop.permute.xlu0 %3620
  %3622 = vrot.lane.b32.xlu0 %v3583, 48
  %v3623 = vpop.permute.xlu0 %3622
  %3624 = vrot.lane.b32.xlu0 %v3584, 48
  %v3625 = vpop.permute.xlu0 %3624
  %3626 = vrot.lane.b32.xlu0 %v3585, 48
  %v3627 = vpop.permute.xlu0 %3626
  %3628 = vrot.lane.b32.xlu0 %v3586, 48
  %v3629 = vpop.permute.xlu0 %3628
  %3630 = vrot.lane.b32.xlu0 %v3587, 48
  %v3631 = vpop.permute.xlu0 %3630
  %3632 = vrot.lane.b32.xlu0 %v3588, 48
  %v3633 = vpop.permute.xlu0 %3632
  %3634 = vrot.lane.b32.xlu0 %v3589, 48
  %v3635 = vpop.permute.xlu0 %3634
  %3636 = vrot.lane.b32.xlu0 %v3590, 48
  %v3637 = vpop.permute.xlu0 %3636
  %3638 = vrot.lane.b32.xlu0 %v3591, 48
  %v3639 = vpop.permute.xlu0 %3638
  %3640 = vrot.lane.b32.xlu0 %v3592, 48
  %v3641 = vpop.permute.xlu0 %3640
  %3642 = vrot.lane.b32.xlu0 %v3593, 48
  %v3643 = vpop.permute.xlu0 %3642
  %3644 = vrot.lane.b32.xlu0 %v3594, 48
  %v3645 = vpop.permute.xlu0 %3644
  %3646 = vrot.lane.b32.xlu0 %v3595, 48
  %v3647 = vpop.permute.xlu0 %3646
  %3648 = vrot.lane.b32.xlu0 %v3596, 48
  %v3649 = vpop.permute.xlu0 %3648
  %3650 = vrot.lane.b32.xlu0 %v3597, 48
  %v3651 = vpop.permute.xlu0 %3650
  %3652 = vrot.lane.b32.xlu0 %v3598, 48
  %v3653 = vpop.permute.xlu0 %3652
  %3654 = vrot.lane.b32.xlu0 %v3599, 48
  %v3655 = vpop.permute.xlu0 %3654
  %3656 = vrot.lane.b32.xlu0 %v3600, 48
  %v3657 = vpop.permute.xlu0 %3656
  %3658 = vrot.lane.b32.xlu0 %v3601, 48
  %v3659 = vpop.permute.xlu0 %3658
  %3660 = vrot.lane.b32.xlu0 %v3602, 48
  %v3661 = vpop.permute.xlu0 %3660
  %3662 = vrot.lane.b32.xlu0 %v3603, 48
  %v3663 = vpop.permute.xlu0 %3662
  %3664 = vrot.lane.b32.xlu0 %v3604, 48
  %v3665 = vpop.permute.xlu0 %3664
  %3666 = vrot.lane.b32.xlu0 %v3605, 48
  %v3667 = vpop.permute.xlu0 %3666
  %3668 = vrot.lane.b32.xlu0 %v3606, 48
  %v3669 = vpop.permute.xlu0 %3668
  %3670 = vrot.lane.b32.xlu0 %v3607, 48
  %v3671 = vpop.permute.xlu0 %3670
  %v3704 = vunpack.c.l.b16 %v2293
  %v3705 = vunpack.c.l.b16 %v2294
  %v3706 = vunpack.c.l.b16 %v2295
  %v3707 = vunpack.c.l.b16 %v2296
  %v3708 = vunpack.c.l.b16 %v2297
  %v3709 = vunpack.c.l.b16 %v2298
  %v3710 = vunpack.c.l.b16 %v2299
  %v3711 = vunpack.c.l.b16 %v2300
  %v3712 = vunpack.c.l.b16 %v2301
  %v3713 = vunpack.c.l.b16 %v2302
  %v3714 = vunpack.c.l.b16 %v2303
  %v3715 = vunpack.c.l.b16 %v2304
  %v3716 = vunpack.c.l.b16 %v2305
  %v3717 = vunpack.c.l.b16 %v2306
  %v3718 = vunpack.c.l.b16 %v2307
  %v3719 = vunpack.c.l.b16 %v2308
  %v3720 = vunpack.c.l.b16 %v2309
  %v3721 = vunpack.c.l.b16 %v2310
  %v3722 = vunpack.c.l.b16 %v2311
  %v3723 = vunpack.c.l.b16 %v2312
  %v3724 = vunpack.c.l.b16 %v2313
  %v3725 = vunpack.c.l.b16 %v2314
  %v3726 = vunpack.c.l.b16 %v2315
  %v3727 = vunpack.c.l.b16 %v2316
  %v3728 = vunpack.c.l.b16 %v2317
  %v3729 = vunpack.c.l.b16 %v2318
  %v3730 = vunpack.c.l.b16 %v2319
  %v3731 = vunpack.c.l.b16 %v2320
  %v3732 = vunpack.c.l.b16 %v2321
  %v3733 = vunpack.c.l.b16 %v2322
  %v3734 = vunpack.c.l.b16 %v2323
  %v3735 = vunpack.c.l.b16 %v2324
  %v3736 = vpack.c.b16 %v3704, %v3704
  %v3737 = vpack.c.b16 %v3705, %v3705
  %v3738 = vpack.c.b16 %v3706, %v3706
  %v3739 = vpack.c.b16 %v3707, %v3707
  %v3740 = vpack.c.b16 %v3708, %v3708
  %v3741 = vpack.c.b16 %v3709, %v3709
  %v3742 = vpack.c.b16 %v3710, %v3710
  %v3743 = vpack.c.b16 %v3711, %v3711
  %v3744 = vpack.c.b16 %v3712, %v3712
  %v3745 = vpack.c.b16 %v3713, %v3713
  %v3746 = vpack.c.b16 %v3714, %v3714
  %v3747 = vpack.c.b16 %v3715, %v3715
  %v3748 = vpack.c.b16 %v3716, %v3716
  %v3749 = vpack.c.b16 %v3717, %v3717
  %v3750 = vpack.c.b16 %v3718, %v3718
  %v3751 = vpack.c.b16 %v3719, %v3719
  %v3752 = vpack.c.b16 %v3720, %v3720
  %v3753 = vpack.c.b16 %v3721, %v3721
  %v3754 = vpack.c.b16 %v3722, %v3722
  %v3755 = vpack.c.b16 %v3723, %v3723
  %v3756 = vpack.c.b16 %v3724, %v3724
  %v3757 = vpack.c.b16 %v3725, %v3725
  %v3758 = vpack.c.b16 %v3726, %v3726
  %v3759 = vpack.c.b16 %v3727, %v3727
  %v3760 = vpack.c.b16 %v3728, %v3728
  %v3761 = vpack.c.b16 %v3729, %v3729
  %v3762 = vpack.c.b16 %v3730, %v3730
  %v3763 = vpack.c.b16 %v3731, %v3731
  %v3764 = vpack.c.b16 %v3732, %v3732
  %v3765 = vpack.c.b16 %v3733, %v3733
  %v3766 = vpack.c.b16 %v3734, %v3734
  %v3767 = vpack.c.b16 %v3735, %v3735
  %v3769 = vshrl.u32 %v3576, 16
  %v3771 = vshll.u32 %v3576, 16
  %v3773 = vrot.slane %v3771, 1
  %v3774 = vor.u32 %v3769, %v3773
  %v3776 = vshll.u32 %v3736, 16
  %v3778 = vrot.slane %v3776, 1
  %v3779 = vsel %vm2742, %v3774, %v3778
  %v3781 = vshrl.u32 %v3577, 16
  %v3783 = vshll.u32 %v3577, 16
  %v3785 = vrot.slane %v3783, 1
  %v3786 = vor.u32 %v3781, %v3785
  %v3788 = vshll.u32 %v3737, 16
  %v3790 = vrot.slane %v3788, 1
  %v3791 = vsel %vm2742, %v3786, %v3790
  %v3793 = vshrl.u32 %v3578, 16
  %v3795 = vshll.u32 %v3578, 16
  %v3797 = vrot.slane %v3795, 1
  %v3798 = vor.u32 %v3793, %v3797
  %v3800 = vshll.u32 %v3738, 16
  %v3802 = vrot.slane %v3800, 1
  %v3803 = vsel %vm2742, %v3798, %v3802
  %v3805 = vshrl.u32 %v3579, 16
  %v3807 = vshll.u32 %v3579, 16
  %v3809 = vrot.slane %v3807, 1
  %v3810 = vor.u32 %v3805, %v3809
  %v3812 = vshll.u32 %v3739, 16
  %v3814 = vrot.slane %v3812, 1
  %v3815 = vsel %vm2742, %v3810, %v3814
  %v3817 = vshrl.u32 %v3580, 16
  %v3819 = vshll.u32 %v3580, 16
  %v3821 = vrot.slane %v3819, 1
  %v3822 = vor.u32 %v3817, %v3821
  %v3824 = vshll.u32 %v3740, 16
  %v3826 = vrot.slane %v3824, 1
  %v3827 = vsel %vm2742, %v3822, %v3826
  %v3829 = vshrl.u32 %v3581, 16
  %v3831 = vshll.u32 %v3581, 16
  %v3833 = vrot.slane %v3831, 1
  %v3834 = vor.u32 %v3829, %v3833
  %v3836 = vshll.u32 %v3741, 16
  %v3838 = vrot.slane %v3836, 1
  %v3839 = vsel %vm2742, %v3834, %v3838
  %v3841 = vshrl.u32 %v3582, 16
  %v3843 = vshll.u32 %v3582, 16
  %v3845 = vrot.slane %v3843, 1
  %v3846 = vor.u32 %v3841, %v3845
  %v3848 = vshll.u32 %v3742, 16
  %v3850 = vrot.slane %v3848, 1
  %v3851 = vsel %vm2742, %v3846, %v3850
  %v3853 = vshrl.u32 %v3583, 16
  %v3855 = vshll.u32 %v3583, 16
  %v3857 = vrot.slane %v3855, 1
  %v3858 = vor.u32 %v3853, %v3857
  %v3860 = vshll.u32 %v3743, 16
  %v3862 = vrot.slane %v3860, 1
  %v3863 = vsel %vm2742, %v3858, %v3862
  %v3865 = vshrl.u32 %v3584, 16
  %v3867 = vshll.u32 %v3584, 16
  %v3869 = vrot.slane %v3867, 1
  %v3870 = vor.u32 %v3865, %v3869
  %v3872 = vshll.u32 %v3744, 16
  %v3874 = vrot.slane %v3872, 1
  %v3875 = vsel %vm2742, %v3870, %v3874
  %v3877 = vshrl.u32 %v3585, 16
  %v3879 = vshll.u32 %v3585, 16
  %v3881 = vrot.slane %v3879, 1
  %v3882 = vor.u32 %v3877, %v3881
  %v3884 = vshll.u32 %v3745, 16
  %v3886 = vrot.slane %v3884, 1
  %v3887 = vsel %vm2742, %v3882, %v3886
  %v3889 = vshrl.u32 %v3586, 16
  %v3891 = vshll.u32 %v3586, 16
  %v3893 = vrot.slane %v3891, 1
  %v3894 = vor.u32 %v3889, %v3893
  %v3896 = vshll.u32 %v3746, 16
  %v3898 = vrot.slane %v3896, 1
  %v3899 = vsel %vm2742, %v3894, %v3898
  %v3901 = vshrl.u32 %v3587, 16
  %v3903 = vshll.u32 %v3587, 16
  %v3905 = vrot.slane %v3903, 1
  %v3906 = vor.u32 %v3901, %v3905
  %v3908 = vshll.u32 %v3747, 16
  %v3910 = vrot.slane %v3908, 1
  %v3911 = vsel %vm2742, %v3906, %v3910
  %v3913 = vshrl.u32 %v3588, 16
  %v3915 = vshll.u32 %v3588, 16
  %v3917 = vrot.slane %v3915, 1
  %v3918 = vor.u32 %v3913, %v3917
  %v3920 = vshll.u32 %v3748, 16
  %v3922 = vrot.slane %v3920, 1
  %v3923 = vsel %vm2742, %v3918, %v3922
  %v3925 = vshrl.u32 %v3589, 16
  %v3927 = vshll.u32 %v3589, 16
  %v3929 = vrot.slane %v3927, 1
  %v3930 = vor.u32 %v3925, %v3929
  %v3932 = vshll.u32 %v3749, 16
  %v3934 = vrot.slane %v3932, 1
  %v3935 = vsel %vm2742, %v3930, %v3934
  %v3937 = vshrl.u32 %v3590, 16
  %v3939 = vshll.u32 %v3590, 16
  %v3941 = vrot.slane %v3939, 1
  %v3942 = vor.u32 %v3937, %v3941
  %v3944 = vshll.u32 %v3750, 16
  %v3946 = vrot.slane %v3944, 1
  %v3947 = vsel %vm2742, %v3942, %v3946
  %v3949 = vshrl.u32 %v3591, 16
  %v3951 = vshll.u32 %v3591, 16
  %v3953 = vrot.slane %v3951, 1
  %v3954 = vor.u32 %v3949, %v3953
  %v3956 = vshll.u32 %v3751, 16
  %v3958 = vrot.slane %v3956, 1
  %v3959 = vsel %vm2742, %v3954, %v3958
  %v3961 = vshrl.u32 %v3592, 16
  %v3963 = vshll.u32 %v3592, 16
  %v3965 = vrot.slane %v3963, 1
  %v3966 = vor.u32 %v3961, %v3965
  %v3968 = vshll.u32 %v3752, 16
  %v3970 = vrot.slane %v3968, 1
  %v3971 = vsel %vm2742, %v3966, %v3970
  %v3973 = vshrl.u32 %v3593, 16
  %v3975 = vshll.u32 %v3593, 16
  %v3977 = vrot.slane %v3975, 1
  %v3978 = vor.u32 %v3973, %v3977
  %v3980 = vshll.u32 %v3753, 16
  %v3982 = vrot.slane %v3980, 1
  %v3983 = vsel %vm2742, %v3978, %v3982
  %v3985 = vshrl.u32 %v3594, 16
  %v3987 = vshll.u32 %v3594, 16
  %v3989 = vrot.slane %v3987, 1
  %v3990 = vor.u32 %v3985, %v3989
  %v3992 = vshll.u32 %v3754, 16
  %v3994 = vrot.slane %v3992, 1
  %v3995 = vsel %vm2742, %v3990, %v3994
  %v3997 = vshrl.u32 %v3595, 16
  %v3999 = vshll.u32 %v3595, 16
  %v4001 = vrot.slane %v3999, 1
  %v4002 = vor.u32 %v3997, %v4001
  %v4004 = vshll.u32 %v3755, 16
  %v4006 = vrot.slane %v4004, 1
  %v4007 = vsel %vm2742, %v4002, %v4006
  %v4009 = vshrl.u32 %v3596, 16
  %v4011 = vshll.u32 %v3596, 16
  %v4013 = vrot.slane %v4011, 1
  %v4014 = vor.u32 %v4009, %v4013
  %v4016 = vshll.u32 %v3756, 16
  %v4018 = vrot.slane %v4016, 1
  %v4019 = vsel %vm2742, %v4014, %v4018
  %v4021 = vshrl.u32 %v3597, 16
  %v4023 = vshll.u32 %v3597, 16
  %v4025 = vrot.slane %v4023, 1
  %v4026 = vor.u32 %v4021, %v4025
  %v4028 = vshll.u32 %v3757, 16
  %v4030 = vrot.slane %v4028, 1
  %v4031 = vsel %vm2742, %v4026, %v4030
  %v4033 = vshrl.u32 %v3598, 16
  %v4035 = vshll.u32 %v3598, 16
  %v4037 = vrot.slane %v4035, 1
  %v4038 = vor.u32 %v4033, %v4037
  %v4040 = vshll.u32 %v3758, 16
  %v4042 = vrot.slane %v4040, 1
  %v4043 = vsel %vm2742, %v4038, %v4042
  %v4045 = vshrl.u32 %v3599, 16
  %v4047 = vshll.u32 %v3599, 16
  %v4049 = vrot.slane %v4047, 1
  %v4050 = vor.u32 %v4045, %v4049
  %v4052 = vshll.u32 %v3759, 16
  %v4054 = vrot.slane %v4052, 1
  %v4055 = vsel %vm2742, %v4050, %v4054
  %v4057 = vshrl.u32 %v3600, 16
  %v4059 = vshll.u32 %v3600, 16
  %v4061 = vrot.slane %v4059, 1
  %v4062 = vor.u32 %v4057, %v4061
  %v4064 = vshll.u32 %v3760, 16
  %v4066 = vrot.slane %v4064, 1
  %v4067 = vsel %vm2742, %v4062, %v4066
  %v4069 = vshrl.u32 %v3601, 16
  %v4071 = vshll.u32 %v3601, 16
  %v4073 = vrot.slane %v4071, 1
  %v4074 = vor.u32 %v4069, %v4073
  %v4076 = vshll.u32 %v3761, 16
  %v4078 = vrot.slane %v4076, 1
  %v4079 = vsel %vm2742, %v4074, %v4078
  %v4081 = vshrl.u32 %v3602, 16
  %v4083 = vshll.u32 %v3602, 16
  %v4085 = vrot.slane %v4083, 1
  %v4086 = vor.u32 %v4081, %v4085
  %v4088 = vshll.u32 %v3762, 16
  %v4090 = vrot.slane %v4088, 1
  %v4091 = vsel %vm2742, %v4086, %v4090
  %v4093 = vshrl.u32 %v3603, 16
  %v4095 = vshll.u32 %v3603, 16
  %v4097 = vrot.slane %v4095, 1
  %v4098 = vor.u32 %v4093, %v4097
  %v4100 = vshll.u32 %v3763, 16
  %v4102 = vrot.slane %v4100, 1
  %v4103 = vsel %vm2742, %v4098, %v4102
  %v4105 = vshrl.u32 %v3604, 16
  %v4107 = vshll.u32 %v3604, 16
  %v4109 = vrot.slane %v4107, 1
  %v4110 = vor.u32 %v4105, %v4109
  %v4112 = vshll.u32 %v3764, 16
  %v4114 = vrot.slane %v4112, 1
  %v4115 = vsel %vm2742, %v4110, %v4114
  %v4117 = vshrl.u32 %v3605, 16
  %v4119 = vshll.u32 %v3605, 16
  %v4121 = vrot.slane %v4119, 1
  %v4122 = vor.u32 %v4117, %v4121
  %v4124 = vshll.u32 %v3765, 16
  %v4126 = vrot.slane %v4124, 1
  %v4127 = vsel %vm2742, %v4122, %v4126
  %v4129 = vshrl.u32 %v3606, 16
  %v4131 = vshll.u32 %v3606, 16
  %v4133 = vrot.slane %v4131, 1
  %v4134 = vor.u32 %v4129, %v4133
  %v4136 = vshll.u32 %v3766, 16
  %v4138 = vrot.slane %v4136, 1
  %v4139 = vsel %vm2742, %v4134, %v4138
  %v4141 = vshrl.u32 %v3607, 16
  %v4143 = vshll.u32 %v3607, 16
  %v4145 = vrot.slane %v4143, 1
  %v4146 = vor.u32 %v4141, %v4145
  %v4148 = vshll.u32 %v3767, 16
  %v4150 = vrot.slane %v4148, 1
  %v4151 = vsel %vm2742, %v4146, %v4150
  %4152 = vrot.lane.b32.xlu0 %v3779, 64
  %v4153 = vpop.permute.xlu0 %4152
  %4154 = vrot.lane.b32.xlu0 %v3791, 64
  %v4155 = vpop.permute.xlu0 %4154
  %4156 = vrot.lane.b32.xlu0 %v3803, 64
  %v4157 = vpop.permute.xlu0 %4156
  %4158 = vrot.lane.b32.xlu0 %v3815, 64
  %v4159 = vpop.permute.xlu0 %4158
  %4160 = vrot.lane.b32.xlu0 %v3827, 64
  %v4161 = vpop.permute.xlu0 %4160
  %4162 = vrot.lane.b32.xlu0 %v3839, 64
  %v4163 = vpop.permute.xlu0 %4162
  %4164 = vrot.lane.b32.xlu0 %v3851, 64
  %v4165 = vpop.permute.xlu0 %4164
  %4166 = vrot.lane.b32.xlu0 %v3863, 64
  %v4167 = vpop.permute.xlu0 %4166
  %4168 = vrot.lane.b32.xlu0 %v3875, 64
  %v4169 = vpop.permute.xlu0 %4168
  %4170 = vrot.lane.b32.xlu0 %v3887, 64
  %v4171 = vpop.permute.xlu0 %4170
  %4172 = vrot.lane.b32.xlu0 %v3899, 64
  %v4173 = vpop.permute.xlu0 %4172
  %4174 = vrot.lane.b32.xlu0 %v3911, 64
  %v4175 = vpop.permute.xlu0 %4174
  %4176 = vrot.lane.b32.xlu0 %v3923, 64
  %v4177 = vpop.permute.xlu0 %4176
  %4178 = vrot.lane.b32.xlu0 %v3935, 64
  %v4179 = vpop.permute.xlu0 %4178
  %4180 = vrot.lane.b32.xlu0 %v3947, 64
  %v4181 = vpop.permute.xlu0 %4180
  %4182 = vrot.lane.b32.xlu0 %v3959, 64
  %v4183 = vpop.permute.xlu0 %4182
  %4184 = vrot.lane.b32.xlu0 %v3971, 64
  %v4185 = vpop.permute.xlu0 %4184
  %4186 = vrot.lane.b32.xlu0 %v3983, 64
  %v4187 = vpop.permute.xlu0 %4186
  %4188 = vrot.lane.b32.xlu0 %v3995, 64
  %v4189 = vpop.permute.xlu0 %4188
  %4190 = vrot.lane.b32.xlu0 %v4007, 64
  %v4191 = vpop.permute.xlu0 %4190
  %4192 = vrot.lane.b32.xlu0 %v4019, 64
  %v4193 = vpop.permute.xlu0 %4192
  %4194 = vrot.lane.b32.xlu0 %v4031, 64
  %v4195 = vpop.permute.xlu0 %4194
  %4196 = vrot.lane.b32.xlu0 %v4043, 64
  %v4197 = vpop.permute.xlu0 %4196
  %4198 = vrot.lane.b32.xlu0 %v4055, 64
  %v4199 = vpop.permute.xlu0 %4198
  %4200 = vrot.lane.b32.xlu0 %v4067, 64
  %v4201 = vpop.permute.xlu0 %4200
  %4202 = vrot.lane.b32.xlu0 %v4079, 64
  %v4203 = vpop.permute.xlu0 %4202
  %4204 = vrot.lane.b32.xlu0 %v4091, 64
  %v4205 = vpop.permute.xlu0 %4204
  %4206 = vrot.lane.b32.xlu0 %v4103, 64
  %v4207 = vpop.permute.xlu0 %4206
  %4208 = vrot.lane.b32.xlu0 %v4115, 64
  %v4209 = vpop.permute.xlu0 %4208
  %4210 = vrot.lane.b32.xlu0 %v4127, 64
  %v4211 = vpop.permute.xlu0 %4210
  %4212 = vrot.lane.b32.xlu0 %v4139, 64
  %v4213 = vpop.permute.xlu0 %4212
  %4214 = vrot.lane.b32.xlu0 %v4151, 64
  %v4215 = vpop.permute.xlu0 %4214
  %v4248 = vunpack.c.l.b16 %v2325
  %v4249 = vunpack.c.l.b16 %v2326
  %v4250 = vunpack.c.l.b16 %v2327
  %v4251 = vunpack.c.l.b16 %v2328
  %v4252 = vunpack.c.l.b16 %v2329
  %v4253 = vunpack.c.l.b16 %v2330
  %v4254 = vunpack.c.l.b16 %v2331
  %v4255 = vunpack.c.l.b16 %v2332
  %v4256 = vunpack.c.l.b16 %v2333
  %v4257 = vunpack.c.l.b16 %v2334
  %v4258 = vunpack.c.l.b16 %v2335
  %v4259 = vunpack.c.l.b16 %v2336
  %v4260 = vunpack.c.l.b16 %v2337
  %v4261 = vunpack.c.l.b16 %v2338
  %v4262 = vunpack.c.l.b16 %v2339
  %v4263 = vunpack.c.l.b16 %v2340
  %v4264 = vunpack.c.l.b16 %v2341
  %v4265 = vunpack.c.l.b16 %v2342
  %v4266 = vunpack.c.l.b16 %v2343
  %v4267 = vunpack.c.l.b16 %v2344
  %v4268 = vunpack.c.l.b16 %v2345
  %v4269 = vunpack.c.l.b16 %v2346
  %v4270 = vunpack.c.l.b16 %v2347
  %v4271 = vunpack.c.l.b16 %v2348
  %v4272 = vunpack.c.l.b16 %v2349
  %v4273 = vunpack.c.l.b16 %v2350
  %v4274 = vunpack.c.l.b16 %v2351
  %v4275 = vunpack.c.l.b16 %v2352
  %v4276 = vunpack.c.l.b16 %v2353
  %v4277 = vunpack.c.l.b16 %v2354
  %v4278 = vunpack.c.l.b16 %v2355
  %v4279 = vunpack.c.l.b16 %v2356
  %v4280 = vpack.c.b16 %v3513, %v4248
  %v4281 = vpack.c.b16 %v3515, %v4249
  %v4282 = vpack.c.b16 %v3517, %v4250
  %v4283 = vpack.c.b16 %v3519, %v4251
  %v4284 = vpack.c.b16 %v3521, %v4252
  %v4285 = vpack.c.b16 %v3523, %v4253
  %v4286 = vpack.c.b16 %v3525, %v4254
  %v4287 = vpack.c.b16 %v3527, %v4255
  %v4288 = vpack.c.b16 %v3529, %v4256
  %v4289 = vpack.c.b16 %v3531, %v4257
  %v4290 = vpack.c.b16 %v3533, %v4258
  %v4291 = vpack.c.b16 %v3535, %v4259
  %v4292 = vpack.c.b16 %v3537, %v4260
  %v4293 = vpack.c.b16 %v3539, %v4261
  %v4294 = vpack.c.b16 %v3541, %v4262
  %v4295 = vpack.c.b16 %v3543, %v4263
  %v4296 = vpack.c.b16 %v3545, %v4264
  %v4297 = vpack.c.b16 %v3547, %v4265
  %v4298 = vpack.c.b16 %v3549, %v4266
  %v4299 = vpack.c.b16 %v3551, %v4267
  %v4300 = vpack.c.b16 %v3553, %v4268
  %v4301 = vpack.c.b16 %v3555, %v4269
  %v4302 = vpack.c.b16 %v3557, %v4270
  %v4303 = vpack.c.b16 %v3559, %v4271
  %v4304 = vpack.c.b16 %v3561, %v4272
  %v4305 = vpack.c.b16 %v3563, %v4273
  %v4306 = vpack.c.b16 %v3565, %v4274
  %v4307 = vpack.c.b16 %v3567, %v4275
  %v4308 = vpack.c.b16 %v3569, %v4276
  %v4309 = vpack.c.b16 %v3571, %v4277
  %v4310 = vpack.c.b16 %v3573, %v4278
  %v4311 = vpack.c.b16 %v3575, %v4279
  %v4312 = vrot.slane %v4280, 1
  %v4313 = vrot.slane %v3736, 1
  %v4314 = vsel %vm3287, %v4312, %v4313
  %v4315 = vrot.slane %v4281, 1
  %v4316 = vrot.slane %v3737, 1
  %v4317 = vsel %vm3287, %v4315, %v4316
  %v4318 = vrot.slane %v4282, 1
  %v4319 = vrot.slane %v3738, 1
  %v4320 = vsel %vm3287, %v4318, %v4319
  %v4321 = vrot.slane %v4283, 1
  %v4322 = vrot.slane %v3739, 1
  %v4323 = vsel %vm3287, %v4321, %v4322
  %v4324 = vrot.slane %v4284, 1
  %v4325 = vrot.slane %v3740, 1
  %v4326 = vsel %vm3287, %v4324, %v4325
  %v4327 = vrot.slane %v4285, 1
  %v4328 = vrot.slane %v3741, 1
  %v4329 = vsel %vm3287, %v4327, %v4328
  %v4330 = vrot.slane %v4286, 1
  %v4331 = vrot.slane %v3742, 1
  %v4332 = vsel %vm3287, %v4330, %v4331
  %v4333 = vrot.slane %v4287, 1
  %v4334 = vrot.slane %v3743, 1
  %v4335 = vsel %vm3287, %v4333, %v4334
  %v4336 = vrot.slane %v4288, 1
  %v4337 = vrot.slane %v3744, 1
  %v4338 = vsel %vm3287, %v4336, %v4337
  %v4339 = vrot.slane %v4289, 1
  %v4340 = vrot.slane %v3745, 1
  %v4341 = vsel %vm3287, %v4339, %v4340
  %v4342 = vrot.slane %v4290, 1
  %v4343 = vrot.slane %v3746, 1
  %v4344 = vsel %vm3287, %v4342, %v4343
  %v4345 = vrot.slane %v4291, 1
  %v4346 = vrot.slane %v3747, 1
  %v4347 = vsel %vm3287, %v4345, %v4346
  %v4348 = vrot.slane %v4292, 1
  %v4349 = vrot.slane %v3748, 1
  %v4350 = vsel %vm3287, %v4348, %v4349
  %v4351 = vrot.slane %v4293, 1
  %v4352 = vrot.slane %v3749, 1
  %v4353 = vsel %vm3287, %v4351, %v4352
  %v4354 = vrot.slane %v4294, 1
  %v4355 = vrot.slane %v3750, 1
  %v4356 = vsel %vm3287, %v4354, %v4355
  %v4357 = vrot.slane %v4295, 1
  %v4358 = vrot.slane %v3751, 1
  %v4359 = vsel %vm3287, %v4357, %v4358
  %v4360 = vrot.slane %v4296, 1
  %v4361 = vrot.slane %v3752, 1
  %v4362 = vsel %vm3287, %v4360, %v4361
  %v4363 = vrot.slane %v4297, 1
  %v4364 = vrot.slane %v3753, 1
  %v4365 = vsel %vm3287, %v4363, %v4364
  %v4366 = vrot.slane %v4298, 1
  %v4367 = vrot.slane %v3754, 1
  %v4368 = vsel %vm3287, %v4366, %v4367
  %v4369 = vrot.slane %v4299, 1
  %v4370 = vrot.slane %v3755, 1
  %v4371 = vsel %vm3287, %v4369, %v4370
  %v4372 = vrot.slane %v4300, 1
  %v4373 = vrot.slane %v3756, 1
  %v4374 = vsel %vm3287, %v4372, %v4373
  %v4375 = vrot.slane %v4301, 1
  %v4376 = vrot.slane %v3757, 1
  %v4377 = vsel %vm3287, %v4375, %v4376
  %v4378 = vrot.slane %v4302, 1
  %v4379 = vrot.slane %v3758, 1
  %v4380 = vsel %vm3287, %v4378, %v4379
  %v4381 = vrot.slane %v4303, 1
  %v4382 = vrot.slane %v3759, 1
  %v4383 = vsel %vm3287, %v4381, %v4382
  %v4384 = vrot.slane %v4304, 1
  %v4385 = vrot.slane %v3760, 1
  %v4386 = vsel %vm3287, %v4384, %v4385
  %v4387 = vrot.slane %v4305, 1
  %v4388 = vrot.slane %v3761, 1
  %v4389 = vsel %vm3287, %v4387, %v4388
  %v4390 = vrot.slane %v4306, 1
  %v4391 = vrot.slane %v3762, 1
  %v4392 = vsel %vm3287, %v4390, %v4391
  %v4393 = vrot.slane %v4307, 1
  %v4394 = vrot.slane %v3763, 1
  %v4395 = vsel %vm3287, %v4393, %v4394
  %v4396 = vrot.slane %v4308, 1
  %v4397 = vrot.slane %v3764, 1
  %v4398 = vsel %vm3287, %v4396, %v4397
  %v4399 = vrot.slane %v4309, 1
  %v4400 = vrot.slane %v3765, 1
  %v4401 = vsel %vm3287, %v4399, %v4400
  %v4402 = vrot.slane %v4310, 1
  %v4403 = vrot.slane %v3766, 1
  %v4404 = vsel %vm3287, %v4402, %v4403
  %v4405 = vrot.slane %v4311, 1
  %v4406 = vrot.slane %v3767, 1
  %v4407 = vsel %vm3287, %v4405, %v4406
  %4408 = vrot.lane.b32.xlu0 %v4314, 80
  %v4409 = vpop.permute.xlu0 %4408
  %4410 = vrot.lane.b32.xlu0 %v4317, 80
  %v4411 = vpop.permute.xlu0 %4410
  %4412 = vrot.lane.b32.xlu0 %v4320, 80
  %v4413 = vpop.permute.xlu0 %4412
  %4414 = vrot.lane.b32.xlu0 %v4323, 80
  %v4415 = vpop.permute.xlu0 %4414
  %4416 = vrot.lane.b32.xlu0 %v4326, 80
  %v4417 = vpop.permute.xlu0 %4416
  %4418 = vrot.lane.b32.xlu0 %v4329, 80
  %v4419 = vpop.permute.xlu0 %4418
  %4420 = vrot.lane.b32.xlu0 %v4332, 80
  %v4421 = vpop.permute.xlu0 %4420
  %4422 = vrot.lane.b32.xlu0 %v4335, 80
  %v4423 = vpop.permute.xlu0 %4422
  %4424 = vrot.lane.b32.xlu0 %v4338, 80
  %v4425 = vpop.permute.xlu0 %4424
  %4426 = vrot.lane.b32.xlu0 %v4341, 80
  %v4427 = vpop.permute.xlu0 %4426
  %4428 = vrot.lane.b32.xlu0 %v4344, 80
  %v4429 = vpop.permute.xlu0 %4428
  %4430 = vrot.lane.b32.xlu0 %v4347, 80
  %v4431 = vpop.permute.xlu0 %4430
  %4432 = vrot.lane.b32.xlu0 %v4350, 80
  %v4433 = vpop.permute.xlu0 %4432
  %4434 = vrot.lane.b32.xlu0 %v4353, 80
  %v4435 = vpop.permute.xlu0 %4434
  %4436 = vrot.lane.b32.xlu0 %v4356, 80
  %v4437 = vpop.permute.xlu0 %4436
  %4438 = vrot.lane.b32.xlu0 %v4359, 80
  %v4439 = vpop.permute.xlu0 %4438
  %4440 = vrot.lane.b32.xlu0 %v4362, 80
  %v4441 = vpop.permute.xlu0 %4440
  %4442 = vrot.lane.b32.xlu0 %v4365, 80
  %v4443 = vpop.permute.xlu0 %4442
  %4444 = vrot.lane.b32.xlu0 %v4368, 80
  %v4445 = vpop.permute.xlu0 %4444
  %4446 = vrot.lane.b32.xlu0 %v4371, 80
  %v4447 = vpop.permute.xlu0 %4446
  %4448 = vrot.lane.b32.xlu0 %v4374, 80
  %v4449 = vpop.permute.xlu0 %4448
  %4450 = vrot.lane.b32.xlu0 %v4377, 80
  %v4451 = vpop.permute.xlu0 %4450
  %4452 = vrot.lane.b32.xlu0 %v4380, 80
  %v4453 = vpop.permute.xlu0 %4452
  %4454 = vrot.lane.b32.xlu0 %v4383, 80
  %v4455 = vpop.permute.xlu0 %4454
  %4456 = vrot.lane.b32.xlu0 %v4386, 80
  %v4457 = vpop.permute.xlu0 %4456
  %4458 = vrot.lane.b32.xlu0 %v4389, 80
  %v4459 = vpop.permute.xlu0 %4458
  %4460 = vrot.lane.b32.xlu0 %v4392, 80
  %v4461 = vpop.permute.xlu0 %4460
  %4462 = vrot.lane.b32.xlu0 %v4395, 80
  %v4463 = vpop.permute.xlu0 %4462
  %4464 = vrot.lane.b32.xlu0 %v4398, 80
  %v4465 = vpop.permute.xlu0 %4464
  %4466 = vrot.lane.b32.xlu0 %v4401, 80
  %v4467 = vpop.permute.xlu0 %4466
  %4468 = vrot.lane.b32.xlu0 %v4404, 80
  %v4469 = vpop.permute.xlu0 %4468
  %4470 = vrot.lane.b32.xlu0 %v4407, 80
  %v4471 = vpop.permute.xlu0 %4470
  %v4536 = vunpack.c.l.b16 %v2358
  %v4537 = vunpack.c.l.b16 %v2359
  %v4538 = vunpack.c.l.b16 %v2360
  %v4539 = vunpack.c.l.b16 %v2361
  %v4540 = vunpack.c.l.b16 %v2362
  %v4541 = vunpack.c.l.b16 %v2363
  %v4542 = vunpack.c.l.b16 %v2364
  %v4543 = vunpack.c.l.b16 %v2365
  %v4544 = vunpack.c.l.b16 %v2366
  %v4545 = vunpack.c.l.b16 %v2367
  %v4546 = vunpack.c.l.b16 %v2368
  %v4547 = vunpack.c.l.b16 %v2369
  %v4548 = vunpack.c.l.b16 %v2370
  %v4549 = vunpack.c.l.b16 %v2371
  %v4550 = vunpack.c.l.b16 %v2372
  %v4551 = vunpack.c.l.b16 %v2373
  %v4552 = vunpack.c.l.b16 %v2374
  %v4553 = vunpack.c.l.b16 %v2375
  %v4554 = vunpack.c.l.b16 %v2376
  %v4555 = vunpack.c.l.b16 %v2377
  %v4556 = vunpack.c.l.b16 %v2378
  %v4557 = vunpack.c.l.b16 %v2379
  %v4558 = vunpack.c.l.b16 %v2380
  %v4559 = vunpack.c.l.b16 %v2381
  %v4560 = vunpack.c.l.b16 %v2382
  %v4561 = vunpack.c.l.b16 %v2383
  %v4562 = vunpack.c.l.b16 %v2384
  %v4563 = vunpack.c.l.b16 %v2385
  %v4564 = vunpack.c.l.b16 %v2386
  %v4565 = vunpack.c.l.b16 %v2387
  %v4566 = vunpack.c.l.b16 %v2388
  %v4567 = vunpack.c.l.b16 %v2389
  %v4568 = vunpack.c.l.b16 %v2390
  %v4569 = vunpack.c.l.b16 %v2391
  %v4570 = vunpack.c.l.b16 %v2392
  %v4571 = vunpack.c.l.b16 %v2393
  %v4572 = vunpack.c.l.b16 %v2394
  %v4573 = vunpack.c.l.b16 %v2395
  %v4574 = vunpack.c.l.b16 %v2396
  %v4575 = vunpack.c.l.b16 %v2397
  %v4576 = vunpack.c.l.b16 %v2398
  %v4577 = vunpack.c.l.b16 %v2399
  %v4578 = vunpack.c.l.b16 %v2400
  %v4579 = vunpack.c.l.b16 %v2401
  %v4580 = vunpack.c.l.b16 %v2402
  %v4581 = vunpack.c.l.b16 %v2403
  %v4582 = vunpack.c.l.b16 %v2404
  %v4583 = vunpack.c.l.b16 %v2405
  %v4584 = vunpack.c.l.b16 %v2406
  %v4585 = vunpack.c.l.b16 %v2407
  %v4586 = vunpack.c.l.b16 %v2408
  %v4587 = vunpack.c.l.b16 %v2409
  %v4588 = vunpack.c.l.b16 %v2410
  %v4589 = vunpack.c.l.b16 %v2411
  %v4590 = vunpack.c.l.b16 %v2412
  %v4591 = vunpack.c.l.b16 %v2413
  %v4592 = vunpack.c.l.b16 %v2414
  %v4593 = vunpack.c.l.b16 %v2415
  %v4594 = vunpack.c.l.b16 %v2416
  %v4595 = vunpack.c.l.b16 %v2417
  %v4596 = vunpack.c.l.b16 %v2418
  %v4597 = vunpack.c.l.b16 %v2419
  %v4598 = vunpack.c.l.b16 %v2420
  %v4599 = vunpack.c.l.b16 %v2421
  %v4600 = vpack.c.b16 %v4537, %v4536
  %v4601 = vpack.c.b16 %v4539, %v4538
  %v4602 = vpack.c.b16 %v4541, %v4540
  %v4603 = vpack.c.b16 %v4543, %v4542
  %v4604 = vpack.c.b16 %v4545, %v4544
  %v4605 = vpack.c.b16 %v4547, %v4546
  %v4606 = vpack.c.b16 %v4549, %v4548
  %v4607 = vpack.c.b16 %v4551, %v4550
  %v4608 = vpack.c.b16 %v4553, %v4552
  %v4609 = vpack.c.b16 %v4555, %v4554
  %v4610 = vpack.c.b16 %v4557, %v4556
  %v4611 = vpack.c.b16 %v4559, %v4558
  %v4612 = vpack.c.b16 %v4561, %v4560
  %v4613 = vpack.c.b16 %v4563, %v4562
  %v4614 = vpack.c.b16 %v4565, %v4564
  %v4615 = vpack.c.b16 %v4567, %v4566
  %v4616 = vpack.c.b16 %v4569, %v4568
  %v4617 = vpack.c.b16 %v4571, %v4570
  %v4618 = vpack.c.b16 %v4573, %v4572
  %v4619 = vpack.c.b16 %v4575, %v4574
  %v4620 = vpack.c.b16 %v4577, %v4576
  %v4621 = vpack.c.b16 %v4579, %v4578
  %v4622 = vpack.c.b16 %v4581, %v4580
  %v4623 = vpack.c.b16 %v4583, %v4582
  %v4624 = vpack.c.b16 %v4585, %v4584
  %v4625 = vpack.c.b16 %v4587, %v4586
  %v4626 = vpack.c.b16 %v4589, %v4588
  %v4627 = vpack.c.b16 %v4591, %v4590
  %v4628 = vpack.c.b16 %v4593, %v4592
  %v4629 = vpack.c.b16 %v4595, %v4594
  %v4630 = vpack.c.b16 %v4597, %v4596
  %v4631 = vpack.c.b16 %v4599, %v4598
  %4632 = vrot.lane.b32.xlu0 %v4600, 96
  %v4633 = vpop.permute.xlu0 %4632
  %4634 = vrot.lane.b32.xlu0 %v4601, 96
  %v4635 = vpop.permute.xlu0 %4634
  %4636 = vrot.lane.b32.xlu0 %v4602, 96
  %v4637 = vpop.permute.xlu0 %4636
  %4638 = vrot.lane.b32.xlu0 %v4603, 96
  %v4639 = vpop.permute.xlu0 %4638
  %4640 = vrot.lane.b32.xlu0 %v4604, 96
  %v4641 = vpop.permute.xlu0 %4640
  %4642 = vrot.lane.b32.xlu0 %v4605, 96
  %v4643 = vpop.permute.xlu0 %4642
  %4644 = vrot.lane.b32.xlu0 %v4606, 96
  %v4645 = vpop.permute.xlu0 %4644
  %4646 = vrot.lane.b32.xlu0 %v4607, 96
  %v4647 = vpop.permute.xlu0 %4646
  %4648 = vrot.lane.b32.xlu0 %v4608, 96
  %v4649 = vpop.permute.xlu0 %4648
  %4650 = vrot.lane.b32.xlu0 %v4609, 96
  %v4651 = vpop.permute.xlu0 %4650
  %4652 = vrot.lane.b32.xlu0 %v4610, 96
  %v4653 = vpop.permute.xlu0 %4652
  %4654 = vrot.lane.b32.xlu0 %v4611, 96
  %v4655 = vpop.permute.xlu0 %4654
  %4656 = vrot.lane.b32.xlu0 %v4612, 96
  %v4657 = vpop.permute.xlu0 %4656
  %4658 = vrot.lane.b32.xlu0 %v4613, 96
  %v4659 = vpop.permute.xlu0 %4658
  %4660 = vrot.lane.b32.xlu0 %v4614, 96
  %v4661 = vpop.permute.xlu0 %4660
  %4662 = vrot.lane.b32.xlu0 %v4615, 96
  %v4663 = vpop.permute.xlu0 %4662
  %4664 = vrot.lane.b32.xlu0 %v4616, 96
  %v4665 = vpop.permute.xlu0 %4664
  %4666 = vrot.lane.b32.xlu0 %v4617, 96
  %v4667 = vpop.permute.xlu0 %4666
  %4668 = vrot.lane.b32.xlu0 %v4618, 96
  %v4669 = vpop.permute.xlu0 %4668
  %4670 = vrot.lane.b32.xlu0 %v4619, 96
  %v4671 = vpop.permute.xlu0 %4670
  %4672 = vrot.lane.b32.xlu0 %v4620, 96
  %v4673 = vpop.permute.xlu0 %4672
  %4674 = vrot.lane.b32.xlu0 %v4621, 96
  %v4675 = vpop.permute.xlu0 %4674
  %4676 = vrot.lane.b32.xlu0 %v4622, 96
  %v4677 = vpop.permute.xlu0 %4676
  %4678 = vrot.lane.b32.xlu0 %v4623, 96
  %v4679 = vpop.permute.xlu0 %4678
  %4680 = vrot.lane.b32.xlu0 %v4624, 96
  %v4681 = vpop.permute.xlu0 %4680
  %4682 = vrot.lane.b32.xlu0 %v4625, 96
  %v4683 = vpop.permute.xlu0 %4682
  %4684 = vrot.lane.b32.xlu0 %v4626, 96
  %v4685 = vpop.permute.xlu0 %4684
  %4686 = vrot.lane.b32.xlu0 %v4627, 96
  %v4687 = vpop.permute.xlu0 %4686
  %4688 = vrot.lane.b32.xlu0 %v4628, 96
  %v4689 = vpop.permute.xlu0 %4688
  %4690 = vrot.lane.b32.xlu0 %v4629, 96
  %v4691 = vpop.permute.xlu0 %4690
  %4692 = vrot.lane.b32.xlu0 %v4630, 96
  %v4693 = vpop.permute.xlu0 %4692
  %4694 = vrot.lane.b32.xlu0 %v4631, 96
  %v4695 = vpop.permute.xlu0 %4694
  %v4728 = vunpack.c.l.b16 %v2422
  %v4729 = vunpack.c.l.b16 %v2423
  %v4730 = vunpack.c.l.b16 %v2424
  %v4731 = vunpack.c.l.b16 %v2425
  %v4732 = vunpack.c.l.b16 %v2426
  %v4733 = vunpack.c.l.b16 %v2427
  %v4734 = vunpack.c.l.b16 %v2428
  %v4735 = vunpack.c.l.b16 %v2429
  %v4736 = vunpack.c.l.b16 %v2430
  %v4737 = vunpack.c.l.b16 %v2431
  %v4738 = vunpack.c.l.b16 %v2432
  %v4739 = vunpack.c.l.b16 %v2433
  %v4740 = vunpack.c.l.b16 %v2434
  %v4741 = vunpack.c.l.b16 %v2435
  %v4742 = vunpack.c.l.b16 %v2436
  %v4743 = vunpack.c.l.b16 %v2437
  %v4744 = vunpack.c.l.b16 %v2438
  %v4745 = vunpack.c.l.b16 %v2439
  %v4746 = vunpack.c.l.b16 %v2440
  %v4747 = vunpack.c.l.b16 %v2441
  %v4748 = vunpack.c.l.b16 %v2442
  %v4749 = vunpack.c.l.b16 %v2443
  %v4750 = vunpack.c.l.b16 %v2444
  %v4751 = vunpack.c.l.b16 %v2445
  %v4752 = vunpack.c.l.b16 %v2446
  %v4753 = vunpack.c.l.b16 %v2447
  %v4754 = vunpack.c.l.b16 %v2448
  %v4755 = vunpack.c.l.b16 %v2449
  %v4756 = vunpack.c.l.b16 %v2450
  %v4757 = vunpack.c.l.b16 %v2451
  %v4758 = vunpack.c.l.b16 %v2452
  %v4759 = vunpack.c.l.b16 %v2453
  %v4760 = vpack.c.b16 %v4728, %v4728
  %v4761 = vpack.c.b16 %v4729, %v4729
  %v4762 = vpack.c.b16 %v4730, %v4730
  %v4763 = vpack.c.b16 %v4731, %v4731
  %v4764 = vpack.c.b16 %v4732, %v4732
  %v4765 = vpack.c.b16 %v4733, %v4733
  %v4766 = vpack.c.b16 %v4734, %v4734
  %v4767 = vpack.c.b16 %v4735, %v4735
  %v4768 = vpack.c.b16 %v4736, %v4736
  %v4769 = vpack.c.b16 %v4737, %v4737
  %v4770 = vpack.c.b16 %v4738, %v4738
  %v4771 = vpack.c.b16 %v4739, %v4739
  %v4772 = vpack.c.b16 %v4740, %v4740
  %v4773 = vpack.c.b16 %v4741, %v4741
  %v4774 = vpack.c.b16 %v4742, %v4742
  %v4775 = vpack.c.b16 %v4743, %v4743
  %v4776 = vpack.c.b16 %v4744, %v4744
  %v4777 = vpack.c.b16 %v4745, %v4745
  %v4778 = vpack.c.b16 %v4746, %v4746
  %v4779 = vpack.c.b16 %v4747, %v4747
  %v4780 = vpack.c.b16 %v4748, %v4748
  %v4781 = vpack.c.b16 %v4749, %v4749
  %v4782 = vpack.c.b16 %v4750, %v4750
  %v4783 = vpack.c.b16 %v4751, %v4751
  %v4784 = vpack.c.b16 %v4752, %v4752
  %v4785 = vpack.c.b16 %v4753, %v4753
  %v4786 = vpack.c.b16 %v4754, %v4754
  %v4787 = vpack.c.b16 %v4755, %v4755
  %v4788 = vpack.c.b16 %v4756, %v4756
  %v4789 = vpack.c.b16 %v4757, %v4757
  %v4790 = vpack.c.b16 %v4758, %v4758
  %v4791 = vpack.c.b16 %v4759, %v4759
  %v4793 = vshrl.u32 %v4600, 16
  %v4795 = vshll.u32 %v4600, 16
  %v4797 = vrot.slane %v4795, 1
  %v4798 = vor.u32 %v4793, %v4797
  %v4800 = vshll.u32 %v4760, 16
  %v4802 = vrot.slane %v4800, 1
  %v4803 = vsel %vm2742, %v4798, %v4802
  %v4805 = vshrl.u32 %v4601, 16
  %v4807 = vshll.u32 %v4601, 16
  %v4809 = vrot.slane %v4807, 1
  %v4810 = vor.u32 %v4805, %v4809
  %v4812 = vshll.u32 %v4761, 16
  %v4814 = vrot.slane %v4812, 1
  %v4815 = vsel %vm2742, %v4810, %v4814
  %v4817 = vshrl.u32 %v4602, 16
  %v4819 = vshll.u32 %v4602, 16
  %v4821 = vrot.slane %v4819, 1
  %v4822 = vor.u32 %v4817, %v4821
  %v4824 = vshll.u32 %v4762, 16
  %v4826 = vrot.slane %v4824, 1
  %v4827 = vsel %vm2742, %v4822, %v4826
  %v4829 = vshrl.u32 %v4603, 16
  %v4831 = vshll.u32 %v4603, 16
  %v4833 = vrot.slane %v4831, 1
  %v4834 = vor.u32 %v4829, %v4833
  %v4836 = vshll.u32 %v4763, 16
  %v4838 = vrot.slane %v4836, 1
  %v4839 = vsel %vm2742, %v4834, %v4838
  %v4841 = vshrl.u32 %v4604, 16
  %v4843 = vshll.u32 %v4604, 16
  %v4845 = vrot.slane %v4843, 1
  %v4846 = vor.u32 %v4841, %v4845
  %v4848 = vshll.u32 %v4764, 16
  %v4850 = vrot.slane %v4848, 1
  %v4851 = vsel %vm2742, %v4846, %v4850
  %v4853 = vshrl.u32 %v4605, 16
  %v4855 = vshll.u32 %v4605, 16
  %v4857 = vrot.slane %v4855, 1
  %v4858 = vor.u32 %v4853, %v4857
  %v4860 = vshll.u32 %v4765, 16
  %v4862 = vrot.slane %v4860, 1
  %v4863 = vsel %vm2742, %v4858, %v4862
  %v4865 = vshrl.u32 %v4606, 16
  %v4867 = vshll.u32 %v4606, 16
  %v4869 = vrot.slane %v4867, 1
  %v4870 = vor.u32 %v4865, %v4869
  %v4872 = vshll.u32 %v4766, 16
  %v4874 = vrot.slane %v4872, 1
  %v4875 = vsel %vm2742, %v4870, %v4874
  %v4877 = vshrl.u32 %v4607, 16
  %v4879 = vshll.u32 %v4607, 16
  %v4881 = vrot.slane %v4879, 1
  %v4882 = vor.u32 %v4877, %v4881
  %v4884 = vshll.u32 %v4767, 16
  %v4886 = vrot.slane %v4884, 1
  %v4887 = vsel %vm2742, %v4882, %v4886
  %v4889 = vshrl.u32 %v4608, 16
  %v4891 = vshll.u32 %v4608, 16
  %v4893 = vrot.slane %v4891, 1
  %v4894 = vor.u32 %v4889, %v4893
  %v4896 = vshll.u32 %v4768, 16
  %v4898 = vrot.slane %v4896, 1
  %v4899 = vsel %vm2742, %v4894, %v4898
  %v4901 = vshrl.u32 %v4609, 16
  %v4903 = vshll.u32 %v4609, 16
  %v4905 = vrot.slane %v4903, 1
  %v4906 = vor.u32 %v4901, %v4905
  %v4908 = vshll.u32 %v4769, 16
  %v4910 = vrot.slane %v4908, 1
  %v4911 = vsel %vm2742, %v4906, %v4910
  %v4913 = vshrl.u32 %v4610, 16
  %v4915 = vshll.u32 %v4610, 16
  %v4917 = vrot.slane %v4915, 1
  %v4918 = vor.u32 %v4913, %v4917
  %v4920 = vshll.u32 %v4770, 16
  %v4922 = vrot.slane %v4920, 1
  %v4923 = vsel %vm2742, %v4918, %v4922
  %v4925 = vshrl.u32 %v4611, 16
  %v4927 = vshll.u32 %v4611, 16
  %v4929 = vrot.slane %v4927, 1
  %v4930 = vor.u32 %v4925, %v4929
  %v4932 = vshll.u32 %v4771, 16
  %v4934 = vrot.slane %v4932, 1
  %v4935 = vsel %vm2742, %v4930, %v4934
  %v4937 = vshrl.u32 %v4612, 16
  %v4939 = vshll.u32 %v4612, 16
  %v4941 = vrot.slane %v4939, 1
  %v4942 = vor.u32 %v4937, %v4941
  %v4944 = vshll.u32 %v4772, 16
  %v4946 = vrot.slane %v4944, 1
  %v4947 = vsel %vm2742, %v4942, %v4946
  %v4949 = vshrl.u32 %v4613, 16
  %v4951 = vshll.u32 %v4613, 16
  %v4953 = vrot.slane %v4951, 1
  %v4954 = vor.u32 %v4949, %v4953
  %v4956 = vshll.u32 %v4773, 16
  %v4958 = vrot.slane %v4956, 1
  %v4959 = vsel %vm2742, %v4954, %v4958
  %v4961 = vshrl.u32 %v4614, 16
  %v4963 = vshll.u32 %v4614, 16
  %v4965 = vrot.slane %v4963, 1
  %v4966 = vor.u32 %v4961, %v4965
  %v4968 = vshll.u32 %v4774, 16
  %v4970 = vrot.slane %v4968, 1
  %v4971 = vsel %vm2742, %v4966, %v4970
  %v4973 = vshrl.u32 %v4615, 16
  %v4975 = vshll.u32 %v4615, 16
  %v4977 = vrot.slane %v4975, 1
  %v4978 = vor.u32 %v4973, %v4977
  %v4980 = vshll.u32 %v4775, 16
  %v4982 = vrot.slane %v4980, 1
  %v4983 = vsel %vm2742, %v4978, %v4982
  %v4985 = vshrl.u32 %v4616, 16
  %v4987 = vshll.u32 %v4616, 16
  %v4989 = vrot.slane %v4987, 1
  %v4990 = vor.u32 %v4985, %v4989
  %v4992 = vshll.u32 %v4776, 16
  %v4994 = vrot.slane %v4992, 1
  %v4995 = vsel %vm2742, %v4990, %v4994
  %v4997 = vshrl.u32 %v4617, 16
  %v4999 = vshll.u32 %v4617, 16
  %v5001 = vrot.slane %v4999, 1
  %v5002 = vor.u32 %v4997, %v5001
  %v5004 = vshll.u32 %v4777, 16
  %v5006 = vrot.slane %v5004, 1
  %v5007 = vsel %vm2742, %v5002, %v5006
  %v5009 = vshrl.u32 %v4618, 16
  %v5011 = vshll.u32 %v4618, 16
  %v5013 = vrot.slane %v5011, 1
  %v5014 = vor.u32 %v5009, %v5013
  %v5016 = vshll.u32 %v4778, 16
  %v5018 = vrot.slane %v5016, 1
  %v5019 = vsel %vm2742, %v5014, %v5018
  %v5021 = vshrl.u32 %v4619, 16
  %v5023 = vshll.u32 %v4619, 16
  %v5025 = vrot.slane %v5023, 1
  %v5026 = vor.u32 %v5021, %v5025
  %v5028 = vshll.u32 %v4779, 16
  %v5030 = vrot.slane %v5028, 1
  %v5031 = vsel %vm2742, %v5026, %v5030
  %v5033 = vshrl.u32 %v4620, 16
  %v5035 = vshll.u32 %v4620, 16
  %v5037 = vrot.slane %v5035, 1
  %v5038 = vor.u32 %v5033, %v5037
  %v5040 = vshll.u32 %v4780, 16
  %v5042 = vrot.slane %v5040, 1
  %v5043 = vsel %vm2742, %v5038, %v5042
  %v5045 = vshrl.u32 %v4621, 16
  %v5047 = vshll.u32 %v4621, 16
  %v5049 = vrot.slane %v5047, 1
  %v5050 = vor.u32 %v5045, %v5049
  %v5052 = vshll.u32 %v4781, 16
  %v5054 = vrot.slane %v5052, 1
  %v5055 = vsel %vm2742, %v5050, %v5054
  %v5057 = vshrl.u32 %v4622, 16
  %v5059 = vshll.u32 %v4622, 16
  %v5061 = vrot.slane %v5059, 1
  %v5062 = vor.u32 %v5057, %v5061
  %v5064 = vshll.u32 %v4782, 16
  %v5066 = vrot.slane %v5064, 1
  %v5067 = vsel %vm2742, %v5062, %v5066
  %v5069 = vshrl.u32 %v4623, 16
  %v5071 = vshll.u32 %v4623, 16
  %v5073 = vrot.slane %v5071, 1
  %v5074 = vor.u32 %v5069, %v5073
  %v5076 = vshll.u32 %v4783, 16
  %v5078 = vrot.slane %v5076, 1
  %v5079 = vsel %vm2742, %v5074, %v5078
  %v5081 = vshrl.u32 %v4624, 16
  %v5083 = vshll.u32 %v4624, 16
  %v5085 = vrot.slane %v5083, 1
  %v5086 = vor.u32 %v5081, %v5085
  %v5088 = vshll.u32 %v4784, 16
  %v5090 = vrot.slane %v5088, 1
  %v5091 = vsel %vm2742, %v5086, %v5090
  %v5093 = vshrl.u32 %v4625, 16
  %v5095 = vshll.u32 %v4625, 16
  %v5097 = vrot.slane %v5095, 1
  %v5098 = vor.u32 %v5093, %v5097
  %v5100 = vshll.u32 %v4785, 16
  %v5102 = vrot.slane %v5100, 1
  %v5103 = vsel %vm2742, %v5098, %v5102
  %v5105 = vshrl.u32 %v4626, 16
  %v5107 = vshll.u32 %v4626, 16
  %v5109 = vrot.slane %v5107, 1
  %v5110 = vor.u32 %v5105, %v5109
  %v5112 = vshll.u32 %v4786, 16
  %v5114 = vrot.slane %v5112, 1
  %v5115 = vsel %vm2742, %v5110, %v5114
  %v5117 = vshrl.u32 %v4627, 16
  %v5119 = vshll.u32 %v4627, 16
  %v5121 = vrot.slane %v5119, 1
  %v5122 = vor.u32 %v5117, %v5121
  %v5124 = vshll.u32 %v4787, 16
  %v5126 = vrot.slane %v5124, 1
  %v5127 = vsel %vm2742, %v5122, %v5126
  %v5129 = vshrl.u32 %v4628, 16
  %v5131 = vshll.u32 %v4628, 16
  %v5133 = vrot.slane %v5131, 1
  %v5134 = vor.u32 %v5129, %v5133
  %v5136 = vshll.u32 %v4788, 16
  %v5138 = vrot.slane %v5136, 1
  %v5139 = vsel %vm2742, %v5134, %v5138
  %v5141 = vshrl.u32 %v4629, 16
  %v5143 = vshll.u32 %v4629, 16
  %v5145 = vrot.slane %v5143, 1
  %v5146 = vor.u32 %v5141, %v5145
  %v5148 = vshll.u32 %v4789, 16
  %v5150 = vrot.slane %v5148, 1
  %v5151 = vsel %vm2742, %v5146, %v5150
  %v5153 = vshrl.u32 %v4630, 16
  %v5155 = vshll.u32 %v4630, 16
  %v5157 = vrot.slane %v5155, 1
  %v5158 = vor.u32 %v5153, %v5157
  %v5160 = vshll.u32 %v4790, 16
  %v5162 = vrot.slane %v5160, 1
  %v5163 = vsel %vm2742, %v5158, %v5162
  %v5165 = vshrl.u32 %v4631, 16
  %v5167 = vshll.u32 %v4631, 16
  %v5169 = vrot.slane %v5167, 1
  %v5170 = vor.u32 %v5165, %v5169
  %v5172 = vshll.u32 %v4791, 16
  %v5174 = vrot.slane %v5172, 1
  %v5175 = vsel %vm2742, %v5170, %v5174
  %5176 = vrot.lane.b32.xlu0 %v4803, 112
  %v5177 = vpop.permute.xlu0 %5176
  %5178 = vrot.lane.b32.xlu0 %v4815, 112
  %v5179 = vpop.permute.xlu0 %5178
  %5180 = vrot.lane.b32.xlu0 %v4827, 112
  %v5181 = vpop.permute.xlu0 %5180
  %5182 = vrot.lane.b32.xlu0 %v4839, 112
  %v5183 = vpop.permute.xlu0 %5182
  %5184 = vrot.lane.b32.xlu0 %v4851, 112
  %v5185 = vpop.permute.xlu0 %5184
  %5186 = vrot.lane.b32.xlu0 %v4863, 112
  %v5187 = vpop.permute.xlu0 %5186
  %5188 = vrot.lane.b32.xlu0 %v4875, 112
  %v5189 = vpop.permute.xlu0 %5188
  %5190 = vrot.lane.b32.xlu0 %v4887, 112
  %v5191 = vpop.permute.xlu0 %5190
  %5192 = vrot.lane.b32.xlu0 %v4899, 112
  %v5193 = vpop.permute.xlu0 %5192
  %5194 = vrot.lane.b32.xlu0 %v4911, 112
  %v5195 = vpop.permute.xlu0 %5194
  %5196 = vrot.lane.b32.xlu0 %v4923, 112
  %v5197 = vpop.permute.xlu0 %5196
  %5198 = vrot.lane.b32.xlu0 %v4935, 112
  %v5199 = vpop.permute.xlu0 %5198
  %5200 = vrot.lane.b32.xlu0 %v4947, 112
  %v5201 = vpop.permute.xlu0 %5200
  %5202 = vrot.lane.b32.xlu0 %v4959, 112
  %v5203 = vpop.permute.xlu0 %5202
  %5204 = vrot.lane.b32.xlu0 %v4971, 112
  %v5205 = vpop.permute.xlu0 %5204
  %5206 = vrot.lane.b32.xlu0 %v4983, 112
  %v5207 = vpop.permute.xlu0 %5206
  %5208 = vrot.lane.b32.xlu0 %v4995, 112
  %v5209 = vpop.permute.xlu0 %5208
  %5210 = vrot.lane.b32.xlu0 %v5007, 112
  %v5211 = vpop.permute.xlu0 %5210
  %5212 = vrot.lane.b32.xlu0 %v5019, 112
  %v5213 = vpop.permute.xlu0 %5212
  %5214 = vrot.lane.b32.xlu0 %v5031, 112
  %v5215 = vpop.permute.xlu0 %5214
  %5216 = vrot.lane.b32.xlu0 %v5043, 112
  %v5217 = vpop.permute.xlu0 %5216
  %5218 = vrot.lane.b32.xlu0 %v5055, 112
  %v5219 = vpop.permute.xlu0 %5218
  %5220 = vrot.lane.b32.xlu0 %v5067, 112
  %v5221 = vpop.permute.xlu0 %5220
  %5222 = vrot.lane.b32.xlu0 %v5079, 112
  %v5223 = vpop.permute.xlu0 %5222
  %5224 = vrot.lane.b32.xlu0 %v5091, 112
  %v5225 = vpop.permute.xlu0 %5224
  %5226 = vrot.lane.b32.xlu0 %v5103, 112
  %v5227 = vpop.permute.xlu0 %5226
  %5228 = vrot.lane.b32.xlu0 %v5115, 112
  %v5229 = vpop.permute.xlu0 %5228
  %5230 = vrot.lane.b32.xlu0 %v5127, 112
  %v5231 = vpop.permute.xlu0 %5230
  %5232 = vrot.lane.b32.xlu0 %v5139, 112
  %v5233 = vpop.permute.xlu0 %5232
  %5234 = vrot.lane.b32.xlu0 %v5151, 112
  %v5235 = vpop.permute.xlu0 %5234
  %5236 = vrot.lane.b32.xlu0 %v5163, 112
  %v5237 = vpop.permute.xlu0 %5236
  %5238 = vrot.lane.b32.xlu0 %v5175, 112
  %v5239 = vpop.permute.xlu0 %5238
  %v5272 = vunpack.c.l.b16 %v2454
  %v5273 = vunpack.c.l.b16 %v2455
  %v5274 = vunpack.c.l.b16 %v2456
  %v5275 = vunpack.c.l.b16 %v2457
  %v5276 = vunpack.c.l.b16 %v2458
  %v5277 = vunpack.c.l.b16 %v2459
  %v5278 = vunpack.c.l.b16 %v2460
  %v5279 = vunpack.c.l.b16 %v2461
  %v5280 = vunpack.c.l.b16 %v2462
  %v5281 = vunpack.c.l.b16 %v2463
  %v5282 = vunpack.c.l.b16 %v2464
  %v5283 = vunpack.c.l.b16 %v2465
  %v5284 = vunpack.c.l.b16 %v2466
  %v5285 = vunpack.c.l.b16 %v2467
  %v5286 = vunpack.c.l.b16 %v2468
  %v5287 = vunpack.c.l.b16 %v2469
  %v5288 = vunpack.c.l.b16 %v2470
  %v5289 = vunpack.c.l.b16 %v2471
  %v5290 = vunpack.c.l.b16 %v2472
  %v5291 = vunpack.c.l.b16 %v2473
  %v5292 = vunpack.c.l.b16 %v2474
  %v5293 = vunpack.c.l.b16 %v2475
  %v5294 = vunpack.c.l.b16 %v2476
  %v5295 = vunpack.c.l.b16 %v2477
  %v5296 = vunpack.c.l.b16 %v2478
  %v5297 = vunpack.c.l.b16 %v2479
  %v5298 = vunpack.c.l.b16 %v2480
  %v5299 = vunpack.c.l.b16 %v2481
  %v5300 = vunpack.c.l.b16 %v2482
  %v5301 = vunpack.c.l.b16 %v2483
  %v5302 = vunpack.c.l.b16 %v2484
  %v5303 = vunpack.c.l.b16 %v2485
  %v5304 = vpack.c.b16 %v4537, %v5272
  %v5305 = vpack.c.b16 %v4539, %v5273
  %v5306 = vpack.c.b16 %v4541, %v5274
  %v5307 = vpack.c.b16 %v4543, %v5275
  %v5308 = vpack.c.b16 %v4545, %v5276
  %v5309 = vpack.c.b16 %v4547, %v5277
  %v5310 = vpack.c.b16 %v4549, %v5278
  %v5311 = vpack.c.b16 %v4551, %v5279
  %v5312 = vpack.c.b16 %v4553, %v5280
  %v5313 = vpack.c.b16 %v4555, %v5281
  %v5314 = vpack.c.b16 %v4557, %v5282
  %v5315 = vpack.c.b16 %v4559, %v5283
  %v5316 = vpack.c.b16 %v4561, %v5284
  %v5317 = vpack.c.b16 %v4563, %v5285
  %v5318 = vpack.c.b16 %v4565, %v5286
  %v5319 = vpack.c.b16 %v4567, %v5287
  %v5320 = vpack.c.b16 %v4569, %v5288
  %v5321 = vpack.c.b16 %v4571, %v5289
  %v5322 = vpack.c.b16 %v4573, %v5290
  %v5323 = vpack.c.b16 %v4575, %v5291
  %v5324 = vpack.c.b16 %v4577, %v5292
  %v5325 = vpack.c.b16 %v4579, %v5293
  %v5326 = vpack.c.b16 %v4581, %v5294
  %v5327 = vpack.c.b16 %v4583, %v5295
  %v5328 = vpack.c.b16 %v4585, %v5296
  %v5329 = vpack.c.b16 %v4587, %v5297
  %v5330 = vpack.c.b16 %v4589, %v5298
  %v5331 = vpack.c.b16 %v4591, %v5299
  %v5332 = vpack.c.b16 %v4593, %v5300
  %v5333 = vpack.c.b16 %v4595, %v5301
  %v5334 = vpack.c.b16 %v4597, %v5302
  %v5335 = vpack.c.b16 %v4599, %v5303
  %v5336 = vrot.slane %v5304, 1
  %v5337 = vrot.slane %v4760, 1
  %v5338 = vsel %vm3287, %v5336, %v5337
  %v5339 = vrot.slane %v5305, 1
  %v5340 = vrot.slane %v4761, 1
  %v5341 = vsel %vm3287, %v5339, %v5340
  %v5342 = vrot.slane %v5306, 1
  %v5343 = vrot.slane %v4762, 1
  %v5344 = vsel %vm3287, %v5342, %v5343
  %v5345 = vrot.slane %v5307, 1
  %v5346 = vrot.slane %v4763, 1
  %v5347 = vsel %vm3287, %v5345, %v5346
  %v5348 = vrot.slane %v5308, 1
  %v5349 = vrot.slane %v4764, 1
  %v5350 = vsel %vm3287, %v5348, %v5349
  %v5351 = vrot.slane %v5309, 1
  %v5352 = vrot.slane %v4765, 1
  %v5353 = vsel %vm3287, %v5351, %v5352
  %v5354 = vrot.slane %v5310, 1
  %v5355 = vrot.slane %v4766, 1
  %v5356 = vsel %vm3287, %v5354, %v5355
  %v5357 = vrot.slane %v5311, 1
  %v5358 = vrot.slane %v4767, 1
  %v5359 = vsel %vm3287, %v5357, %v5358
  %v5360 = vrot.slane %v5312, 1
  %v5361 = vrot.slane %v4768, 1
  %v5362 = vsel %vm3287, %v5360, %v5361
  %v5363 = vrot.slane %v5313, 1
  %v5364 = vrot.slane %v4769, 1
  %v5365 = vsel %vm3287, %v5363, %v5364
  %v5366 = vrot.slane %v5314, 1
  %v5367 = vrot.slane %v4770, 1
  %v5368 = vsel %vm3287, %v5366, %v5367
  %v5369 = vrot.slane %v5315, 1
  %v5370 = vrot.slane %v4771, 1
  %v5371 = vsel %vm3287, %v5369, %v5370
  %v5372 = vrot.slane %v5316, 1
  %v5373 = vrot.slane %v4772, 1
  %v5374 = vsel %vm3287, %v5372, %v5373
  %v5375 = vrot.slane %v5317, 1
  %v5376 = vrot.slane %v4773, 1
  %v5377 = vsel %vm3287, %v5375, %v5376
  %v5378 = vrot.slane %v5318, 1
  %v5379 = vrot.slane %v4774, 1
  %v5380 = vsel %vm3287, %v5378, %v5379
  %v5381 = vrot.slane %v5319, 1
  %v5382 = vrot.slane %v4775, 1
  %v5383 = vsel %vm3287, %v5381, %v5382
  %v5384 = vrot.slane %v5320, 1
  %v5385 = vrot.slane %v4776, 1
  %v5386 = vsel %vm3287, %v5384, %v5385
  %v5387 = vrot.slane %v5321, 1
  %v5388 = vrot.slane %v4777, 1
  %v5389 = vsel %vm3287, %v5387, %v5388
  %v5390 = vrot.slane %v5322, 1
  %v5391 = vrot.slane %v4778, 1
  %v5392 = vsel %vm3287, %v5390, %v5391
  %v5393 = vrot.slane %v5323, 1
  %v5394 = vrot.slane %v4779, 1
  %v5395 = vsel %vm3287, %v5393, %v5394
  %v5396 = vrot.slane %v5324, 1
  %v5397 = vrot.slane %v4780, 1
  %v5398 = vsel %vm3287, %v5396, %v5397
  %v5399 = vrot.slane %v5325, 1
  %v5400 = vrot.slane %v4781, 1
  %v5401 = vsel %vm3287, %v5399, %v5400
  %v5402 = vrot.slane %v5326, 1
  %v5403 = vrot.slane %v4782, 1
  %v5404 = vsel %vm3287, %v5402, %v5403
  %v5405 = vrot.slane %v5327, 1
  %v5406 = vrot.slane %v4783, 1
  %v5407 = vsel %vm3287, %v5405, %v5406
  %v5408 = vrot.slane %v5328, 1
  %v5409 = vrot.slane %v4784, 1
  %v5410 = vsel %vm3287, %v5408, %v5409
  %v5411 = vrot.slane %v5329, 1
  %v5412 = vrot.slane %v4785, 1
  %v5413 = vsel %vm3287, %v5411, %v5412
  %v5414 = vrot.slane %v5330, 1
  %v5415 = vrot.slane %v4786, 1
  %v5416 = vsel %vm3287, %v5414, %v5415
  %v5417 = vrot.slane %v5331, 1
  %v5418 = vrot.slane %v4787, 1
  %v5419 = vsel %vm3287, %v5417, %v5418
  %v5420 = vrot.slane %v5332, 1
  %v5421 = vrot.slane %v4788, 1
  %v5422 = vsel %vm3287, %v5420, %v5421
  %v5423 = vrot.slane %v5333, 1
  %v5424 = vrot.slane %v4789, 1
  %v5425 = vsel %vm3287, %v5423, %v5424
  %v5426 = vrot.slane %v5334, 1
  %v5427 = vrot.slane %v4790, 1
  %v5428 = vsel %vm3287, %v5426, %v5427
  %v5429 = vrot.slane %v5335, 1
  %v5430 = vrot.slane %v4791, 1
  %v5431 = vsel %vm3287, %v5429, %v5430
  %vm5432 = vcmask 130048
  %v5434 = vsel %vm5432, %v2614, %v3128
  %v5436 = vsel %vm5432, %v2615, %v3130
  %v5438 = vsel %vm5432, %v2616, %v3132
  %v5440 = vsel %vm5432, %v2617, %v3134
  %v5442 = vsel %vm5432, %v2618, %v3136
  %v5444 = vsel %vm5432, %v2619, %v3138
  %v5446 = vsel %vm5432, %v2620, %v3140
  %v5448 = vsel %vm5432, %v2621, %v3142
  %v5450 = vsel %vm5432, %v2622, %v3144
  %v5452 = vsel %vm5432, %v2623, %v3146
  %v5454 = vsel %vm5432, %v2624, %v3148
  %v5456 = vsel %vm5432, %v2625, %v3150
  %v5458 = vsel %vm5432, %v2626, %v3152
  %v5460 = vsel %vm5432, %v2627, %v3154
  %v5462 = vsel %vm5432, %v2628, %v3156
  %v5464 = vsel %vm5432, %v2629, %v3158
  %v5466 = vsel %vm5432, %v2630, %v3160
  %v5468 = vsel %vm5432, %v2631, %v3162
  %v5470 = vsel %vm5432, %v2632, %v3164
  %v5472 = vsel %vm5432, %v2633, %v3166
  %v5474 = vsel %vm5432, %v2634, %v3168
  %v5476 = vsel %vm5432, %v2635, %v3170
  %v5478 = vsel %vm5432, %v2636, %v3172
  %v5480 = vsel %vm5432, %v2637, %v3174
  %v5482 = vsel %vm5432, %v2638, %v3176
  %v5484 = vsel %vm5432, %v2639, %v3178
  %v5486 = vsel %vm5432, %v2640, %v3180
  %v5488 = vsel %vm5432, %v2641, %v3182
  %v5490 = vsel %vm5432, %v2642, %v3184
  %v5492 = vsel %vm5432, %v2643, %v3186
  %v5494 = vsel %vm5432, %v2644, %v3188
  %v5496 = vsel %vm5432, %v2645, %v3190
  %vm5497 = vcmask 261120
  %v5499 = vsel %vm5497, %v5434, %v3385
  %v5501 = vsel %vm5497, %v5436, %v3387
  %v5503 = vsel %vm5497, %v5438, %v3389
  %v5505 = vsel %vm5497, %v5440, %v3391
  %v5507 = vsel %vm5497, %v5442, %v3393
  %v5509 = vsel %vm5497, %v5444, %v3395
  %v5511 = vsel %vm5497, %v5446, %v3397
  %v5513 = vsel %vm5497, %v5448, %v3399
  %v5515 = vsel %vm5497, %v5450, %v3401
  %v5517 = vsel %vm5497, %v5452, %v3403
  %v5519 = vsel %vm5497, %v5454, %v3405
  %v5521 = vsel %vm5497, %v5456, %v3407
  %v5523 = vsel %vm5497, %v5458, %v3409
  %v5525 = vsel %vm5497, %v5460, %v3411
  %v5527 = vsel %vm5497, %v5462, %v3413
  %v5529 = vsel %vm5497, %v5464, %v3415
  %v5531 = vsel %vm5497, %v5466, %v3417
  %v5533 = vsel %vm5497, %v5468, %v3419
  %v5535 = vsel %vm5497, %v5470, %v3421
  %v5537 = vsel %vm5497, %v5472, %v3423
  %v5539 = vsel %vm5497, %v5474, %v3425
  %v5541 = vsel %vm5497, %v5476, %v3427
  %v5543 = vsel %vm5497, %v5478, %v3429
  %v5545 = vsel %vm5497, %v5480, %v3431
  %v5547 = vsel %vm5497, %v5482, %v3433
  %v5549 = vsel %vm5497, %v5484, %v3435
  %v5551 = vsel %vm5497, %v5486, %v3437
  %v5553 = vsel %vm5497, %v5488, %v3439
  %v5555 = vsel %vm5497, %v5490, %v3441
  %v5557 = vsel %vm5497, %v5492, %v3443
  %v5559 = vsel %vm5497, %v5494, %v3445
  %v5561 = vsel %vm5497, %v5496, %v3447
  %vm5562 = vcmask 392192
  %v5564 = vsel %vm5562, %v5499, %v3609
  %v5566 = vsel %vm5562, %v5501, %v3611
  %v5568 = vsel %vm5562, %v5503, %v3613
  %v5570 = vsel %vm5562, %v5505, %v3615
  %v5572 = vsel %vm5562, %v5507, %v3617
  %v5574 = vsel %vm5562, %v5509, %v3619
  %v5576 = vsel %vm5562, %v5511, %v3621
  %v5578 = vsel %vm5562, %v5513, %v3623
  %v5580 = vsel %vm5562, %v5515, %v3625
  %v5582 = vsel %vm5562, %v5517, %v3627
  %v5584 = vsel %vm5562, %v5519, %v3629
  %v5586 = vsel %vm5562, %v5521, %v3631
  %v5588 = vsel %vm5562, %v5523, %v3633
  %v5590 = vsel %vm5562, %v5525, %v3635
  %v5592 = vsel %vm5562, %v5527, %v3637
  %v5594 = vsel %vm5562, %v5529, %v3639
  %v5596 = vsel %vm5562, %v5531, %v3641
  %v5598 = vsel %vm5562, %v5533, %v3643
  %v5600 = vsel %vm5562, %v5535, %v3645
  %v5602 = vsel %vm5562, %v5537, %v3647
  %v5604 = vsel %vm5562, %v5539, %v3649
  %v5606 = vsel %vm5562, %v5541, %v3651
  %v5608 = vsel %vm5562, %v5543, %v3653
  %v5610 = vsel %vm5562, %v5545, %v3655
  %v5612 = vsel %vm5562, %v5547, %v3657
  %v5614 = vsel %vm5562, %v5549, %v3659
  %v5616 = vsel %vm5562, %v5551, %v3661
  %v5618 = vsel %vm5562, %v5553, %v3663
  %v5620 = vsel %vm5562, %v5555, %v3665
  %v5622 = vsel %vm5562, %v5557, %v3667
  %v5624 = vsel %vm5562, %v5559, %v3669
  %v5626 = vsel %vm5562, %v5561, %v3671
  %vm5627 = vcmask 523264
  %v5629 = vsel %vm5627, %v5564, %v4153
  %v5631 = vsel %vm5627, %v5566, %v4155
  %v5633 = vsel %vm5627, %v5568, %v4157
  %v5635 = vsel %vm5627, %v5570, %v4159
  %v5637 = vsel %vm5627, %v5572, %v4161
  %v5639 = vsel %vm5627, %v5574, %v4163
  %v5641 = vsel %vm5627, %v5576, %v4165
  %v5643 = vsel %vm5627, %v5578, %v4167
  %v5645 = vsel %vm5627, %v5580, %v4169
  %v5647 = vsel %vm5627, %v5582, %v4171
  %v5649 = vsel %vm5627, %v5584, %v4173
  %v5651 = vsel %vm5627, %v5586, %v4175
  %v5653 = vsel %vm5627, %v5588, %v4177
  %v5655 = vsel %vm5627, %v5590, %v4179
  %v5657 = vsel %vm5627, %v5592, %v4181
  %v5659 = vsel %vm5627, %v5594, %v4183
  %v5661 = vsel %vm5627, %v5596, %v4185
  %v5663 = vsel %vm5627, %v5598, %v4187
  %v5665 = vsel %vm5627, %v5600, %v4189
  %v5667 = vsel %vm5627, %v5602, %v4191
  %v5669 = vsel %vm5627, %v5604, %v4193
  %v5671 = vsel %vm5627, %v5606, %v4195
  %v5673 = vsel %vm5627, %v5608, %v4197
  %v5675 = vsel %vm5627, %v5610, %v4199
  %v5677 = vsel %vm5627, %v5612, %v4201
  %v5679 = vsel %vm5627, %v5614, %v4203
  %v5681 = vsel %vm5627, %v5616, %v4205
  %v5683 = vsel %vm5627, %v5618, %v4207
  %v5685 = vsel %vm5627, %v5620, %v4209
  %v5687 = vsel %vm5627, %v5622, %v4211
  %v5689 = vsel %vm5627, %v5624, %v4213
  %v5691 = vsel %vm5627, %v5626, %v4215
  %vm5692 = vcmask 654336
  %v5694 = vsel %vm5692, %v5629, %v4409
  %v5696 = vsel %vm5692, %v5631, %v4411
  %v5698 = vsel %vm5692, %v5633, %v4413
  %v5700 = vsel %vm5692, %v5635, %v4415
  %v5702 = vsel %vm5692, %v5637, %v4417
  %v5704 = vsel %vm5692, %v5639, %v4419
  %v5706 = vsel %vm5692, %v5641, %v4421
  %v5708 = vsel %vm5692, %v5643, %v4423
  %v5710 = vsel %vm5692, %v5645, %v4425
  %v5712 = vsel %vm5692, %v5647, %v4427
  %v5714 = vsel %vm5692, %v5649, %v4429
  %v5716 = vsel %vm5692, %v5651, %v4431
  %v5718 = vsel %vm5692, %v5653, %v4433
  %v5720 = vsel %vm5692, %v5655, %v4435
  %v5722 = vsel %vm5692, %v5657, %v4437
  %v5724 = vsel %vm5692, %v5659, %v4439
  %v5726 = vsel %vm5692, %v5661, %v4441
  %v5728 = vsel %vm5692, %v5663, %v4443
  %v5730 = vsel %vm5692, %v5665, %v4445
  %v5732 = vsel %vm5692, %v5667, %v4447
  %v5734 = vsel %vm5692, %v5669, %v4449
  %v5736 = vsel %vm5692, %v5671, %v4451
  %v5738 = vsel %vm5692, %v5673, %v4453
  %v5740 = vsel %vm5692, %v5675, %v4455
  %v5742 = vsel %vm5692, %v5677, %v4457
  %v5744 = vsel %vm5692, %v5679, %v4459
  %v5746 = vsel %vm5692, %v5681, %v4461
  %v5748 = vsel %vm5692, %v5683, %v4463
  %v5750 = vsel %vm5692, %v5685, %v4465
  %v5752 = vsel %vm5692, %v5687, %v4467
  %v5754 = vsel %vm5692, %v5689, %v4469
  %v5756 = vsel %vm5692, %v5691, %v4471
  %vm5757 = vcmask 785408
  %v5759 = vsel %vm5757, %v5694, %v4633
  %v5761 = vsel %vm5757, %v5696, %v4635
  %v5763 = vsel %vm5757, %v5698, %v4637
  %v5765 = vsel %vm5757, %v5700, %v4639
  %v5767 = vsel %vm5757, %v5702, %v4641
  %v5769 = vsel %vm5757, %v5704, %v4643
  %v5771 = vsel %vm5757, %v5706, %v4645
  %v5773 = vsel %vm5757, %v5708, %v4647
  %v5775 = vsel %vm5757, %v5710, %v4649
  %v5777 = vsel %vm5757, %v5712, %v4651
  %v5779 = vsel %vm5757, %v5714, %v4653
  %v5781 = vsel %vm5757, %v5716, %v4655
  %v5783 = vsel %vm5757, %v5718, %v4657
  %v5785 = vsel %vm5757, %v5720, %v4659
  %v5787 = vsel %vm5757, %v5722, %v4661
  %v5789 = vsel %vm5757, %v5724, %v4663
  %v5791 = vsel %vm5757, %v5726, %v4665
  %v5793 = vsel %vm5757, %v5728, %v4667
  %v5795 = vsel %vm5757, %v5730, %v4669
  %v5797 = vsel %vm5757, %v5732, %v4671
  %v5799 = vsel %vm5757, %v5734, %v4673
  %v5801 = vsel %vm5757, %v5736, %v4675
  %v5803 = vsel %vm5757, %v5738, %v4677
  %v5805 = vsel %vm5757, %v5740, %v4679
  %v5807 = vsel %vm5757, %v5742, %v4681
  %v5809 = vsel %vm5757, %v5744, %v4683
  %v5811 = vsel %vm5757, %v5746, %v4685
  %v5813 = vsel %vm5757, %v5748, %v4687
  %v5815 = vsel %vm5757, %v5750, %v4689
  %v5817 = vsel %vm5757, %v5752, %v4691
  %v5819 = vsel %vm5757, %v5754, %v4693
  %v5821 = vsel %vm5757, %v5756, %v4695
  %vm5822 = vcmask 916480
  %v5824 = vsel %vm5822, %v5759, %v5177
  %v5827 = vsel %vm5822, %v5761, %v5179
  %v5830 = vsel %vm5822, %v5763, %v5181
  %v5833 = vsel %vm5822, %v5765, %v5183
  %v5836 = vsel %vm5822, %v5767, %v5185
  %v5839 = vsel %vm5822, %v5769, %v5187
  %v5842 = vsel %vm5822, %v5771, %v5189
  %v5845 = vsel %vm5822, %v5773, %v5191
  %v5848 = vsel %vm5822, %v5775, %v5193
  %v5851 = vsel %vm5822, %v5777, %v5195
  %v5854 = vsel %vm5822, %v5779, %v5197
  %v5857 = vsel %vm5822, %v5781, %v5199
  %v5860 = vsel %vm5822, %v5783, %v5201
  %v5863 = vsel %vm5822, %v5785, %v5203
  %v5866 = vsel %vm5822, %v5787, %v5205
  %v5869 = vsel %vm5822, %v5789, %v5207
  %v5872 = vsel %vm5822, %v5791, %v5209
  %v5875 = vsel %vm5822, %v5793, %v5211
  %v5878 = vsel %vm5822, %v5795, %v5213
  %v5881 = vsel %vm5822, %v5797, %v5215
  %v5884 = vsel %vm5822, %v5799, %v5217
  %v5887 = vsel %vm5822, %v5801, %v5219
  %v5890 = vsel %vm5822, %v5803, %v5221
  %v5893 = vsel %vm5822, %v5805, %v5223
  %v5896 = vsel %vm5822, %v5807, %v5225
  %v5899 = vsel %vm5822, %v5809, %v5227
  %v5902 = vsel %vm5822, %v5811, %v5229
  %v5905 = vsel %vm5822, %v5813, %v5231
  %v5908 = vsel %vm5822, %v5815, %v5233
  %v5911 = vsel %vm5822, %v5817, %v5235
  %v5914 = vsel %vm5822, %v5819, %v5237
  %v5917 = vsel %vm5822, %v5821, %v5239
  %v5919 = vld [vmem:[%s6] sm:$0xf]
  %v5920 = vld [vmem:[%s6 + $0x4] sm:$0xf]
  %v5921 = vld [vmem:[%s6 + $0x8] sm:$0xf]
  %v5922 = vld [vmem:[%s6 + $0xc] sm:$0xf]
  %v5923 = vld [vmem:[%s6 + $0x10] sm:$0xf]
  %v5924 = vld [vmem:[%s6 + $0x14] sm:$0xf]
  %v5925 = vld [vmem:[%s6 + $0x18] sm:$0xf]
  %v5926 = vld [vmem:[%s6 + $0x1c] sm:$0xf]
  %v5927 = vld [vmem:[%s6 + $0x20] sm:$0xf]
  %v5928 = vld [vmem:[%s6 + $0x24] sm:$0xf]
  %v5929 = vld [vmem:[%s6 + $0x28] sm:$0xf]
  %v5930 = vld [vmem:[%s6 + $0x2c] sm:$0xf]
  %v5931 = vld [vmem:[%s6 + $0x30] sm:$0xf]
  %v5932 = vld [vmem:[%s6 + $0x34] sm:$0xf]
  %v5933 = vld [vmem:[%s6 + $0x38] sm:$0xf]
  %v5934 = vld [vmem:[%s6 + $0x3c] sm:$0xf]
  %v5935 = vld [vmem:[%s6 + $0x40] sm:$0xf]
  %v5936 = vld [vmem:[%s6 + $0x44] sm:$0xf]
  %v5955 = vunpack.c.l.b16 %v5919
  %v5956 = vunpack.c.l.b16 %v5920
  %v5957 = vunpack.c.l.b16 %v5921
  %v5958 = vunpack.c.l.b16 %v5922
  %v5959 = vunpack.c.l.b16 %v5923
  %v5960 = vunpack.c.l.b16 %v5924
  %v5961 = vunpack.c.l.b16 %v5925
  %v5962 = vunpack.c.l.b16 %v5926
  %v5963 = vunpack.c.l.b16 %v5927
  %v5964 = vunpack.c.l.b16 %v5928
  %v5965 = vunpack.c.l.b16 %v5929
  %v5966 = vunpack.c.l.b16 %v5930
  %v5967 = vunpack.c.l.b16 %v5931
  %v5968 = vunpack.c.l.b16 %v5932
  %v5969 = vunpack.c.l.b16 %v5933
  %v5970 = vunpack.c.l.b16 %v5934
  %v5971 = vunpack.c.l.b16 %v5935
  %v5972 = vunpack.c.l.b16 %v5936
  %v5973 = vpack.c.b16 %v5956, %v5955
  %v5974 = vpack.c.b16 %v5958, %v5957
  %v5975 = vpack.c.b16 %v5960, %v5959
  %v5976 = vpack.c.b16 %v5962, %v5961
  %v5977 = vpack.c.b16 %v5964, %v5963
  %v5978 = vpack.c.b16 %v5966, %v5965
  %v5979 = vpack.c.b16 %v5968, %v5967
  %v5980 = vpack.c.b16 %v5970, %v5969
  %v5981 = vpack.c.b16 %v5972, %v5971
  %v5992 = vsel %vm5432, %v5338, 0
  %v5995 = vsel %vm5432, %v5341, 0
  %v5998 = vsel %vm5432, %v5344, 0
  %v6001 = vsel %vm5432, %v5347, 0
  %v6004 = vsel %vm5432, %v5350, 0
  %v6007 = vsel %vm5432, %v5353, 0
  %v6010 = vsel %vm5432, %v5356, 0
  %v6013 = vsel %vm5432, %v5359, 0
  %v6016 = vsel %vm5432, %v5362, 0
  %v6019 = vsel %vm5432, %v5365, 0
  %v6022 = vsel %vm5432, %v5368, 0
  %v6025 = vsel %vm5432, %v5371, 0
  %v6028 = vsel %vm5432, %v5374, 0
  %v6031 = vsel %vm5432, %v5377, 0
  %v6034 = vsel %vm5432, %v5380, 0
  %v6037 = vsel %vm5432, %v5383, 0
  %v6040 = vsel %vm5432, %v5386, 0
  %v6043 = vsel %vm5432, %v5389, 0
  %v6046 = vsel %vm5432, %v5392, 0
  %v6049 = vsel %vm5432, %v5395, 0
  %v6052 = vsel %vm5432, %v5398, 0
  %v6055 = vsel %vm5432, %v5401, 0
  %v6058 = vsel %vm5432, %v5404, 0
  %v6061 = vsel %vm5432, %v5407, 0
  %v6064 = vsel %vm5432, %v5410, 0
  %v6067 = vsel %vm5432, %v5413, 0
  %v6070 = vsel %vm5432, %v5416, 0
  %v6073 = vsel %vm5432, %v5419, 0
  %v6076 = vsel %vm5432, %v5422, 0
  %v6079 = vsel %vm5432, %v5425, 0
  %v6082 = vsel %vm5432, %v5428, 0
  %v6085 = vsel %vm5432, %v5431, 0
  %6087 = vmatprep.subr.bf16.mxu0 0
  %6088 = vmatpush1.bf16.msra.mxu0 %v5973
  %6089 = vmatprep.subr.bf16.mxu0 0
  %6090 = vmatpush1.bf16.msra.mxu0 %v5974
  %6091 = vmatprep.subr.bf16.mxu0 0
  %6092 = vmatpush1.bf16.msra.mxu0 %v5975
  %6093 = vmatprep.subr.bf16.mxu0 0
  %6094 = vmatpush1.bf16.msra.mxu0 %v5976
  %6095 = vmatprep.subr.bf16.mxu0 0
  %6096 = vmatpush1.bf16.msra.mxu0 %v5977
  %6097 = vmatprep.subr.bf16.mxu0 0
  %6098 = vmatpush1.bf16.msra.mxu0 %v5978
  %6099 = vmatprep.subr.bf16.mxu0 0
  %6100 = vmatpush1.bf16.msra.mxu0 %v5979
  %6101 = vmatprep.subr.bf16.mxu0 0
  %6102 = vmatpush1.bf16.msra.mxu0 %v5980
  %6103 = vmatprep.subr.bf16.mxu0 0
  %6104 = vmatpush1.bf16.msra.mxu0 %v5981
  %6105 = vmatprep.subr.bf16.mxu0 0
  %6106 = vmatpush1.bf16.msra.mxu0 0
  %6107 = vmatprep.subr.bf16.mxu0 0
  %6108 = vmatpush1.bf16.msra.mxu0 0
  %6109 = vmatprep.subr.bf16.mxu0 0
  %6110 = vmatpush1.bf16.msra.mxu0 0
  %6111 = vmatprep.subr.bf16.mxu0 0
  %6112 = vmatpush1.bf16.msra.mxu0 0
  %6113 = vmatprep.subr.bf16.mxu0 0
  %6114 = vmatpush1.bf16.msra.mxu0 0
  %6115 = vmatprep.subr.bf16.mxu0 0
  %6116 = vmatpush1.bf16.msra.mxu0 0
  %6117 = vmatprep.subr.bf16.mxu0 0
  %6118 = vmatpush1.bf16.msra.mxu0 0
  %6119 = vmatprep.mubr.bf16.mxu0 %v5992
  %6120 = vmatmul.mubr.bf16.gmra.mrb[0].mxu0 %v5824
  %v6121 = vpop.f32.mrb[0].mxu0
  %v6122 = vadd.f32 0.0, %v6121
  %v6123 = vpop.f32.mrb[0].mxu0
  %v6124 = vpop.f32.mrb[0].mxu0
  %v6125 = vadd.f32 0.0, %v6124
  %v6126 = vpop.f32.mrb[0].mxu0
  %6127 = vmatprep.mubr.bf16.mxu0 %v5995
  %6128 = vmatmul.mubr.bf16.gmra.mrb[0].mxu0 %v5827
  %v6129 = vpop.f32.mrb[0].mxu0
  %v6130 = vadd.f32 0.0, %v6129
  %v6131 = vpop.f32.mrb[0].mxu0
  %v6132 = vpop.f32.mrb[0].mxu0
  %v6133 = vadd.f32 0.0, %v6132
  %v6134 = vpop.f32.mrb[0].mxu0
  %6135 = vmatprep.mubr.bf16.mxu0 %v5998
  %6136 = vmatmul.mubr.bf16.gmra.mrb[0].mxu0 %v5830
  %v6137 = vpop.f32.mrb[0].mxu0
  %v6138 = vadd.f32 0.0, %v6137
  %v6139 = vpop.f32.mrb[0].mxu0
  %v6140 = vpop.f32.mrb[0].mxu0
  %v6141 = vadd.f32 0.0, %v6140
  %v6142 = vpop.f32.mrb[0].mxu0
  %6143 = vmatprep.mubr.bf16.mxu0 %v6001
  %6144 = vmatmul.mubr.bf16.gmra.mrb[0].mxu0 %v5833
  %v6145 = vpop.f32.mrb[0].mxu0
  %v6146 = vadd.f32 0.0, %v6145
  %v6147 = vpop.f32.mrb[0].mxu0
  %v6148 = vpop.f32.mrb[0].mxu0
  %v6149 = vadd.f32 0.0, %v6148
  %v6150 = vpop.f32.mrb[0].mxu0
  %6151 = vmatprep.mubr.bf16.mxu0 %v6004
  %6152 = vmatmul.mubr.bf16.gmra.mrb[0].mxu0 %v5836
  %v6153 = vpop.f32.mrb[0].mxu0
  %v6154 = vadd.f32 0.0, %v6153
  %v6155 = vpop.f32.mrb[0].mxu0
  %v6156 = vpop.f32.mrb[0].mxu0
  %v6157 = vadd.f32 0.0, %v6156
  %v6158 = vpop.f32.mrb[0].mxu0
  %6159 = vmatprep.mubr.bf16.mxu0 %v6007
  %6160 = vmatmul.mubr.bf16.gmra.mrb[0].mxu0 %v5839
  %v6161 = vpop.f32.mrb[0].mxu0
  %v6162 = vadd.f32 0.0, %v6161
  %v6163 = vpop.f32.mrb[0].mxu0
  %v6164 = vpop.f32.mrb[0].mxu0
  %v6165 = vadd.f32 0.0, %v6164
  %v6166 = vpop.f32.mrb[0].mxu0
  %6167 = vmatprep.mubr.bf16.mxu0 %v6010
  %6168 = vmatmul.mubr.bf16.gmra.mrb[0].mxu0 %v5842
  %v6169 = vpop.f32.mrb[0].mxu0
  %v6170 = vadd.f32 0.0, %v6169
  %v6171 = vpop.f32.mrb[0].mxu0
  %v6172 = vpop.f32.mrb[0].mxu0
  %v6173 = vadd.f32 0.0, %v6172
  %v6174 = vpop.f32.mrb[0].mxu0
  %6175 = vmatprep.mubr.bf16.mxu0 %v6013
  %6176 = vmatmul.mubr.bf16.gmra.mrb[0].mxu0 %v5845
  %v6177 = vpop.f32.mrb[0].mxu0
  %v6178 = vadd.f32 0.0, %v6177
  %v6179 = vpop.f32.mrb[0].mxu0
  %v6180 = vpop.f32.mrb[0].mxu0
  %v6181 = vadd.f32 0.0, %v6180
  %v6182 = vpop.f32.mrb[0].mxu0
  %6183 = vmatprep.mubr.bf16.mxu0 %v6016
  %6184 = vmatmul.mubr.bf16.gmra.mrb[0].mxu0 %v5848
  %v6185 = vpop.f32.mrb[0].mxu0
  %v6186 = vadd.f32 0.0, %v6185
  %v6187 = vpop.f32.mrb[0].mxu0
  %v6188 = vpop.f32.mrb[0].mxu0
  %v6189 = vadd.f32 0.0, %v6188
  %v6190 = vpop.f32.mrb[0].mxu0
  %6191 = vmatprep.mubr.bf16.mxu0 %v6019
  %6192 = vmatmul.mubr.bf16.gmra.mrb[0].mxu0 %v5851
  %v6193 = vpop.f32.mrb[0].mxu0
  %v6194 = vadd.f32 0.0, %v6193
  %v6195 = vpop.f32.mrb[0].mxu0
  %v6196 = vpop.f32.mrb[0].mxu0
  %v6197 = vadd.f32 0.0, %v6196
  %v6198 = vpop.f32.mrb[0].mxu0
  %6199 = vmatprep.mubr.bf16.mxu0 %v6022
  %6200 = vmatmul.mubr.bf16.gmra.mrb[0].mxu0 %v5854
  %v6201 = vpop.f32.mrb[0].mxu0
  %v6202 = vadd.f32 0.0, %v6201
  %v6203 = vpop.f32.mrb[0].mxu0
  %v6204 = vpop.f32.mrb[0].mxu0
  %v6205 = vadd.f32 0.0, %v6204
  %v6206 = vpop.f32.mrb[0].mxu0
  %6207 = vmatprep.mubr.bf16.mxu0 %v6025
  %6208 = vmatmul.mubr.bf16.gmra.mrb[0].mxu0 %v5857
  %v6209 = vpop.f32.mrb[0].mxu0
  %v6210 = vadd.f32 0.0, %v6209
  %v6211 = vpop.f32.mrb[0].mxu0
  %v6212 = vpop.f32.mrb[0].mxu0
  %v6213 = vadd.f32 0.0, %v6212
  %v6214 = vpop.f32.mrb[0].mxu0
  %6215 = vmatprep.mubr.bf16.mxu0 %v6028
  %6216 = vmatmul.mubr.bf16.gmra.mrb[0].mxu0 %v5860
  %v6217 = vpop.f32.mrb[0].mxu0
  %v6218 = vadd.f32 0.0, %v6217
  %v6219 = vpop.f32.mrb[0].mxu0
  %v6220 = vpop.f32.mrb[0].mxu0
  %v6221 = vadd.f32 0.0, %v6220
  %v6222 = vpop.f32.mrb[0].mxu0
  %6223 = vmatprep.mubr.bf16.mxu0 %v6031
  %6224 = vmatmul.mubr.bf16.gmra.mrb[0].mxu0 %v5863
  %v6225 = vpop.f32.mrb[0].mxu0
  %v6226 = vadd.f32 0.0, %v6225
  %v6227 = vpop.f32.mrb[0].mxu0
  %v6228 = vpop.f32.mrb[0].mxu0
  %v6229 = vadd.f32 0.0, %v6228
  %v6230 = vpop.f32.mrb[0].mxu0
  %6231 = vmatprep.mubr.bf16.mxu0 %v6034
  %6232 = vmatmul.mubr.bf16.gmra.mrb[0].mxu0 %v5866
  %v6233 = vpop.f32.mrb[0].mxu0
  %v6234 = vadd.f32 0.0, %v6233
  %v6235 = vpop.f32.mrb[0].mxu0
  %v6236 = vpop.f32.mrb[0].mxu0
  %v6237 = vadd.f32 0.0, %v6236
  %v6238 = vpop.f32.mrb[0].mxu0
  %6239 = vmatprep.mubr.bf16.mxu0 %v6037
  %6240 = vmatmul.mubr.bf16.gmra.mrb[0].mxu0 %v5869
  %v6241 = vpop.f32.mrb[0].mxu0
  %v6242 = vadd.f32 0.0, %v6241
  %v6243 = vpop.f32.mrb[0].mxu0
  %v6244 = vpop.f32.mrb[0].mxu0
  %v6245 = vadd.f32 0.0, %v6244
  %v6246 = vpop.f32.mrb[0].mxu0
  %6247 = vmatprep.mubr.bf16.mxu0 %v6040
  %6248 = vmatmul.mubr.bf16.gmra.mrb[0].mxu0 %v5872
  %v6249 = vpop.f32.mrb[0].mxu0
  %v6250 = vadd.f32 0.0, %v6249
  %v6251 = vpop.f32.mrb[0].mxu0
  %v6252 = vpop.f32.mrb[0].mxu0
  %v6253 = vadd.f32 0.0, %v6252
  %v6254 = vpop.f32.mrb[0].mxu0
  %6255 = vmatprep.mubr.bf16.mxu0 %v6043
  %6256 = vmatmul.mubr.bf16.gmra.mrb[0].mxu0 %v5875
  %v6257 = vpop.f32.mrb[0].mxu0
  %v6258 = vadd.f32 0.0, %v6257
  %v6259 = vpop.f32.mrb[0].mxu0
  %v6260 = vpop.f32.mrb[0].mxu0
  %v6261 = vadd.f32 0.0, %v6260
  %v6262 = vpop.f32.mrb[0].mxu0
  %6263 = vmatprep.mubr.bf16.mxu0 %v6046
  %6264 = vmatmul.mubr.bf16.gmra.mrb[0].mxu0 %v5878
  %v6265 = vpop.f32.mrb[0].mxu0
  %v6266 = vadd.f32 0.0, %v6265
  %v6267 = vpop.f32.mrb[0].mxu0
  %v6268 = vpop.f32.mrb[0].mxu0
  %v6269 = vadd.f32 0.0, %v6268
  %v6270 = vpop.f32.mrb[0].mxu0
  %6271 = vmatprep.mubr.bf16.mxu0 %v6049
  %6272 = vmatmul.mubr.bf16.gmra.mrb[0].mxu0 %v5881
  %v6273 = vpop.f32.mrb[0].mxu0
  %v6274 = vadd.f32 0.0, %v6273
  %v6275 = vpop.f32.mrb[0].mxu0
  %v6276 = vpop.f32.mrb[0].mxu0
  %v6277 = vadd.f32 0.0, %v6276
  %v6278 = vpop.f32.mrb[0].mxu0
  %6279 = vmatprep.mubr.bf16.mxu0 %v6052
  %6280 = vmatmul.mubr.bf16.gmra.mrb[0].mxu0 %v5884
  %v6281 = vpop.f32.mrb[0].mxu0
  %v6282 = vadd.f32 0.0, %v6281
  %v6283 = vpop.f32.mrb[0].mxu0
  %v6284 = vpop.f32.mrb[0].mxu0
  %v6285 = vadd.f32 0.0, %v6284
  %v6286 = vpop.f32.mrb[0].mxu0
  %6287 = vmatprep.mubr.bf16.mxu0 %v6055
  %6288 = vmatmul.mubr.bf16.gmra.mrb[0].mxu0 %v5887
  %v6289 = vpop.f32.mrb[0].mxu0
  %v6290 = vadd.f32 0.0, %v6289
  %v6291 = vpop.f32.mrb[0].mxu0
  %v6292 = vpop.f32.mrb[0].mxu0
  %v6293 = vadd.f32 0.0, %v6292
  %v6294 = vpop.f32.mrb[0].mxu0
  %6295 = vmatprep.mubr.bf16.mxu0 %v6058
  %6296 = vmatmul.mubr.bf16.gmra.mrb[0].mxu0 %v5890
  %v6297 = vpop.f32.mrb[0].mxu0
  %v6298 = vadd.f32 0.0, %v6297
  %v6299 = vpop.f32.mrb[0].mxu0
  %v6300 = vpop.f32.mrb[0].mxu0
  %v6301 = vadd.f32 0.0, %v6300
  %v6302 = vpop.f32.mrb[0].mxu0
  %6303 = vmatprep.mubr.bf16.mxu0 %v6061
  %6304 = vmatmul.mubr.bf16.gmra.mrb[0].mxu0 %v5893
  %v6305 = vpop.f32.mrb[0].mxu0
  %v6306 = vadd.f32 0.0, %v6305
  %v6307 = vpop.f32.mrb[0].mxu0
  %v6308 = vpop.f32.mrb[0].mxu0
  %v6309 = vadd.f32 0.0, %v6308
  %v6310 = vpop.f32.mrb[0].mxu0
  %6311 = vmatprep.mubr.bf16.mxu0 %v6064
  %6312 = vmatmul.mubr.bf16.gmra.mrb[0].mxu0 %v5896
  %v6313 = vpop.f32.mrb[0].mxu0
  %v6314 = vadd.f32 0.0, %v6313
  %v6315 = vpop.f32.mrb[0].mxu0
  %v6316 = vpop.f32.mrb[0].mxu0
  %v6317 = vadd.f32 0.0, %v6316
  %v6318 = vpop.f32.mrb[0].mxu0
  %6319 = vmatprep.mubr.bf16.mxu0 %v6067
  %6320 = vmatmul.mubr.bf16.gmra.mrb[0].mxu0 %v5899
  %v6321 = vpop.f32.mrb[0].mxu0
  %v6322 = vadd.f32 0.0, %v6321
  %v6323 = vpop.f32.mrb[0].mxu0
  %v6324 = vpop.f32.mrb[0].mxu0
  %v6325 = vadd.f32 0.0, %v6324
  %v6326 = vpop.f32.mrb[0].mxu0
  %6327 = vmatprep.mubr.bf16.mxu0 %v6070
  %6328 = vmatmul.mubr.bf16.gmra.mrb[0].mxu0 %v5902
  %v6329 = vpop.f32.mrb[0].mxu0
  %v6330 = vadd.f32 0.0, %v6329
  %v6331 = vpop.f32.mrb[0].mxu0
  %v6332 = vpop.f32.mrb[0].mxu0
  %v6333 = vadd.f32 0.0, %v6332
  %v6334 = vpop.f32.mrb[0].mxu0
  %6335 = vmatprep.mubr.bf16.mxu0 %v6073
  %6336 = vmatmul.mubr.bf16.gmra.mrb[0].mxu0 %v5905
  %v6337 = vpop.f32.mrb[0].mxu0
  %v6338 = vadd.f32 0.0, %v6337
  %v6339 = vpop.f32.mrb[0].mxu0
  %v6340 = vpop.f32.mrb[0].mxu0
  %v6341 = vadd.f32 0.0, %v6340
  %v6342 = vpop.f32.mrb[0].mxu0
  %6343 = vmatprep.mubr.bf16.mxu0 %v6076
  %6344 = vmatmul.mubr.bf16.gmra.mrb[0].mxu0 %v5908
  %v6345 = vpop.f32.mrb[0].mxu0
  %v6346 = vadd.f32 0.0, %v6345
  %v6347 = vpop.f32.mrb[0].mxu0
  %v6348 = vpop.f32.mrb[0].mxu0
  %v6349 = vadd.f32 0.0, %v6348
  %v6350 = vpop.f32.mrb[0].mxu0
  %6351 = vmatprep.mubr.bf16.mxu0 %v6079
  %6352 = vmatmul.mubr.bf16.gmra.mrb[0].mxu0 %v5911
  %v6353 = vpop.f32.mrb[0].mxu0
  %v6354 = vadd.f32 0.0, %v6353
  %v6355 = vpop.f32.mrb[0].mxu0
  %v6356 = vpop.f32.mrb[0].mxu0
  %v6357 = vadd.f32 0.0, %v6356
  %v6358 = vpop.f32.mrb[0].mxu0
  %6359 = vmatprep.mubr.bf16.mxu0 %v6082
  %6360 = vmatmul.mubr.bf16.gmra.mrb[0].mxu0 %v5914
  %v6361 = vpop.f32.mrb[0].mxu0
  %v6362 = vadd.f32 0.0, %v6361
  %v6363 = vpop.f32.mrb[0].mxu0
  %v6364 = vpop.f32.mrb[0].mxu0
  %v6365 = vadd.f32 0.0, %v6364
  %v6366 = vpop.f32.mrb[0].mxu0
  %6367 = vmatprep.mubr.bf16.mxu0 %v6085
  %6368 = vmatmul.mubr.bf16.gmra.mrb[0].mxu0 %v5917
  %v6369 = vpop.f32.mrb[0].mxu0
  %v6370 = vadd.f32 0.0, %v6369
  %v6371 = vpop.f32.mrb[0].mxu0
  %v6372 = vpop.f32.mrb[0].mxu0
  %v6373 = vadd.f32 0.0, %v6372
  %v6374 = vpop.f32.mrb[0].mxu0
  %6375 = vdwg.mxu0
  %6376 = vst.msk [vmem:[%s7] sm:$0xff] %vm330, %v27
  %6377 = vst.msk [vmem:[%s7 + $0x8] sm:$0xff] %vm330, %v28
  %6378 = vst.msk [vmem:[%s7 + $0x10] sm:$0xff] %vm330, %v29
  %6379 = vst.msk [vmem:[%s7 + $0x18] sm:$0xff] %vm330, %v30
  %6380 = vst.msk [vmem:[%s7 + $0x20] sm:$0xff] %vm330, %v31
  %6381 = vst.msk [vmem:[%s7 + $0x28] sm:$0xff] %vm330, %v32
  %6382 = vst.msk [vmem:[%s7 + $0x30] sm:$0xff] %vm330, %v33
  %6383 = vst.msk [vmem:[%s7 + $0x38] sm:$0xff] %vm330, %v34
  %6384 = vst.msk [vmem:[%s7 + $0x40] sm:$0xff] %vm330, %v35
  %6385 = vst.msk [vmem:[%s7 + $0x48] sm:$0xff] %vm330, %v36
  %6386 = vst.msk [vmem:[%s7 + $0x50] sm:$0xff] %vm330, %v37
  %6387 = vst.msk [vmem:[%s7 + $0x58] sm:$0xff] %vm330, %v38
  %6388 = vst.msk [vmem:[%s7 + $0x60] sm:$0xff] %vm330, %v39
  %6389 = vst.msk [vmem:[%s7 + $0x68] sm:$0xff] %vm330, %v40
  %6390 = vst.msk [vmem:[%s7 + $0x70] sm:$0xff] %vm330, %v41
  %6391 = vst.msk [vmem:[%s7 + $0x78] sm:$0xff] %vm330, %v42
  %6392 = vst.msk [vmem:[%s7 + $0x80] sm:$0xff] %vm330, %v43
  %6393 = vst.msk [vmem:[%s7 + $0x88] sm:$0xff] %vm330, %v44
  %6394 = vst.msk [vmem:[%s7 + $0x90] sm:$0xff] %vm330, %v45
  %6395 = vst.msk [vmem:[%s7 + $0x98] sm:$0xff] %vm330, %v46
  %6396 = vst.msk [vmem:[%s7 + $0xa0] sm:$0xff] %vm330, %v47
  %6397 = vst.msk [vmem:[%s7 + $0xa8] sm:$0xff] %vm330, %v48
  %6398 = vst.msk [vmem:[%s7 + $0xb0] sm:$0xff] %vm330, %v49
  %6399 = vst.msk [vmem:[%s7 + $0xb8] sm:$0xff] %vm330, %v50
  %6400 = vst.msk [vmem:[%s7 + $0xc0] sm:$0xff] %vm330, %v51
  %6401 = vst.msk [vmem:[%s7 + $0xc8] sm:$0xff] %vm330, %v52
  %6402 = vst.msk [vmem:[%s7 + $0xd0] sm:$0xff] %vm330, %v53
  %6403 = vst.msk [vmem:[%s7 + $0xd8] sm:$0xff] %vm330, %v54
  %6404 = vst.msk [vmem:[%s7 + $0xe0] sm:$0xff] %vm330, %v55
  %6405 = vst.msk [vmem:[%s7 + $0xe8] sm:$0xff] %vm330, %v56
  %6406 = vst.msk [vmem:[%s7 + $0xf0] sm:$0xff] %vm330, %v57
  %6407 = vst.msk [vmem:[%s7 + $0xf8] sm:$0xff] %vm330, %v58
  %6408 = vst.msk [vmem:[%s7 + $0x100] sm:$0xff] %vm330, %v59
  %6409 = vst.msk [vmem:[%s7 + $0x108] sm:$0xff] %vm330, %v60
  %6410 = vst.msk [vmem:[%s7 + $0x110] sm:$0xff] %vm330, %v61
  %6411 = vst.msk [vmem:[%s7 + $0x118] sm:$0xff] %vm330, %v62
  %6412 = vst.msk [vmem:[%s7 + $0x120] sm:$0xff] %vm330, %v63
  %6413 = vst.msk [vmem:[%s7 + $0x128] sm:$0xff] %vm330, %v64
  %6414 = vst.msk [vmem:[%s7 + $0x130] sm:$0xff] %vm330, %v65
  %6415 = vst.msk [vmem:[%s7 + $0x138] sm:$0xff] %vm330, %v66
  %6416 = vst.msk [vmem:[%s7 + $0x140] sm:$0xff] %vm330, %v67
  %6417 = vst.msk [vmem:[%s7 + $0x148] sm:$0xff] %vm330, %v68
  %6418 = vst.msk [vmem:[%s7 + $0x150] sm:$0xff] %vm330, %v69
  %6419 = vst.msk [vmem:[%s7 + $0x158] sm:$0xff] %vm330, %v70
  %6420 = vst.msk [vmem:[%s7 + $0x160] sm:$0xff] %vm330, %v71
  %6421 = vst.msk [vmem:[%s7 + $0x168] sm:$0xff] %vm330, %v72
  %6422 = vst.msk [vmem:[%s7 + $0x170] sm:$0xff] %vm330, %v73
  %6423 = vst.msk [vmem:[%s7 + $0x178] sm:$0xff] %vm330, %v74
  %6424 = vst.msk [vmem:[%s7 + $0x180] sm:$0xff] %vm330, %v75
  %6425 = vst.msk [vmem:[%s7 + $0x188] sm:$0xff] %vm330, %v76
  %6426 = vst.msk [vmem:[%s7 + $0x190] sm:$0xff] %vm330, %v77
  %6427 = vst.msk [vmem:[%s7 + $0x198] sm:$0xff] %vm330, %v78
  %6428 = vst.msk [vmem:[%s7 + $0x1a0] sm:$0xff] %vm330, %v79
  %6429 = vst.msk [vmem:[%s7 + $0x1a8] sm:$0xff] %vm330, %v80
  %6430 = vst.msk [vmem:[%s7 + $0x1b0] sm:$0xff] %vm330, %v81
  %6431 = vst.msk [vmem:[%s7 + $0x1b8] sm:$0xff] %vm330, %v82
  %6432 = vst.msk [vmem:[%s7 + $0x1c0] sm:$0xff] %vm330, %v83
  %6433 = vst.msk [vmem:[%s7 + $0x1c8] sm:$0xff] %vm330, %v84
  %6434 = vst.msk [vmem:[%s7 + $0x1d0] sm:$0xff] %vm330, %v85
  %6435 = vst.msk [vmem:[%s7 + $0x1d8] sm:$0xff] %vm330, %v86
  %6436 = vst.msk [vmem:[%s7 + $0x1e0] sm:$0xff] %vm330, %v87
  %6437 = vst.msk [vmem:[%s7 + $0x1e8] sm:$0xff] %vm330, %v88
  %6438 = vst.msk [vmem:[%s7 + $0x1f0] sm:$0xff] %vm330, %v89
  %6439 = vst.msk [vmem:[%s7 + $0x1f8] sm:$0xff] %vm330, %v90
  %6504 = vrot.lane.b32.xlu0 %v6122, 4
  %v6505 = vpop.permute.xlu0 %6504
  %6506 = vrot.lane.b32.xlu0 %v6125, 4
  %v6507 = vpop.permute.xlu0 %6506
  %6508 = vrot.lane.b32.xlu0 %v6130, 4
  %v6509 = vpop.permute.xlu0 %6508
  %6510 = vrot.lane.b32.xlu0 %v6133, 4
  %v6511 = vpop.permute.xlu0 %6510
  %6512 = vrot.lane.b32.xlu0 %v6138, 4
  %v6513 = vpop.permute.xlu0 %6512
  %6514 = vrot.lane.b32.xlu0 %v6141, 4
  %v6515 = vpop.permute.xlu0 %6514
  %6516 = vrot.lane.b32.xlu0 %v6146, 4
  %v6517 = vpop.permute.xlu0 %6516
  %6518 = vrot.lane.b32.xlu0 %v6149, 4
  %v6519 = vpop.permute.xlu0 %6518
  %6520 = vrot.lane.b32.xlu0 %v6154, 4
  %v6521 = vpop.permute.xlu0 %6520
  %6522 = vrot.lane.b32.xlu0 %v6157, 4
  %v6523 = vpop.permute.xlu0 %6522
  %6524 = vrot.lane.b32.xlu0 %v6162, 4
  %v6525 = vpop.permute.xlu0 %6524
  %6526 = vrot.lane.b32.xlu0 %v6165, 4
  %v6527 = vpop.permute.xlu0 %6526
  %6528 = vrot.lane.b32.xlu0 %v6170, 4
  %v6529 = vpop.permute.xlu0 %6528
  %6530 = vrot.lane.b32.xlu0 %v6173, 4
  %v6531 = vpop.permute.xlu0 %6530
  %6532 = vrot.lane.b32.xlu0 %v6178, 4
  %v6533 = vpop.permute.xlu0 %6532
  %6534 = vrot.lane.b32.xlu0 %v6181, 4
  %v6535 = vpop.permute.xlu0 %6534
  %6536 = vrot.lane.b32.xlu0 %v6186, 4
  %v6537 = vpop.permute.xlu0 %6536
  %6538 = vrot.lane.b32.xlu0 %v6189, 4
  %v6539 = vpop.permute.xlu0 %6538
  %6540 = vrot.lane.b32.xlu0 %v6194, 4
  %v6541 = vpop.permute.xlu0 %6540
  %6542 = vrot.lane.b32.xlu0 %v6197, 4
  %v6543 = vpop.permute.xlu0 %6542
  %6544 = vrot.lane.b32.xlu0 %v6202, 4
  %v6545 = vpop.permute.xlu0 %6544
  %6546 = vrot.lane.b32.xlu0 %v6205, 4
  %v6547 = vpop.permute.xlu0 %6546
  %6548 = vrot.lane.b32.xlu0 %v6210, 4
  %v6549 = vpop.permute.xlu0 %6548
  %6550 = vrot.lane.b32.xlu0 %v6213, 4
  %v6551 = vpop.permute.xlu0 %6550
  %6552 = vrot.lane.b32.xlu0 %v6218, 4
  %v6553 = vpop.permute.xlu0 %6552
  %6554 = vrot.lane.b32.xlu0 %v6221, 4
  %v6555 = vpop.permute.xlu0 %6554
  %6556 = vrot.lane.b32.xlu0 %v6226, 4
  %v6557 = vpop.permute.xlu0 %6556
  %6558 = vrot.lane.b32.xlu0 %v6229, 4
  %v6559 = vpop.permute.xlu0 %6558
  %6560 = vrot.lane.b32.xlu0 %v6234, 4
  %v6561 = vpop.permute.xlu0 %6560
  %6562 = vrot.lane.b32.xlu0 %v6237, 4
  %v6563 = vpop.permute.xlu0 %6562
  %6564 = vrot.lane.b32.xlu0 %v6242, 4
  %v6565 = vpop.permute.xlu0 %6564
  %6566 = vrot.lane.b32.xlu0 %v6245, 4
  %v6567 = vpop.permute.xlu0 %6566
  %6568 = vrot.lane.b32.xlu0 %v6250, 4
  %v6569 = vpop.permute.xlu0 %6568
  %6570 = vrot.lane.b32.xlu0 %v6253, 4
  %v6571 = vpop.permute.xlu0 %6570
  %6572 = vrot.lane.b32.xlu0 %v6258, 4
  %v6573 = vpop.permute.xlu0 %6572
  %6574 = vrot.lane.b32.xlu0 %v6261, 4
  %v6575 = vpop.permute.xlu0 %6574
  %6576 = vrot.lane.b32.xlu0 %v6266, 4
  %v6577 = vpop.permute.xlu0 %6576
  %6578 = vrot.lane.b32.xlu0 %v6269, 4
  %v6579 = vpop.permute.xlu0 %6578
  %6580 = vrot.lane.b32.xlu0 %v6274, 4
  %v6581 = vpop.permute.xlu0 %6580
  %6582 = vrot.lane.b32.xlu0 %v6277, 4
  %v6583 = vpop.permute.xlu0 %6582
  %6584 = vrot.lane.b32.xlu0 %v6282, 4
  %v6585 = vpop.permute.xlu0 %6584
  %6586 = vrot.lane.b32.xlu0 %v6285, 4
  %v6587 = vpop.permute.xlu0 %6586
  %6588 = vrot.lane.b32.xlu0 %v6290, 4
  %v6589 = vpop.permute.xlu0 %6588
  %6590 = vrot.lane.b32.xlu0 %v6293, 4
  %v6591 = vpop.permute.xlu0 %6590
  %6592 = vrot.lane.b32.xlu0 %v6298, 4
  %v6593 = vpop.permute.xlu0 %6592
  %6594 = vrot.lane.b32.xlu0 %v6301, 4
  %v6595 = vpop.permute.xlu0 %6594
  %6596 = vrot.lane.b32.xlu0 %v6306, 4
  %v6597 = vpop.permute.xlu0 %6596
  %6598 = vrot.lane.b32.xlu0 %v6309, 4
  %v6599 = vpop.permute.xlu0 %6598
  %6600 = vrot.lane.b32.xlu0 %v6314, 4
  %v6601 = vpop.permute.xlu0 %6600
  %6602 = vrot.lane.b32.xlu0 %v6317, 4
  %v6603 = vpop.permute.xlu0 %6602
  %6604 = vrot.lane.b32.xlu0 %v6322, 4
  %v6605 = vpop.permute.xlu0 %6604
  %6606 = vrot.lane.b32.xlu0 %v6325, 4
  %v6607 = vpop.permute.xlu0 %6606
  %6608 = vrot.lane.b32.xlu0 %v6330, 4
  %v6609 = vpop.permute.xlu0 %6608
  %6610 = vrot.lane.b32.xlu0 %v6333, 4
  %v6611 = vpop.permute.xlu0 %6610
  %6612 = vrot.lane.b32.xlu0 %v6338, 4
  %v6613 = vpop.permute.xlu0 %6612
  %6614 = vrot.lane.b32.xlu0 %v6341, 4
  %v6615 = vpop.permute.xlu0 %6614
  %6616 = vrot.lane.b32.xlu0 %v6346, 4
  %v6617 = vpop.permute.xlu0 %6616
  %6618 = vrot.lane.b32.xlu0 %v6349, 4
  %v6619 = vpop.permute.xlu0 %6618
  %6620 = vrot.lane.b32.xlu0 %v6354, 4
  %v6621 = vpop.permute.xlu0 %6620
  %6622 = vrot.lane.b32.xlu0 %v6357, 4
  %v6623 = vpop.permute.xlu0 %6622
  %6624 = vrot.lane.b32.xlu0 %v6362, 4
  %v6625 = vpop.permute.xlu0 %6624
  %6626 = vrot.lane.b32.xlu0 %v6365, 4
  %v6627 = vpop.permute.xlu0 %6626
  %6628 = vrot.lane.b32.xlu0 %v6370, 4
  %v6629 = vpop.permute.xlu0 %6628
  %6630 = vrot.lane.b32.xlu0 %v6373, 4
  %v6631 = vpop.permute.xlu0 %6630
  %vm6696 = vcmask 64544
  %6697 = vst.msk [vmem:[%s7] sm:$0xff] %vm6696, %v6505
  %6698 = vst.msk [vmem:[%s7 + $0x8] sm:$0xff] %vm6696, %v6507
  %6699 = vst.msk [vmem:[%s7 + $0x10] sm:$0xff] %vm6696, %v6509
  %6700 = vst.msk [vmem:[%s7 + $0x18] sm:$0xff] %vm6696, %v6511
  %6701 = vst.msk [vmem:[%s7 + $0x20] sm:$0xff] %vm6696, %v6513
  %6702 = vst.msk [vmem:[%s7 + $0x28] sm:$0xff] %vm6696, %v6515
  %6703 = vst.msk [vmem:[%s7 + $0x30] sm:$0xff] %vm6696, %v6517
  %6704 = vst.msk [vmem:[%s7 + $0x38] sm:$0xff] %vm6696, %v6519
  %6705 = vst.msk [vmem:[%s7 + $0x40] sm:$0xff] %vm6696, %v6521
  %6706 = vst.msk [vmem:[%s7 + $0x48] sm:$0xff] %vm6696, %v6523
  %6707 = vst.msk [vmem:[%s7 + $0x50] sm:$0xff] %vm6696, %v6525
  %6708 = vst.msk [vmem:[%s7 + $0x58] sm:$0xff] %vm6696, %v6527
  %6709 = vst.msk [vmem:[%s7 + $0x60] sm:$0xff] %vm6696, %v6529
  %6710 = vst.msk [vmem:[%s7 + $0x68] sm:$0xff] %vm6696, %v6531
  %6711 = vst.msk [vmem:[%s7 + $0x70] sm:$0xff] %vm6696, %v6533
  %6712 = vst.msk [vmem:[%s7 + $0x78] sm:$0xff] %vm6696, %v6535
  %6713 = vst.msk [vmem:[%s7 + $0x80] sm:$0xff] %vm6696, %v6537
  %6714 = vst.msk [vmem:[%s7 + $0x88] sm:$0xff] %vm6696, %v6539
  %6715 = vst.msk [vmem:[%s7 + $0x90] sm:$0xff] %vm6696, %v6541
  %6716 = vst.msk [vmem:[%s7 + $0x98] sm:$0xff] %vm6696, %v6543
  %6717 = vst.msk [vmem:[%s7 + $0xa0] sm:$0xff] %vm6696, %v6545
  %6718 = vst.msk [vmem:[%s7 + $0xa8] sm:$0xff] %vm6696, %v6547
  %6719 = vst.msk [vmem:[%s7 + $0xb0] sm:$0xff] %vm6696, %v6549
  %6720 = vst.msk [vmem:[%s7 + $0xb8] sm:$0xff] %vm6696, %v6551
  %6721 = vst.msk [vmem:[%s7 + $0xc0] sm:$0xff] %vm6696, %v6553
  %6722 = vst.msk [vmem:[%s7 + $0xc8] sm:$0xff] %vm6696, %v6555
  %6723 = vst.msk [vmem:[%s7 + $0xd0] sm:$0xff] %vm6696, %v6557
  %6724 = vst.msk [vmem:[%s7 + $0xd8] sm:$0xff] %vm6696, %v6559
  %6725 = vst.msk [vmem:[%s7 + $0xe0] sm:$0xff] %vm6696, %v6561
  %6726 = vst.msk [vmem:[%s7 + $0xe8] sm:$0xff] %vm6696, %v6563
  %6727 = vst.msk [vmem:[%s7 + $0xf0] sm:$0xff] %vm6696, %v6565
  %6728 = vst.msk [vmem:[%s7 + $0xf8] sm:$0xff] %vm6696, %v6567
  %6729 = vst.msk [vmem:[%s7 + $0x100] sm:$0xff] %vm6696, %v6569
  %6730 = vst.msk [vmem:[%s7 + $0x108] sm:$0xff] %vm6696, %v6571
  %6731 = vst.msk [vmem:[%s7 + $0x110] sm:$0xff] %vm6696, %v6573
  %6732 = vst.msk [vmem:[%s7 + $0x118] sm:$0xff] %vm6696, %v6575
  %6733 = vst.msk [vmem:[%s7 + $0x120] sm:$0xff] %vm6696, %v6577
  %6734 = vst.msk [vmem:[%s7 + $0x128] sm:$0xff] %vm6696, %v6579
  %6735 = vst.msk [vmem:[%s7 + $0x130] sm:$0xff] %vm6696, %v6581
  %6736 = vst.msk [vmem:[%s7 + $0x138] sm:$0xff] %vm6696, %v6583
  %6737 = vst.msk [vmem:[%s7 + $0x140] sm:$0xff] %vm6696, %v6585
  %6738 = vst.msk [vmem:[%s7 + $0x148] sm:$0xff] %vm6696, %v6587
  %6739 = vst.msk [vmem:[%s7 + $0x150] sm:$0xff] %vm6696, %v6589
  %6740 = vst.msk [vmem:[%s7 + $0x158] sm:$0xff] %vm6696, %v6591
  %6741 = vst.msk [vmem:[%s7 + $0x160] sm:$0xff] %vm6696, %v6593
  %6742 = vst.msk [vmem:[%s7 + $0x168] sm:$0xff] %vm6696, %v6595
  %6743 = vst.msk [vmem:[%s7 + $0x170] sm:$0xff] %vm6696, %v6597
  %6744 = vst.msk [vmem:[%s7 + $0x178] sm:$0xff] %vm6696, %v6599
  %6745 = vst.msk [vmem:[%s7 + $0x180] sm:$0xff] %vm6696, %v6601
  %6746 = vst.msk [vmem:[%s7 + $0x188] sm:$0xff] %vm6696, %v6603
  %6747 = vst.msk [vmem:[%s7 + $0x190] sm:$0xff] %vm6696, %v6605
  %6748 = vst.msk [vmem:[%s7 + $0x198] sm:$0xff] %vm6696, %v6607
  %6749 = vst.msk [vmem:[%s7 + $0x1a0] sm:$0xff] %vm6696, %v6609
  %6750 = vst.msk [vmem:[%s7 + $0x1a8] sm:$0xff] %vm6696, %v6611
  %6751 = vst.msk [vmem:[%s7 + $0x1b0] sm:$0xff] %vm6696, %v6613
  %6752 = vst.msk [vmem:[%s7 + $0x1b8] sm:$0xff] %vm6696, %v6615
  %6753 = vst.msk [vmem:[%s7 + $0x1c0] sm:$0xff] %vm6696, %v6617
  %6754 = vst.msk [vmem:[%s7 + $0x1c8] sm:$0xff] %vm6696, %v6619
  %6755 = vst.msk [vmem:[%s7 + $0x1d0] sm:$0xff] %vm6696, %v6621
  %6756 = vst.msk [vmem:[%s7 + $0x1d8] sm:$0xff] %vm6696, %v6623
  %6757 = vst.msk [vmem:[%s7 + $0x1e0] sm:$0xff] %vm6696, %v6625
  %6758 = vst.msk [vmem:[%s7 + $0x1e8] sm:$0xff] %vm6696, %v6627
  %6759 = vst.msk [vmem:[%s7 + $0x1f0] sm:$0xff] %vm6696, %v6629
  %6760 = vst.msk [vmem:[%s7 + $0x1f8] sm:$0xff] %vm6696, %v6631
  // Predicated region
  $region30: #{bottleneck_block.1} parent=0 // pred_check
    _
  $region31: #{bottleneck_block.1} parent=0 // pred_check_branch
    %6762 = sbr.rel (0) target = $region33
  $region32: #{bottleneck_block.1} parent=0 // pred_region
    _
  $region33: #{bottleneck_block.1} parent=0 // pred_fallthru
    _
  // Predicated region
  $region34: #{bottleneck_block.1} parent=0 // pred_check
    _
  $region35: #{bottleneck_block.1} parent=0 // pred_check_branch
    %6764 = sbr.rel (0) target = $region37
  $region36: #{bottleneck_block.1} parent=0 // pred_region
    _
  $region37: #{bottleneck_block.1} parent=0 // pred_fallthru
    _

</llo_original>
